<compile_context>
chip_gen: v5e
topology: v5e:2x2
jax: 0.10.0
libtpu: 0.0.40
codegen_flags: <defaults>
</compile_context>

<pallas_src>
import functools

import jax
import jax.numpy as jnp
from jax import lax
from jax.experimental import pallas as pl
from jax.experimental.pallas import tpu as pltpu

C = 21  # attention channels (out_channels of q/k/v Conv1d)


def self_atten_kernel(coef_ref, xq_ref, xcol_ref, out_ref, *, tk):
    """Grid: (batch, query-tile).  Keys are reduced by an in-kernel unrolled loop.

    coef_ref : SMEM (6,)         -> [a, b, c, d, s, t]
    xq_ref   : VMEM (1, 1, TQ)   query slice of x (queries along lanes)
    xcol_ref : VMEM (1, L, 1)    full key column of x (keys along sublanes)
    out_ref  : VMEM (1, 1, TQ)   lane-dense output tile
    """
    a = coef_ref[0]
    b = coef_ref[1]
    c = coef_ref[2]
    d = coef_ref[3]

    xq = xq_ref[0]                       # (1, TQ) queries along the lane axis
    tq = xq_ref.shape[-1]
    L = xcol_ref.shape[1]
    n_chunks = L // tk                   # static

    def body(ck, carry):
        m_prev, l_prev, acc_prev = carry
        off = pl.multiple_of(ck * tk, tk)
        xk = xcol_ref[0, pl.ds(off, tk), :]          # (TK, 1) keys along sublanes

        # FMA-form energy (transposed tile): e[j, i] = u_j * x_i + w_j
        u = a * xk + b                               # (TK, 1)
        w = c * xk + d                               # (TK, 1)
        e = u * xq + w                               # (TK, TQ): 1 mul + 1 add / elem

        # Online softmax over keys (sublane axis); accumulators stay lane-dense.
        m_new = jnp.maximum(m_prev, jnp.max(e, axis=0, keepdims=True))
        alpha = jnp.exp(m_prev - m_new)
        p = jnp.exp(e - m_new)                       # (TK, TQ)
        l_new = alpha * l_prev + jnp.sum(p, axis=0, keepdims=True)
        acc_new = alpha * acc_prev + jnp.sum(p * xk, axis=0, keepdims=True)
        return m_new, l_new, acc_new

    m0 = jnp.full((1, tq), -jnp.inf, dtype=jnp.float32)
    l0 = jnp.zeros((1, tq), dtype=jnp.float32)
    acc0 = jnp.zeros((1, tq), dtype=jnp.float32)
    _, l, acc = lax.fori_loop(0, n_chunks, body, (m0, l0, acc0), unroll=True)

    s = coef_ref[4]
    t = coef_ref[5]
    # Exact normalization (one (1, TQ) divide) -> well inside the 1e-3 tolerance.
    out_ref[0] = (s * (acc / l) + t).astype(out_ref.dtype)


def self_atten(x, params, *, tq=512, tk=32):
    B, L = x.shape
    wq, bq, wk, bk, wv, bv, wo, bo = params

    tq = min(tq, L)
    tk = min(tk, L)
    assert L % tq == 0 and L % tk == 0, "L must be divisible by the tile sizes"
    assert tq == L or tq % 128 == 0, "query tile must be lane-aligned (mult of 128) or == L"
    assert tk == L or tk % 8 == 0, "key chunk must be sublane-aligned (mult of 8) or == L"

    # Collapse the C=21 channel dimension into 6 scalars (see header derivation).
    a = jnp.sum(wq * wk)
    b = jnp.sum(wq * bk)
    c = jnp.sum(bq * wk)
    d = jnp.sum(bq * bk)
    s = jnp.sum(wo * wv)
    t = jnp.sum(wo * bv) + bo[0, 0]
    coef = jnp.stack([a, b, c, d, s, t]).astype(jnp.float32)   # (6,) -> SMEM

    x_row = x.reshape(B, 1, L)   # queries: lane-dense (1, TQ) tiles
    x_col = x.reshape(B, L, 1)   # keys: full (L, 1) sublane column, resident per batch

    grid = (B, L // tq)
    kernel = functools.partial(self_atten_kernel, tk=tk)

    out = pl.pallas_call(
        kernel,
        out_shape=jax.ShapeDtypeStruct((B, 1, L), jnp.float32),
        grid=grid,
        in_specs=[
            pl.BlockSpec(memory_space=pltpu.MemorySpace.SMEM),        # coef (whole array)
            pl.BlockSpec((1, 1, tq), lambda bi, qi: (bi, 0, qi)),     # x_row (queries)
            pl.BlockSpec((1, L, 1), lambda bi, qi: (bi, 0, 0)),       # x_col (keys, resident)
        ],
        out_specs=pl.BlockSpec((1, 1, tq), lambda bi, qi: (bi, 0, qi)),
        compiler_params=pltpu.CompilerParams(
            dimension_semantics=("parallel", "parallel")),
    )(coef, x_row, x_col)
    return out.reshape(B, L)


def init_params(key):
    ks = jax.random.split(key, 8)
    scale = 0.1
    wq = scale * jax.random.normal(ks[0], (1, C), jnp.float32)
    bq = scale * jax.random.normal(ks[1], (1, C), jnp.float32)
    wk = scale * jax.random.normal(ks[2], (1, C), jnp.float32)
    bk = scale * jax.random.normal(ks[3], (1, C), jnp.float32)
    wv = scale * jax.random.normal(ks[4], (1, C), jnp.float32)
    bv = scale * jax.random.normal(ks[5], (1, C), jnp.float32)
    wo = scale * jax.random.normal(ks[6], (1, C), jnp.float32)
    bo = scale * jax.random.normal(ks[7], (1, 1), jnp.float32)
    return (wq, bq, wk, bk, wv, bv, wo, bo)


def self_atten_ref(x, params):
    # pure-JAX reference mirroring the PyTorch forward exactly (full C=21 path)
    wq, bq, wk, bk, wv, bv, wo, bo = params
    q = x[:, :, None] * wq[None] + bq[None]            # (B, L, C)  proj_q[b,l,c]
    k = x[:, :, None] * wk[None] + bk[None]            # (B, L, C)
    v = x[:, :, None] * wv[None] + bv[None]            # (B, L, C)
    energy = jnp.einsum('bic,bjc->bij', q, k)          # (B, L, L)
    attent = jax.nn.softmax(energy, axis=-1)
    attent_p = jnp.transpose(attent, (0, 2, 1))        # (B, j, l)
    outc = jnp.einsum('bjc,bjl->bcl', v, attent_p)     # (B, C, L)
    out = jnp.einsum('bcl,c->bl', outc, wo[0]) + bo[0, 0]
    return out


if __name__ == "__main__":
    key = jax.random.PRNGKey(0)
    kx, kp = jax.random.split(key)
    B, L = 2, 512
    x = jax.random.normal(kx, (B, L), jnp.float32)
    params = init_params(kp)

    out = self_atten(x, params)
    out = jax.block_until_ready(out)

    ref = self_atten_ref(x, params)
    assert out.shape == (B, L)
    # Tolerance covers the channel-collapse reassociation (normalization is exact now).
    assert jnp.allclose(out, ref, atol=1e-3, rtol=1e-3), "mismatch vs reference"
    print("KERNEL_OK")
</pallas_src>

<mosaic_0001>
module attributes {stable_mosaic.version = 11 : i64} {
  func.func @self_atten_kernel(%arg0: i32, %arg1: i32, %arg2: memref<6xf32, #tpu.memory_space<smem>>, %arg3: memref<1x1x512xf32, #tpu.memory_space<vmem>>, %arg4: memref<1x512x1xf32, #tpu.memory_space<vmem>>, %arg5: memref<1x1x512xf32, #tpu.memory_space<vmem>>) attributes {dimension_semantics = [#tpu.dimension_semantics<parallel>, #tpu.dimension_semantics<parallel>], iteration_bounds = array<i64: 2, 1>, scalar_prefetch = 0 : i64, scratch_operands = 0 : i64, tpu.core_type = #tpu.core_type<tc>, window_params = [{transform_indices = @transform_0, window_bounds = array<i64: 6>}, {transform_indices = @transform_1, window_bounds = array<i64: 1, 1, 512>}, {transform_indices = @transform_2, window_bounds = array<i64: 1, 512, 1>}, {transform_indices = @transform_3, window_bounds = array<i64: 1, 1, 512>}]} {
    %c0 = arith.constant 0 : index
    %0 = memref.load %arg2[%c0] : memref<6xf32, #tpu.memory_space<smem>>
    %c1 = arith.constant 1 : index
    %1 = memref.load %arg2[%c1] : memref<6xf32, #tpu.memory_space<smem>>
    %c2 = arith.constant 2 : index
    %2 = memref.load %arg2[%c2] : memref<6xf32, #tpu.memory_space<smem>>
    %c3 = arith.constant 3 : index
    %3 = memref.load %arg2[%c3] : memref<6xf32, #tpu.memory_space<smem>>
    %c0_0 = arith.constant 0 : index
    %c0_1 = arith.constant 0 : index
    %c0_2 = arith.constant 0 : index
    %4 = vector.load %arg3[%c0_0, %c0_1, %c0_2] : memref<1x1x512xf32, #tpu.memory_space<vmem>>, vector<1x1x512xf32>
    %5 = vector.shape_cast %4 : vector<1x1x512xf32> to vector<1x512xf32>
    %cst = arith.constant 0xFF800000 : f32
    %6 = vector.broadcast %cst : f32 to vector<1x512xf32>
    %cst_3 = arith.constant 0.000000e+00 : f32
    %7 = vector.broadcast %cst_3 : f32 to vector<1x512xf32>
    %cst_4 = arith.constant 0.000000e+00 : f32
    %8 = vector.broadcast %cst_4 : f32 to vector<1x512xf32>
    %c0_i32 = arith.constant 0 : i32
    %c32_i32 = arith.constant 32 : i32
    %9 = arith.muli %c0_i32, %c32_i32 : i32
    %10 = tpu.assume_multiple %9, 32 : i32
    %c0_5 = arith.constant 0 : index
    %11 = arith.index_cast %10 : i32 to index
    %c0_6 = arith.constant 0 : index
    %12 = vector.load %arg4[%c0_5, %11, %c0_6] : memref<1x512x1xf32, #tpu.memory_space<vmem>>, vector<1x32x1xf32>
    %13 = vector.shape_cast %12 : vector<1x32x1xf32> to vector<32x1xf32>
    %14 = vector.broadcast %0 : f32 to vector<32x1xf32>
    %15 = arith.mulf %14, %13 : vector<32x1xf32>
    %16 = vector.broadcast %1 : f32 to vector<32x1xf32>
    %17 = arith.addf %15, %16 : vector<32x1xf32>
    %18 = vector.broadcast %2 : f32 to vector<32x1xf32>
    %19 = arith.mulf %18, %13 : vector<32x1xf32>
    %20 = vector.broadcast %3 : f32 to vector<32x1xf32>
    %21 = arith.addf %19, %20 : vector<32x1xf32>
    %22 = vector.broadcast %17 : vector<32x1xf32> to vector<32x512xf32>
    %23 = vector.broadcast %5 : vector<1x512xf32> to vector<32x512xf32>
    %24 = arith.mulf %22, %23 : vector<32x512xf32>
    %25 = vector.broadcast %21 : vector<32x1xf32> to vector<32x512xf32>
    %26 = arith.addf %24, %25 : vector<32x512xf32>
    %cst_7 = arith.constant dense<0xFF800000> : vector<512xf32>
    %27 = vector.multi_reduction <maximumf>, %26, %cst_7 [0] : vector<32x512xf32> to vector<512xf32>
    %28 = vector.shape_cast %27 : vector<512xf32> to vector<1x512xf32>
    %29 = arith.maximumf %6, %28 : vector<1x512xf32>
    %30 = arith.subf %6, %29 : vector<1x512xf32>
    %31 = math.exp %30 : vector<1x512xf32>
    %32 = vector.broadcast %29 : vector<1x512xf32> to vector<32x512xf32>
    %33 = arith.subf %26, %32 : vector<32x512xf32>
    %34 = math.exp %33 : vector<32x512xf32>
    %35 = arith.mulf %31, %7 : vector<1x512xf32>
    %cst_8 = arith.constant dense<0.000000e+00> : vector<512xf32>
    %36 = vector.multi_reduction <add>, %34, %cst_8 [0] : vector<32x512xf32> to vector<512xf32>
    %37 = vector.shape_cast %36 : vector<512xf32> to vector<1x512xf32>
    %38 = arith.addf %35, %37 : vector<1x512xf32>
    %39 = arith.mulf %31, %8 : vector<1x512xf32>
    %40 = vector.broadcast %13 : vector<32x1xf32> to vector<32x512xf32>
    %41 = arith.mulf %34, %40 : vector<32x512xf32>
    %cst_9 = arith.constant dense<0.000000e+00> : vector<512xf32>
    %42 = vector.multi_reduction <add>, %41, %cst_9 [0] : vector<32x512xf32> to vector<512xf32>
    %43 = vector.shape_cast %42 : vector<512xf32> to vector<1x512xf32>
    %44 = arith.addf %39, %43 : vector<1x512xf32>
    %c1_i32 = arith.constant 1 : i32
    %c32_i32_10 = arith.constant 32 : i32
    %45 = arith.muli %c1_i32, %c32_i32_10 : i32
    %46 = tpu.assume_multiple %45, 32 : i32
    %c0_11 = arith.constant 0 : index
    %47 = arith.index_cast %46 : i32 to index
    %c0_12 = arith.constant 0 : index
    %48 = vector.load %arg4[%c0_11, %47, %c0_12] : memref<1x512x1xf32, #tpu.memory_space<vmem>>, vector<1x32x1xf32>
    %49 = vector.shape_cast %48 : vector<1x32x1xf32> to vector<32x1xf32>
    %50 = vector.broadcast %0 : f32 to vector<32x1xf32>
    %51 = arith.mulf %50, %49 : vector<32x1xf32>
    %52 = vector.broadcast %1 : f32 to vector<32x1xf32>
    %53 = arith.addf %51, %52 : vector<32x1xf32>
    %54 = vector.broadcast %2 : f32 to vector<32x1xf32>
    %55 = arith.mulf %54, %49 : vector<32x1xf32>
    %56 = vector.broadcast %3 : f32 to vector<32x1xf32>
    %57 = arith.addf %55, %56 : vector<32x1xf32>
    %58 = vector.broadcast %53 : vector<32x1xf32> to vector<32x512xf32>
    %59 = vector.broadcast %5 : vector<1x512xf32> to vector<32x512xf32>
    %60 = arith.mulf %58, %59 : vector<32x512xf32>
    %61 = vector.broadcast %57 : vector<32x1xf32> to vector<32x512xf32>
    %62 = arith.addf %60, %61 : vector<32x512xf32>
    %cst_13 = arith.constant dense<0xFF800000> : vector<512xf32>
    %63 = vector.multi_reduction <maximumf>, %62, %cst_13 [0] : vector<32x512xf32> to vector<512xf32>
    %64 = vector.shape_cast %63 : vector<512xf32> to vector<1x512xf32>
    %65 = arith.maximumf %29, %64 : vector<1x512xf32>
    %66 = arith.subf %29, %65 : vector<1x512xf32>
    %67 = math.exp %66 : vector<1x512xf32>
    %68 = vector.broadcast %65 : vector<1x512xf32> to vector<32x512xf32>
    %69 = arith.subf %62, %68 : vector<32x512xf32>
    %70 = math.exp %69 : vector<32x512xf32>
    %71 = arith.mulf %67, %38 : vector<1x512xf32>
    %cst_14 = arith.constant dense<0.000000e+00> : vector<512xf32>
    %72 = vector.multi_reduction <add>, %70, %cst_14 [0] : vector<32x512xf32> to vector<512xf32>
    %73 = vector.shape_cast %72 : vector<512xf32> to vector<1x512xf32>
    %74 = arith.addf %71, %73 : vector<1x512xf32>
    %75 = arith.mulf %67, %44 : vector<1x512xf32>
    %76 = vector.broadcast %49 : vector<32x1xf32> to vector<32x512xf32>
    %77 = arith.mulf %70, %76 : vector<32x512xf32>
    %cst_15 = arith.constant dense<0.000000e+00> : vector<512xf32>
    %78 = vector.multi_reduction <add>, %77, %cst_15 [0] : vector<32x512xf32> to vector<512xf32>
    %79 = vector.shape_cast %78 : vector<512xf32> to vector<1x512xf32>
    %80 = arith.addf %75, %79 : vector<1x512xf32>
    %c2_i32 = arith.constant 2 : i32
    %c32_i32_16 = arith.constant 32 : i32
    %81 = arith.muli %c2_i32, %c32_i32_16 : i32
    %82 = tpu.assume_multiple %81, 32 : i32
    %c0_17 = arith.constant 0 : index
    %83 = arith.index_cast %82 : i32 to index
    %c0_18 = arith.constant 0 : index
    %84 = vector.load %arg4[%c0_17, %83, %c0_18] : memref<1x512x1xf32, #tpu.memory_space<vmem>>, vector<1x32x1xf32>
    %85 = vector.shape_cast %84 : vector<1x32x1xf32> to vector<32x1xf32>
    %86 = vector.broadcast %0 : f32 to vector<32x1xf32>
    %87 = arith.mulf %86, %85 : vector<32x1xf32>
    %88 = vector.broadcast %1 : f32 to vector<32x1xf32>
    %89 = arith.addf %87, %88 : vector<32x1xf32>
    %90 = vector.broadcast %2 : f32 to vector<32x1xf32>
    %91 = arith.mulf %90, %85 : vector<32x1xf32>
    %92 = vector.broadcast %3 : f32 to vector<32x1xf32>
    %93 = arith.addf %91, %92 : vector<32x1xf32>
    %94 = vector.broadcast %89 : vector<32x1xf32> to vector<32x512xf32>
    %95 = vector.broadcast %5 : vector<1x512xf32> to vector<32x512xf32>
    %96 = arith.mulf %94, %95 : vector<32x512xf32>
    %97 = vector.broadcast %93 : vector<32x1xf32> to vector<32x512xf32>
    %98 = arith.addf %96, %97 : vector<32x512xf32>
    %cst_19 = arith.constant dense<0xFF800000> : vector<512xf32>
    %99 = vector.multi_reduction <maximumf>, %98, %cst_19 [0] : vector<32x512xf32> to vector<512xf32>
    %100 = vector.shape_cast %99 : vector<512xf32> to vector<1x512xf32>
    %101 = arith.maximumf %65, %100 : vector<1x512xf32>
    %102 = arith.subf %65, %101 : vector<1x512xf32>
    %103 = math.exp %102 : vector<1x512xf32>
    %104 = vector.broadcast %101 : vector<1x512xf32> to vector<32x512xf32>
    %105 = arith.subf %98, %104 : vector<32x512xf32>
    %106 = math.exp %105 : vector<32x512xf32>
    %107 = arith.mulf %103, %74 : vector<1x512xf32>
    %cst_20 = arith.constant dense<0.000000e+00> : vector<512xf32>
    %108 = vector.multi_reduction <add>, %106, %cst_20 [0] : vector<32x512xf32> to vector<512xf32>
    %109 = vector.shape_cast %108 : vector<512xf32> to vector<1x512xf32>
    %110 = arith.addf %107, %109 : vector<1x512xf32>
    %111 = arith.mulf %103, %80 : vector<1x512xf32>
    %112 = vector.broadcast %85 : vector<32x1xf32> to vector<32x512xf32>
    %113 = arith.mulf %106, %112 : vector<32x512xf32>
    %cst_21 = arith.constant dense<0.000000e+00> : vector<512xf32>
    %114 = vector.multi_reduction <add>, %113, %cst_21 [0] : vector<32x512xf32> to vector<512xf32>
    %115 = vector.shape_cast %114 : vector<512xf32> to vector<1x512xf32>
    %116 = arith.addf %111, %115 : vector<1x512xf32>
    %c3_i32 = arith.constant 3 : i32
    %c32_i32_22 = arith.constant 32 : i32
    %117 = arith.muli %c3_i32, %c32_i32_22 : i32
    %118 = tpu.assume_multiple %117, 32 : i32
    %c0_23 = arith.constant 0 : index
    %119 = arith.index_cast %118 : i32 to index
    %c0_24 = arith.constant 0 : index
    %120 = vector.load %arg4[%c0_23, %119, %c0_24] : memref<1x512x1xf32, #tpu.memory_space<vmem>>, vector<1x32x1xf32>
    %121 = vector.shape_cast %120 : vector<1x32x1xf32> to vector<32x1xf32>
    %122 = vector.broadcast %0 : f32 to vector<32x1xf32>
    %123 = arith.mulf %122, %121 : vector<32x1xf32>
    %124 = vector.broadcast %1 : f32 to vector<32x1xf32>
    %125 = arith.addf %123, %124 : vector<32x1xf32>
    %126 = vector.broadcast %2 : f32 to vector<32x1xf32>
    %127 = arith.mulf %126, %121 : vector<32x1xf32>
    %128 = vector.broadcast %3 : f32 to vector<32x1xf32>
    %129 = arith.addf %127, %128 : vector<32x1xf32>
    %130 = vector.broadcast %125 : vector<32x1xf32> to vector<32x512xf32>
    %131 = vector.broadcast %5 : vector<1x512xf32> to vector<32x512xf32>
    %132 = arith.mulf %130, %131 : vector<32x512xf32>
    %133 = vector.broadcast %129 : vector<32x1xf32> to vector<32x512xf32>
    %134 = arith.addf %132, %133 : vector<32x512xf32>
    %cst_25 = arith.constant dense<0xFF800000> : vector<512xf32>
    %135 = vector.multi_reduction <maximumf>, %134, %cst_25 [0] : vector<32x512xf32> to vector<512xf32>
    %136 = vector.shape_cast %135 : vector<512xf32> to vector<1x512xf32>
    %137 = arith.maximumf %101, %136 : vector<1x512xf32>
    %138 = arith.subf %101, %137 : vector<1x512xf32>
    %139 = math.exp %138 : vector<1x512xf32>
    %140 = vector.broadcast %137 : vector<1x512xf32> to vector<32x512xf32>
    %141 = arith.subf %134, %140 : vector<32x512xf32>
    %142 = math.exp %141 : vector<32x512xf32>
    %143 = arith.mulf %139, %110 : vector<1x512xf32>
    %cst_26 = arith.constant dense<0.000000e+00> : vector<512xf32>
    %144 = vector.multi_reduction <add>, %142, %cst_26 [0] : vector<32x512xf32> to vector<512xf32>
    %145 = vector.shape_cast %144 : vector<512xf32> to vector<1x512xf32>
    %146 = arith.addf %143, %145 : vector<1x512xf32>
    %147 = arith.mulf %139, %116 : vector<1x512xf32>
    %148 = vector.broadcast %121 : vector<32x1xf32> to vector<32x512xf32>
    %149 = arith.mulf %142, %148 : vector<32x512xf32>
    %cst_27 = arith.constant dense<0.000000e+00> : vector<512xf32>
    %150 = vector.multi_reduction <add>, %149, %cst_27 [0] : vector<32x512xf32> to vector<512xf32>
    %151 = vector.shape_cast %150 : vector<512xf32> to vector<1x512xf32>
    %152 = arith.addf %147, %151 : vector<1x512xf32>
    %c4_i32 = arith.constant 4 : i32
    %c32_i32_28 = arith.constant 32 : i32
    %153 = arith.muli %c4_i32, %c32_i32_28 : i32
    %154 = tpu.assume_multiple %153, 32 : i32
    %c0_29 = arith.constant 0 : index
    %155 = arith.index_cast %154 : i32 to index
    %c0_30 = arith.constant 0 : index
    %156 = vector.load %arg4[%c0_29, %155, %c0_30] : memref<1x512x1xf32, #tpu.memory_space<vmem>>, vector<1x32x1xf32>
    %157 = vector.shape_cast %156 : vector<1x32x1xf32> to vector<32x1xf32>
    %158 = vector.broadcast %0 : f32 to vector<32x1xf32>
    %159 = arith.mulf %158, %157 : vector<32x1xf32>
    %160 = vector.broadcast %1 : f32 to vector<32x1xf32>
    %161 = arith.addf %159, %160 : vector<32x1xf32>
    %162 = vector.broadcast %2 : f32 to vector<32x1xf32>
    %163 = arith.mulf %162, %157 : vector<32x1xf32>
    %164 = vector.broadcast %3 : f32 to vector<32x1xf32>
    %165 = arith.addf %163, %164 : vector<32x1xf32>
    %166 = vector.broadcast %161 : vector<32x1xf32> to vector<32x512xf32>
    %167 = vector.broadcast %5 : vector<1x512xf32> to vector<32x512xf32>
    %168 = arith.mulf %166, %167 : vector<32x512xf32>
    %169 = vector.broadcast %165 : vector<32x1xf32> to vector<32x512xf32>
    %170 = arith.addf %168, %169 : vector<32x512xf32>
    %cst_31 = arith.constant dense<0xFF800000> : vector<512xf32>
    %171 = vector.multi_reduction <maximumf>, %170, %cst_31 [0] : vector<32x512xf32> to vector<512xf32>
    %172 = vector.shape_cast %171 : vector<512xf32> to vector<1x512xf32>
    %173 = arith.maximumf %137, %172 : vector<1x512xf32>
    %174 = arith.subf %137, %173 : vector<1x512xf32>
    %175 = math.exp %174 : vector<1x512xf32>
    %176 = vector.broadcast %173 : vector<1x512xf32> to vector<32x512xf32>
    %177 = arith.subf %170, %176 : vector<32x512xf32>
    %178 = math.exp %177 : vector<32x512xf32>
    %179 = arith.mulf %175, %146 : vector<1x512xf32>
    %cst_32 = arith.constant dense<0.000000e+00> : vector<512xf32>
    %180 = vector.multi_reduction <add>, %178, %cst_32 [0] : vector<32x512xf32> to vector<512xf32>
    %181 = vector.shape_cast %180 : vector<512xf32> to vector<1x512xf32>
    %182 = arith.addf %179, %181 : vector<1x512xf32>
    %183 = arith.mulf %175, %152 : vector<1x512xf32>
    %184 = vector.broadcast %157 : vector<32x1xf32> to vector<32x512xf32>
    %185 = arith.mulf %178, %184 : vector<32x512xf32>
    %cst_33 = arith.constant dense<0.000000e+00> : vector<512xf32>
    %186 = vector.multi_reduction <add>, %185, %cst_33 [0] : vector<32x512xf32> to vector<512xf32>
    %187 = vector.shape_cast %186 : vector<512xf32> to vector<1x512xf32>
    %188 = arith.addf %183, %187 : vector<1x512xf32>
    %c5_i32 = arith.constant 5 : i32
    %c32_i32_34 = arith.constant 32 : i32
    %189 = arith.muli %c5_i32, %c32_i32_34 : i32
    %190 = tpu.assume_multiple %189, 32 : i32
    %c0_35 = arith.constant 0 : index
    %191 = arith.index_cast %190 : i32 to index
    %c0_36 = arith.constant 0 : index
    %192 = vector.load %arg4[%c0_35, %191, %c0_36] : memref<1x512x1xf32, #tpu.memory_space<vmem>>, vector<1x32x1xf32>
    %193 = vector.shape_cast %192 : vector<1x32x1xf32> to vector<32x1xf32>
    %194 = vector.broadcast %0 : f32 to vector<32x1xf32>
    %195 = arith.mulf %194, %193 : vector<32x1xf32>
    %196 = vector.broadcast %1 : f32 to vector<32x1xf32>
    %197 = arith.addf %195, %196 : vector<32x1xf32>
    %198 = vector.broadcast %2 : f32 to vector<32x1xf32>
    %199 = arith.mulf %198, %193 : vector<32x1xf32>
    %200 = vector.broadcast %3 : f32 to vector<32x1xf32>
    %201 = arith.addf %199, %200 : vector<32x1xf32>
    %202 = vector.broadcast %197 : vector<32x1xf32> to vector<32x512xf32>
    %203 = vector.broadcast %5 : vector<1x512xf32> to vector<32x512xf32>
    %204 = arith.mulf %202, %203 : vector<32x512xf32>
    %205 = vector.broadcast %201 : vector<32x1xf32> to vector<32x512xf32>
    %206 = arith.addf %204, %205 : vector<32x512xf32>
    %cst_37 = arith.constant dense<0xFF800000> : vector<512xf32>
    %207 = vector.multi_reduction <maximumf>, %206, %cst_37 [0] : vector<32x512xf32> to vector<512xf32>
    %208 = vector.shape_cast %207 : vector<512xf32> to vector<1x512xf32>
    %209 = arith.maximumf %173, %208 : vector<1x512xf32>
    %210 = arith.subf %173, %209 : vector<1x512xf32>
    %211 = math.exp %210 : vector<1x512xf32>
    %212 = vector.broadcast %209 : vector<1x512xf32> to vector<32x512xf32>
    %213 = arith.subf %206, %212 : vector<32x512xf32>
    %214 = math.exp %213 : vector<32x512xf32>
    %215 = arith.mulf %211, %182 : vector<1x512xf32>
    %cst_38 = arith.constant dense<0.000000e+00> : vector<512xf32>
    %216 = vector.multi_reduction <add>, %214, %cst_38 [0] : vector<32x512xf32> to vector<512xf32>
    %217 = vector.shape_cast %216 : vector<512xf32> to vector<1x512xf32>
    %218 = arith.addf %215, %217 : vector<1x512xf32>
    %219 = arith.mulf %211, %188 : vector<1x512xf32>
    %220 = vector.broadcast %193 : vector<32x1xf32> to vector<32x512xf32>
    %221 = arith.mulf %214, %220 : vector<32x512xf32>
    %cst_39 = arith.constant dense<0.000000e+00> : vector<512xf32>
    %222 = vector.multi_reduction <add>, %221, %cst_39 [0] : vector<32x512xf32> to vector<512xf32>
    %223 = vector.shape_cast %222 : vector<512xf32> to vector<1x512xf32>
    %224 = arith.addf %219, %223 : vector<1x512xf32>
    %c6_i32 = arith.constant 6 : i32
    %c32_i32_40 = arith.constant 32 : i32
    %225 = arith.muli %c6_i32, %c32_i32_40 : i32
    %226 = tpu.assume_multiple %225, 32 : i32
    %c0_41 = arith.constant 0 : index
    %227 = arith.index_cast %226 : i32 to index
    %c0_42 = arith.constant 0 : index
    %228 = vector.load %arg4[%c0_41, %227, %c0_42] : memref<1x512x1xf32, #tpu.memory_space<vmem>>, vector<1x32x1xf32>
    %229 = vector.shape_cast %228 : vector<1x32x1xf32> to vector<32x1xf32>
    %230 = vector.broadcast %0 : f32 to vector<32x1xf32>
    %231 = arith.mulf %230, %229 : vector<32x1xf32>
    %232 = vector.broadcast %1 : f32 to vector<32x1xf32>
    %233 = arith.addf %231, %232 : vector<32x1xf32>
    %234 = vector.broadcast %2 : f32 to vector<32x1xf32>
    %235 = arith.mulf %234, %229 : vector<32x1xf32>
    %236 = vector.broadcast %3 : f32 to vector<32x1xf32>
    %237 = arith.addf %235, %236 : vector<32x1xf32>
    %238 = vector.broadcast %233 : vector<32x1xf32> to vector<32x512xf32>
    %239 = vector.broadcast %5 : vector<1x512xf32> to vector<32x512xf32>
    %240 = arith.mulf %238, %239 : vector<32x512xf32>
    %241 = vector.broadcast %237 : vector<32x1xf32> to vector<32x512xf32>
    %242 = arith.addf %240, %241 : vector<32x512xf32>
    %cst_43 = arith.constant dense<0xFF800000> : vector<512xf32>
    %243 = vector.multi_reduction <maximumf>, %242, %cst_43 [0] : vector<32x512xf32> to vector<512xf32>
    %244 = vector.shape_cast %243 : vector<512xf32> to vector<1x512xf32>
    %245 = arith.maximumf %209, %244 : vector<1x512xf32>
    %246 = arith.subf %209, %245 : vector<1x512xf32>
    %247 = math.exp %246 : vector<1x512xf32>
    %248 = vector.broadcast %245 : vector<1x512xf32> to vector<32x512xf32>
    %249 = arith.subf %242, %248 : vector<32x512xf32>
    %250 = math.exp %249 : vector<32x512xf32>
    %251 = arith.mulf %247, %218 : vector<1x512xf32>
    %cst_44 = arith.constant dense<0.000000e+00> : vector<512xf32>
    %252 = vector.multi_reduction <add>, %250, %cst_44 [0] : vector<32x512xf32> to vector<512xf32>
    %253 = vector.shape_cast %252 : vector<512xf32> to vector<1x512xf32>
    %254 = arith.addf %251, %253 : vector<1x512xf32>
    %255 = arith.mulf %247, %224 : vector<1x512xf32>
    %256 = vector.broadcast %229 : vector<32x1xf32> to vector<32x512xf32>
    %257 = arith.mulf %250, %256 : vector<32x512xf32>
    %cst_45 = arith.constant dense<0.000000e+00> : vector<512xf32>
    %258 = vector.multi_reduction <add>, %257, %cst_45 [0] : vector<32x512xf32> to vector<512xf32>
    %259 = vector.shape_cast %258 : vector<512xf32> to vector<1x512xf32>
    %260 = arith.addf %255, %259 : vector<1x512xf32>
    %c7_i32 = arith.constant 7 : i32
    %c32_i32_46 = arith.constant 32 : i32
    %261 = arith.muli %c7_i32, %c32_i32_46 : i32
    %262 = tpu.assume_multiple %261, 32 : i32
    %c0_47 = arith.constant 0 : index
    %263 = arith.index_cast %262 : i32 to index
    %c0_48 = arith.constant 0 : index
    %264 = vector.load %arg4[%c0_47, %263, %c0_48] : memref<1x512x1xf32, #tpu.memory_space<vmem>>, vector<1x32x1xf32>
    %265 = vector.shape_cast %264 : vector<1x32x1xf32> to vector<32x1xf32>
    %266 = vector.broadcast %0 : f32 to vector<32x1xf32>
    %267 = arith.mulf %266, %265 : vector<32x1xf32>
    %268 = vector.broadcast %1 : f32 to vector<32x1xf32>
    %269 = arith.addf %267, %268 : vector<32x1xf32>
    %270 = vector.broadcast %2 : f32 to vector<32x1xf32>
    %271 = arith.mulf %270, %265 : vector<32x1xf32>
    %272 = vector.broadcast %3 : f32 to vector<32x1xf32>
    %273 = arith.addf %271, %272 : vector<32x1xf32>
    %274 = vector.broadcast %269 : vector<32x1xf32> to vector<32x512xf32>
    %275 = vector.broadcast %5 : vector<1x512xf32> to vector<32x512xf32>
    %276 = arith.mulf %274, %275 : vector<32x512xf32>
    %277 = vector.broadcast %273 : vector<32x1xf32> to vector<32x512xf32>
    %278 = arith.addf %276, %277 : vector<32x512xf32>
    %cst_49 = arith.constant dense<0xFF800000> : vector<512xf32>
    %279 = vector.multi_reduction <maximumf>, %278, %cst_49 [0] : vector<32x512xf32> to vector<512xf32>
    %280 = vector.shape_cast %279 : vector<512xf32> to vector<1x512xf32>
    %281 = arith.maximumf %245, %280 : vector<1x512xf32>
    %282 = arith.subf %245, %281 : vector<1x512xf32>
    %283 = math.exp %282 : vector<1x512xf32>
    %284 = vector.broadcast %281 : vector<1x512xf32> to vector<32x512xf32>
    %285 = arith.subf %278, %284 : vector<32x512xf32>
    %286 = math.exp %285 : vector<32x512xf32>
    %287 = arith.mulf %283, %254 : vector<1x512xf32>
    %cst_50 = arith.constant dense<0.000000e+00> : vector<512xf32>
    %288 = vector.multi_reduction <add>, %286, %cst_50 [0] : vector<32x512xf32> to vector<512xf32>
    %289 = vector.shape_cast %288 : vector<512xf32> to vector<1x512xf32>
    %290 = arith.addf %287, %289 : vector<1x512xf32>
    %291 = arith.mulf %283, %260 : vector<1x512xf32>
    %292 = vector.broadcast %265 : vector<32x1xf32> to vector<32x512xf32>
    %293 = arith.mulf %286, %292 : vector<32x512xf32>
    %cst_51 = arith.constant dense<0.000000e+00> : vector<512xf32>
    %294 = vector.multi_reduction <add>, %293, %cst_51 [0] : vector<32x512xf32> to vector<512xf32>
    %295 = vector.shape_cast %294 : vector<512xf32> to vector<1x512xf32>
    %296 = arith.addf %291, %295 : vector<1x512xf32>
    %c8_i32 = arith.constant 8 : i32
    %c32_i32_52 = arith.constant 32 : i32
    %297 = arith.muli %c8_i32, %c32_i32_52 : i32
    %298 = tpu.assume_multiple %297, 32 : i32
    %c0_53 = arith.constant 0 : index
    %299 = arith.index_cast %298 : i32 to index
    %c0_54 = arith.constant 0 : index
    %300 = vector.load %arg4[%c0_53, %299, %c0_54] : memref<1x512x1xf32, #tpu.memory_space<vmem>>, vector<1x32x1xf32>
    %301 = vector.shape_cast %300 : vector<1x32x1xf32> to vector<32x1xf32>
    %302 = vector.broadcast %0 : f32 to vector<32x1xf32>
    %303 = arith.mulf %302, %301 : vector<32x1xf32>
    %304 = vector.broadcast %1 : f32 to vector<32x1xf32>
    %305 = arith.addf %303, %304 : vector<32x1xf32>
    %306 = vector.broadcast %2 : f32 to vector<32x1xf32>
    %307 = arith.mulf %306, %301 : vector<32x1xf32>
    %308 = vector.broadcast %3 : f32 to vector<32x1xf32>
    %309 = arith.addf %307, %308 : vector<32x1xf32>
    %310 = vector.broadcast %305 : vector<32x1xf32> to vector<32x512xf32>
    %311 = vector.broadcast %5 : vector<1x512xf32> to vector<32x512xf32>
    %312 = arith.mulf %310, %311 : vector<32x512xf32>
    %313 = vector.broadcast %309 : vector<32x1xf32> to vector<32x512xf32>
    %314 = arith.addf %312, %313 : vector<32x512xf32>
    %cst_55 = arith.constant dense<0xFF800000> : vector<512xf32>
    %315 = vector.multi_reduction <maximumf>, %314, %cst_55 [0] : vector<32x512xf32> to vector<512xf32>
    %316 = vector.shape_cast %315 : vector<512xf32> to vector<1x512xf32>
    %317 = arith.maximumf %281, %316 : vector<1x512xf32>
    %318 = arith.subf %281, %317 : vector<1x512xf32>
    %319 = math.exp %318 : vector<1x512xf32>
    %320 = vector.broadcast %317 : vector<1x512xf32> to vector<32x512xf32>
    %321 = arith.subf %314, %320 : vector<32x512xf32>
    %322 = math.exp %321 : vector<32x512xf32>
    %323 = arith.mulf %319, %290 : vector<1x512xf32>
    %cst_56 = arith.constant dense<0.000000e+00> : vector<512xf32>
    %324 = vector.multi_reduction <add>, %322, %cst_56 [0] : vector<32x512xf32> to vector<512xf32>
    %325 = vector.shape_cast %324 : vector<512xf32> to vector<1x512xf32>
    %326 = arith.addf %323, %325 : vector<1x512xf32>
    %327 = arith.mulf %319, %296 : vector<1x512xf32>
    %328 = vector.broadcast %301 : vector<32x1xf32> to vector<32x512xf32>
    %329 = arith.mulf %322, %328 : vector<32x512xf32>
    %cst_57 = arith.constant dense<0.000000e+00> : vector<512xf32>
    %330 = vector.multi_reduction <add>, %329, %cst_57 [0] : vector<32x512xf32> to vector<512xf32>
    %331 = vector.shape_cast %330 : vector<512xf32> to vector<1x512xf32>
    %332 = arith.addf %327, %331 : vector<1x512xf32>
    %c9_i32 = arith.constant 9 : i32
    %c32_i32_58 = arith.constant 32 : i32
    %333 = arith.muli %c9_i32, %c32_i32_58 : i32
    %334 = tpu.assume_multiple %333, 32 : i32
    %c0_59 = arith.constant 0 : index
    %335 = arith.index_cast %334 : i32 to index
    %c0_60 = arith.constant 0 : index
    %336 = vector.load %arg4[%c0_59, %335, %c0_60] : memref<1x512x1xf32, #tpu.memory_space<vmem>>, vector<1x32x1xf32>
    %337 = vector.shape_cast %336 : vector<1x32x1xf32> to vector<32x1xf32>
    %338 = vector.broadcast %0 : f32 to vector<32x1xf32>
    %339 = arith.mulf %338, %337 : vector<32x1xf32>
    %340 = vector.broadcast %1 : f32 to vector<32x1xf32>
    %341 = arith.addf %339, %340 : vector<32x1xf32>
    %342 = vector.broadcast %2 : f32 to vector<32x1xf32>
    %343 = arith.mulf %342, %337 : vector<32x1xf32>
    %344 = vector.broadcast %3 : f32 to vector<32x1xf32>
    %345 = arith.addf %343, %344 : vector<32x1xf32>
    %346 = vector.broadcast %341 : vector<32x1xf32> to vector<32x512xf32>
    %347 = vector.broadcast %5 : vector<1x512xf32> to vector<32x512xf32>
    %348 = arith.mulf %346, %347 : vector<32x512xf32>
    %349 = vector.broadcast %345 : vector<32x1xf32> to vector<32x512xf32>
    %350 = arith.addf %348, %349 : vector<32x512xf32>
    %cst_61 = arith.constant dense<0xFF800000> : vector<512xf32>
    %351 = vector.multi_reduction <maximumf>, %350, %cst_61 [0] : vector<32x512xf32> to vector<512xf32>
    %352 = vector.shape_cast %351 : vector<512xf32> to vector<1x512xf32>
    %353 = arith.maximumf %317, %352 : vector<1x512xf32>
    %354 = arith.subf %317, %353 : vector<1x512xf32>
    %355 = math.exp %354 : vector<1x512xf32>
    %356 = vector.broadcast %353 : vector<1x512xf32> to vector<32x512xf32>
    %357 = arith.subf %350, %356 : vector<32x512xf32>
    %358 = math.exp %357 : vector<32x512xf32>
    %359 = arith.mulf %355, %326 : vector<1x512xf32>
    %cst_62 = arith.constant dense<0.000000e+00> : vector<512xf32>
    %360 = vector.multi_reduction <add>, %358, %cst_62 [0] : vector<32x512xf32> to vector<512xf32>
    %361 = vector.shape_cast %360 : vector<512xf32> to vector<1x512xf32>
    %362 = arith.addf %359, %361 : vector<1x512xf32>
    %363 = arith.mulf %355, %332 : vector<1x512xf32>
    %364 = vector.broadcast %337 : vector<32x1xf32> to vector<32x512xf32>
    %365 = arith.mulf %358, %364 : vector<32x512xf32>
    %cst_63 = arith.constant dense<0.000000e+00> : vector<512xf32>
    %366 = vector.multi_reduction <add>, %365, %cst_63 [0] : vector<32x512xf32> to vector<512xf32>
    %367 = vector.shape_cast %366 : vector<512xf32> to vector<1x512xf32>
    %368 = arith.addf %363, %367 : vector<1x512xf32>
    %c10_i32 = arith.constant 10 : i32
    %c32_i32_64 = arith.constant 32 : i32
    %369 = arith.muli %c10_i32, %c32_i32_64 : i32
    %370 = tpu.assume_multiple %369, 32 : i32
    %c0_65 = arith.constant 0 : index
    %371 = arith.index_cast %370 : i32 to index
    %c0_66 = arith.constant 0 : index
    %372 = vector.load %arg4[%c0_65, %371, %c0_66] : memref<1x512x1xf32, #tpu.memory_space<vmem>>, vector<1x32x1xf32>
    %373 = vector.shape_cast %372 : vector<1x32x1xf32> to vector<32x1xf32>
    %374 = vector.broadcast %0 : f32 to vector<32x1xf32>
    %375 = arith.mulf %374, %373 : vector<32x1xf32>
    %376 = vector.broadcast %1 : f32 to vector<32x1xf32>
    %377 = arith.addf %375, %376 : vector<32x1xf32>
    %378 = vector.broadcast %2 : f32 to vector<32x1xf32>
    %379 = arith.mulf %378, %373 : vector<32x1xf32>
    %380 = vector.broadcast %3 : f32 to vector<32x1xf32>
    %381 = arith.addf %379, %380 : vector<32x1xf32>
    %382 = vector.broadcast %377 : vector<32x1xf32> to vector<32x512xf32>
    %383 = vector.broadcast %5 : vector<1x512xf32> to vector<32x512xf32>
    %384 = arith.mulf %382, %383 : vector<32x512xf32>
    %385 = vector.broadcast %381 : vector<32x1xf32> to vector<32x512xf32>
    %386 = arith.addf %384, %385 : vector<32x512xf32>
    %cst_67 = arith.constant dense<0xFF800000> : vector<512xf32>
    %387 = vector.multi_reduction <maximumf>, %386, %cst_67 [0] : vector<32x512xf32> to vector<512xf32>
    %388 = vector.shape_cast %387 : vector<512xf32> to vector<1x512xf32>
    %389 = arith.maximumf %353, %388 : vector<1x512xf32>
    %390 = arith.subf %353, %389 : vector<1x512xf32>
    %391 = math.exp %390 : vector<1x512xf32>
    %392 = vector.broadcast %389 : vector<1x512xf32> to vector<32x512xf32>
    %393 = arith.subf %386, %392 : vector<32x512xf32>
    %394 = math.exp %393 : vector<32x512xf32>
    %395 = arith.mulf %391, %362 : vector<1x512xf32>
    %cst_68 = arith.constant dense<0.000000e+00> : vector<512xf32>
    %396 = vector.multi_reduction <add>, %394, %cst_68 [0] : vector<32x512xf32> to vector<512xf32>
    %397 = vector.shape_cast %396 : vector<512xf32> to vector<1x512xf32>
    %398 = arith.addf %395, %397 : vector<1x512xf32>
    %399 = arith.mulf %391, %368 : vector<1x512xf32>
    %400 = vector.broadcast %373 : vector<32x1xf32> to vector<32x512xf32>
    %401 = arith.mulf %394, %400 : vector<32x512xf32>
    %cst_69 = arith.constant dense<0.000000e+00> : vector<512xf32>
    %402 = vector.multi_reduction <add>, %401, %cst_69 [0] : vector<32x512xf32> to vector<512xf32>
    %403 = vector.shape_cast %402 : vector<512xf32> to vector<1x512xf32>
    %404 = arith.addf %399, %403 : vector<1x512xf32>
    %c11_i32 = arith.constant 11 : i32
    %c32_i32_70 = arith.constant 32 : i32
    %405 = arith.muli %c11_i32, %c32_i32_70 : i32
    %406 = tpu.assume_multiple %405, 32 : i32
    %c0_71 = arith.constant 0 : index
    %407 = arith.index_cast %406 : i32 to index
    %c0_72 = arith.constant 0 : index
    %408 = vector.load %arg4[%c0_71, %407, %c0_72] : memref<1x512x1xf32, #tpu.memory_space<vmem>>, vector<1x32x1xf32>
    %409 = vector.shape_cast %408 : vector<1x32x1xf32> to vector<32x1xf32>
    %410 = vector.broadcast %0 : f32 to vector<32x1xf32>
    %411 = arith.mulf %410, %409 : vector<32x1xf32>
    %412 = vector.broadcast %1 : f32 to vector<32x1xf32>
    %413 = arith.addf %411, %412 : vector<32x1xf32>
    %414 = vector.broadcast %2 : f32 to vector<32x1xf32>
    %415 = arith.mulf %414, %409 : vector<32x1xf32>
    %416 = vector.broadcast %3 : f32 to vector<32x1xf32>
    %417 = arith.addf %415, %416 : vector<32x1xf32>
    %418 = vector.broadcast %413 : vector<32x1xf32> to vector<32x512xf32>
    %419 = vector.broadcast %5 : vector<1x512xf32> to vector<32x512xf32>
    %420 = arith.mulf %418, %419 : vector<32x512xf32>
    %421 = vector.broadcast %417 : vector<32x1xf32> to vector<32x512xf32>
    %422 = arith.addf %420, %421 : vector<32x512xf32>
    %cst_73 = arith.constant dense<0xFF800000> : vector<512xf32>
    %423 = vector.multi_reduction <maximumf>, %422, %cst_73 [0] : vector<32x512xf32> to vector<512xf32>
    %424 = vector.shape_cast %423 : vector<512xf32> to vector<1x512xf32>
    %425 = arith.maximumf %389, %424 : vector<1x512xf32>
    %426 = arith.subf %389, %425 : vector<1x512xf32>
    %427 = math.exp %426 : vector<1x512xf32>
    %428 = vector.broadcast %425 : vector<1x512xf32> to vector<32x512xf32>
    %429 = arith.subf %422, %428 : vector<32x512xf32>
    %430 = math.exp %429 : vector<32x512xf32>
    %431 = arith.mulf %427, %398 : vector<1x512xf32>
    %cst_74 = arith.constant dense<0.000000e+00> : vector<512xf32>
    %432 = vector.multi_reduction <add>, %430, %cst_74 [0] : vector<32x512xf32> to vector<512xf32>
    %433 = vector.shape_cast %432 : vector<512xf32> to vector<1x512xf32>
    %434 = arith.addf %431, %433 : vector<1x512xf32>
    %435 = arith.mulf %427, %404 : vector<1x512xf32>
    %436 = vector.broadcast %409 : vector<32x1xf32> to vector<32x512xf32>
    %437 = arith.mulf %430, %436 : vector<32x512xf32>
    %cst_75 = arith.constant dense<0.000000e+00> : vector<512xf32>
    %438 = vector.multi_reduction <add>, %437, %cst_75 [0] : vector<32x512xf32> to vector<512xf32>
    %439 = vector.shape_cast %438 : vector<512xf32> to vector<1x512xf32>
    %440 = arith.addf %435, %439 : vector<1x512xf32>
    %c12_i32 = arith.constant 12 : i32
    %c32_i32_76 = arith.constant 32 : i32
    %441 = arith.muli %c12_i32, %c32_i32_76 : i32
    %442 = tpu.assume_multiple %441, 32 : i32
    %c0_77 = arith.constant 0 : index
    %443 = arith.index_cast %442 : i32 to index
    %c0_78 = arith.constant 0 : index
    %444 = vector.load %arg4[%c0_77, %443, %c0_78] : memref<1x512x1xf32, #tpu.memory_space<vmem>>, vector<1x32x1xf32>
    %445 = vector.shape_cast %444 : vector<1x32x1xf32> to vector<32x1xf32>
    %446 = vector.broadcast %0 : f32 to vector<32x1xf32>
    %447 = arith.mulf %446, %445 : vector<32x1xf32>
    %448 = vector.broadcast %1 : f32 to vector<32x1xf32>
    %449 = arith.addf %447, %448 : vector<32x1xf32>
    %450 = vector.broadcast %2 : f32 to vector<32x1xf32>
    %451 = arith.mulf %450, %445 : vector<32x1xf32>
    %452 = vector.broadcast %3 : f32 to vector<32x1xf32>
    %453 = arith.addf %451, %452 : vector<32x1xf32>
    %454 = vector.broadcast %449 : vector<32x1xf32> to vector<32x512xf32>
    %455 = vector.broadcast %5 : vector<1x512xf32> to vector<32x512xf32>
    %456 = arith.mulf %454, %455 : vector<32x512xf32>
    %457 = vector.broadcast %453 : vector<32x1xf32> to vector<32x512xf32>
    %458 = arith.addf %456, %457 : vector<32x512xf32>
    %cst_79 = arith.constant dense<0xFF800000> : vector<512xf32>
    %459 = vector.multi_reduction <maximumf>, %458, %cst_79 [0] : vector<32x512xf32> to vector<512xf32>
    %460 = vector.shape_cast %459 : vector<512xf32> to vector<1x512xf32>
    %461 = arith.maximumf %425, %460 : vector<1x512xf32>
    %462 = arith.subf %425, %461 : vector<1x512xf32>
    %463 = math.exp %462 : vector<1x512xf32>
    %464 = vector.broadcast %461 : vector<1x512xf32> to vector<32x512xf32>
    %465 = arith.subf %458, %464 : vector<32x512xf32>
    %466 = math.exp %465 : vector<32x512xf32>
    %467 = arith.mulf %463, %434 : vector<1x512xf32>
    %cst_80 = arith.constant dense<0.000000e+00> : vector<512xf32>
    %468 = vector.multi_reduction <add>, %466, %cst_80 [0] : vector<32x512xf32> to vector<512xf32>
    %469 = vector.shape_cast %468 : vector<512xf32> to vector<1x512xf32>
    %470 = arith.addf %467, %469 : vector<1x512xf32>
    %471 = arith.mulf %463, %440 : vector<1x512xf32>
    %472 = vector.broadcast %445 : vector<32x1xf32> to vector<32x512xf32>
    %473 = arith.mulf %466, %472 : vector<32x512xf32>
    %cst_81 = arith.constant dense<0.000000e+00> : vector<512xf32>
    %474 = vector.multi_reduction <add>, %473, %cst_81 [0] : vector<32x512xf32> to vector<512xf32>
    %475 = vector.shape_cast %474 : vector<512xf32> to vector<1x512xf32>
    %476 = arith.addf %471, %475 : vector<1x512xf32>
    %c13_i32 = arith.constant 13 : i32
    %c32_i32_82 = arith.constant 32 : i32
    %477 = arith.muli %c13_i32, %c32_i32_82 : i32
    %478 = tpu.assume_multiple %477, 32 : i32
    %c0_83 = arith.constant 0 : index
    %479 = arith.index_cast %478 : i32 to index
    %c0_84 = arith.constant 0 : index
    %480 = vector.load %arg4[%c0_83, %479, %c0_84] : memref<1x512x1xf32, #tpu.memory_space<vmem>>, vector<1x32x1xf32>
    %481 = vector.shape_cast %480 : vector<1x32x1xf32> to vector<32x1xf32>
    %482 = vector.broadcast %0 : f32 to vector<32x1xf32>
    %483 = arith.mulf %482, %481 : vector<32x1xf32>
    %484 = vector.broadcast %1 : f32 to vector<32x1xf32>
    %485 = arith.addf %483, %484 : vector<32x1xf32>
    %486 = vector.broadcast %2 : f32 to vector<32x1xf32>
    %487 = arith.mulf %486, %481 : vector<32x1xf32>
    %488 = vector.broadcast %3 : f32 to vector<32x1xf32>
    %489 = arith.addf %487, %488 : vector<32x1xf32>
    %490 = vector.broadcast %485 : vector<32x1xf32> to vector<32x512xf32>
    %491 = vector.broadcast %5 : vector<1x512xf32> to vector<32x512xf32>
    %492 = arith.mulf %490, %491 : vector<32x512xf32>
    %493 = vector.broadcast %489 : vector<32x1xf32> to vector<32x512xf32>
    %494 = arith.addf %492, %493 : vector<32x512xf32>
    %cst_85 = arith.constant dense<0xFF800000> : vector<512xf32>
    %495 = vector.multi_reduction <maximumf>, %494, %cst_85 [0] : vector<32x512xf32> to vector<512xf32>
    %496 = vector.shape_cast %495 : vector<512xf32> to vector<1x512xf32>
    %497 = arith.maximumf %461, %496 : vector<1x512xf32>
    %498 = arith.subf %461, %497 : vector<1x512xf32>
    %499 = math.exp %498 : vector<1x512xf32>
    %500 = vector.broadcast %497 : vector<1x512xf32> to vector<32x512xf32>
    %501 = arith.subf %494, %500 : vector<32x512xf32>
    %502 = math.exp %501 : vector<32x512xf32>
    %503 = arith.mulf %499, %470 : vector<1x512xf32>
    %cst_86 = arith.constant dense<0.000000e+00> : vector<512xf32>
    %504 = vector.multi_reduction <add>, %502, %cst_86 [0] : vector<32x512xf32> to vector<512xf32>
    %505 = vector.shape_cast %504 : vector<512xf32> to vector<1x512xf32>
    %506 = arith.addf %503, %505 : vector<1x512xf32>
    %507 = arith.mulf %499, %476 : vector<1x512xf32>
    %508 = vector.broadcast %481 : vector<32x1xf32> to vector<32x512xf32>
    %509 = arith.mulf %502, %508 : vector<32x512xf32>
    %cst_87 = arith.constant dense<0.000000e+00> : vector<512xf32>
    %510 = vector.multi_reduction <add>, %509, %cst_87 [0] : vector<32x512xf32> to vector<512xf32>
    %511 = vector.shape_cast %510 : vector<512xf32> to vector<1x512xf32>
    %512 = arith.addf %507, %511 : vector<1x512xf32>
    %c14_i32 = arith.constant 14 : i32
    %c32_i32_88 = arith.constant 32 : i32
    %513 = arith.muli %c14_i32, %c32_i32_88 : i32
    %514 = tpu.assume_multiple %513, 32 : i32
    %c0_89 = arith.constant 0 : index
    %515 = arith.index_cast %514 : i32 to index
    %c0_90 = arith.constant 0 : index
    %516 = vector.load %arg4[%c0_89, %515, %c0_90] : memref<1x512x1xf32, #tpu.memory_space<vmem>>, vector<1x32x1xf32>
    %517 = vector.shape_cast %516 : vector<1x32x1xf32> to vector<32x1xf32>
    %518 = vector.broadcast %0 : f32 to vector<32x1xf32>
    %519 = arith.mulf %518, %517 : vector<32x1xf32>
    %520 = vector.broadcast %1 : f32 to vector<32x1xf32>
    %521 = arith.addf %519, %520 : vector<32x1xf32>
    %522 = vector.broadcast %2 : f32 to vector<32x1xf32>
    %523 = arith.mulf %522, %517 : vector<32x1xf32>
    %524 = vector.broadcast %3 : f32 to vector<32x1xf32>
    %525 = arith.addf %523, %524 : vector<32x1xf32>
    %526 = vector.broadcast %521 : vector<32x1xf32> to vector<32x512xf32>
    %527 = vector.broadcast %5 : vector<1x512xf32> to vector<32x512xf32>
    %528 = arith.mulf %526, %527 : vector<32x512xf32>
    %529 = vector.broadcast %525 : vector<32x1xf32> to vector<32x512xf32>
    %530 = arith.addf %528, %529 : vector<32x512xf32>
    %cst_91 = arith.constant dense<0xFF800000> : vector<512xf32>
    %531 = vector.multi_reduction <maximumf>, %530, %cst_91 [0] : vector<32x512xf32> to vector<512xf32>
    %532 = vector.shape_cast %531 : vector<512xf32> to vector<1x512xf32>
    %533 = arith.maximumf %497, %532 : vector<1x512xf32>
    %534 = arith.subf %497, %533 : vector<1x512xf32>
    %535 = math.exp %534 : vector<1x512xf32>
    %536 = vector.broadcast %533 : vector<1x512xf32> to vector<32x512xf32>
    %537 = arith.subf %530, %536 : vector<32x512xf32>
    %538 = math.exp %537 : vector<32x512xf32>
    %539 = arith.mulf %535, %506 : vector<1x512xf32>
    %cst_92 = arith.constant dense<0.000000e+00> : vector<512xf32>
    %540 = vector.multi_reduction <add>, %538, %cst_92 [0] : vector<32x512xf32> to vector<512xf32>
    %541 = vector.shape_cast %540 : vector<512xf32> to vector<1x512xf32>
    %542 = arith.addf %539, %541 : vector<1x512xf32>
    %543 = arith.mulf %535, %512 : vector<1x512xf32>
    %544 = vector.broadcast %517 : vector<32x1xf32> to vector<32x512xf32>
    %545 = arith.mulf %538, %544 : vector<32x512xf32>
    %cst_93 = arith.constant dense<0.000000e+00> : vector<512xf32>
    %546 = vector.multi_reduction <add>, %545, %cst_93 [0] : vector<32x512xf32> to vector<512xf32>
    %547 = vector.shape_cast %546 : vector<512xf32> to vector<1x512xf32>
    %548 = arith.addf %543, %547 : vector<1x512xf32>
    %c15_i32 = arith.constant 15 : i32
    %c32_i32_94 = arith.constant 32 : i32
    %549 = arith.muli %c15_i32, %c32_i32_94 : i32
    %550 = tpu.assume_multiple %549, 32 : i32
    %c0_95 = arith.constant 0 : index
    %551 = arith.index_cast %550 : i32 to index
    %c0_96 = arith.constant 0 : index
    %552 = vector.load %arg4[%c0_95, %551, %c0_96] : memref<1x512x1xf32, #tpu.memory_space<vmem>>, vector<1x32x1xf32>
    %553 = vector.shape_cast %552 : vector<1x32x1xf32> to vector<32x1xf32>
    %554 = vector.broadcast %0 : f32 to vector<32x1xf32>
    %555 = arith.mulf %554, %553 : vector<32x1xf32>
    %556 = vector.broadcast %1 : f32 to vector<32x1xf32>
    %557 = arith.addf %555, %556 : vector<32x1xf32>
    %558 = vector.broadcast %2 : f32 to vector<32x1xf32>
    %559 = arith.mulf %558, %553 : vector<32x1xf32>
    %560 = vector.broadcast %3 : f32 to vector<32x1xf32>
    %561 = arith.addf %559, %560 : vector<32x1xf32>
    %562 = vector.broadcast %557 : vector<32x1xf32> to vector<32x512xf32>
    %563 = vector.broadcast %5 : vector<1x512xf32> to vector<32x512xf32>
    %564 = arith.mulf %562, %563 : vector<32x512xf32>
    %565 = vector.broadcast %561 : vector<32x1xf32> to vector<32x512xf32>
    %566 = arith.addf %564, %565 : vector<32x512xf32>
    %cst_97 = arith.constant dense<0xFF800000> : vector<512xf32>
    %567 = vector.multi_reduction <maximumf>, %566, %cst_97 [0] : vector<32x512xf32> to vector<512xf32>
    %568 = vector.shape_cast %567 : vector<512xf32> to vector<1x512xf32>
    %569 = arith.maximumf %533, %568 : vector<1x512xf32>
    %570 = arith.subf %533, %569 : vector<1x512xf32>
    %571 = math.exp %570 : vector<1x512xf32>
    %572 = vector.broadcast %569 : vector<1x512xf32> to vector<32x512xf32>
    %573 = arith.subf %566, %572 : vector<32x512xf32>
    %574 = math.exp %573 : vector<32x512xf32>
    %575 = arith.mulf %571, %542 : vector<1x512xf32>
    %cst_98 = arith.constant dense<0.000000e+00> : vector<512xf32>
    %576 = vector.multi_reduction <add>, %574, %cst_98 [0] : vector<32x512xf32> to vector<512xf32>
    %577 = vector.shape_cast %576 : vector<512xf32> to vector<1x512xf32>
    %578 = arith.addf %575, %577 : vector<1x512xf32>
    %579 = arith.mulf %571, %548 : vector<1x512xf32>
    %580 = vector.broadcast %553 : vector<32x1xf32> to vector<32x512xf32>
    %581 = arith.mulf %574, %580 : vector<32x512xf32>
    %cst_99 = arith.constant dense<0.000000e+00> : vector<512xf32>
    %582 = vector.multi_reduction <add>, %581, %cst_99 [0] : vector<32x512xf32> to vector<512xf32>
    %583 = vector.shape_cast %582 : vector<512xf32> to vector<1x512xf32>
    %584 = arith.addf %579, %583 : vector<1x512xf32>
    %c16_i32 = arith.constant 16 : i32
    %c4 = arith.constant 4 : index
    %585 = memref.load %arg2[%c4] : memref<6xf32, #tpu.memory_space<smem>>
    %c5 = arith.constant 5 : index
    %586 = memref.load %arg2[%c5] : memref<6xf32, #tpu.memory_space<smem>>
    %587 = arith.divf %584, %578 : vector<1x512xf32>
    %588 = vector.broadcast %585 : f32 to vector<1x512xf32>
    %589 = arith.mulf %588, %587 : vector<1x512xf32>
    %590 = vector.broadcast %586 : f32 to vector<1x512xf32>
    %591 = arith.addf %589, %590 : vector<1x512xf32>
    %c0_100 = arith.constant 0 : index
    %c0_101 = arith.constant 0 : index
    %c0_102 = arith.constant 0 : index
    %592 = vector.load %arg5[%c0_100, %c0_101, %c0_102] : memref<1x1x512xf32, #tpu.memory_space<vmem>>, vector<1x1x512xf32>
    %593 = vector.shape_cast %592 : vector<1x1x512xf32> to vector<1x512xf32>
    %594 = vector.shape_cast %591 : vector<1x512xf32> to vector<1x1x512xf32>
    tpu.vector_store %arg5[%c0_100, %c0_101, %c0_102], %594 {strides = array<i32>} : memref<1x1x512xf32, #tpu.memory_space<vmem>>, vector<1x1x512xf32>,
    return
  }
  func.func @transform_0(%arg0: i32, %arg1: i32) -> i32 {
    %c0_i32 = arith.constant 0 : i32
    %c0_i32_0 = arith.constant 0 : i32
    return %c0_i32 : i32
  }
  func.func @transform_1(%arg0: i32, %arg1: i32) -> (i32, i32, i32) {
    %c0_i32 = arith.constant 0 : i32
    %c0_i32_0 = arith.constant 0 : i32
    return %arg0, %c0_i32, %arg1 : i32, i32, i32
  }
  func.func @transform_2(%arg0: i32, %arg1: i32) -> (i32, i32, i32) {
    %c0_i32 = arith.constant 0 : i32
    %c0_i32_0 = arith.constant 0 : i32
    %c0_i32_1 = arith.constant 0 : i32
    return %arg0, %c0_i32, %c0_i32_0 : i32, i32, i32
  }
  func.func @transform_3(%arg0: i32, %arg1: i32) -> (i32, i32, i32) {
    %c0_i32 = arith.constant 0 : i32
    %c0_i32_0 = arith.constant 0 : i32
    return %arg0, %c0_i32, %arg1 : i32, i32, i32
  }
}

</mosaic_0001>

<llo_original>
// kernel: tpu_custom_call.1
$region0: #{tpu_custom_call.1}
  #allocation0 [shape = 'u32[]', space=smem, size = 0x4, offset = 0x4, fixed_abs, tag = 'smem constant byte address 0x4 - core index']
  #allocation1 [shape = 'u32[72,128]{1,0:T(1,128)}', space=vmem, size = 0x9000, scoped, tag = 'internal scratch']
  %s0 = inlined_call_operand.vmem [shape: f32[6], index: 0, kind: input, shape index: {}]
  %s1 = inlined_call_operand.vmem [shape: f32[2,1,512], index: 1, kind: input, shape index: {}]
  %s2 = inlined_call_operand.vmem [shape: f32[2,512,1], index: 2, kind: input, shape index: {}]
  %s3 = inlined_call_operand.hbm [shape: f32[2,1,512], index: 3, kind: output, shape index: {}]
  %s4 = sld [smem:[#allocation0]]
  $region49: #{tpu_custom_call.1} parent=0
    _
  %s6 = ssub.s32 1, %s4
  %s7 = scalar_select 0, %s6, %s4
  $region1: #{tpu_custom_call.1} parent=0
    #allocation2 [shape = 'u8[512]{0}', space=smem, size = 0x200, scoped, tag = 'input window, operand 0, single buffered']
    #allocation3 [shape = 's32[2]{0}', space=sflag, size = 0x8, scoped, tag = 'scoped memory for tpu_custom_call.1']
    #allocation4 [shape = 's32[2]{0}', space=sflag, size = 0x8, scoped, tag = 'scoped memory for tpu_custom_call.1']
    #allocation5 [shape = 'u8[4096]{0}', space=vmem, size = 0x1000, scoped, tag = 'output window, operand 0']
    %8 = vsyncpa [#allocation4], 0
    %9 = vsyncpa [#allocation3], 0
    %s10 = scalar_lea.sflag [#allocation3], 1
    %11 = vsyncpa %s10, 0
    loop: start=0, step=1, limit=4
    $region2: #{tpu_custom_call.1} parent=1 // loop_pre_header
      _
    $region3: #{tpu_custom_call.1} parent=1 // loop_header
      %s13 = sphi 0, %s17
      %p14 = scmp.ge.s32.totalorder %s13, 4
      %s20 = sphi 0, %s32
      %s21 = sphi 0, %s28
      %s22 = sphi 0, %s20
      %s23 = sphi 0, %s21
      %s24 = sphi 0, %s22
      %s25 = sphi 0, %s23
      %s33 = sphi 0, %s33
      %s35 = sphi 0, %s33
      %s36 = sphi 0, %s35
      %s50 = sphi 0, %s36
      %s58 = sphi 0, %s60
      %s61 = sphi 0, %s58
      %s62 = sphi 0, %s61
      %s78 = sphi 0, %s62
      %s84 = sphi 0, %s86
      %s87 = sphi 0, %s84
      %s88 = sphi 0, %s87
      %s104 = sphi 0, %s88
      %s112 = sphi 0, %s114
      %s115 = sphi 0, %s112
      %s116 = sphi 0, %s115
      %s132 = sphi 0, %s116
    $region4: #{tpu_custom_call.1} parent=1 // loop_header_branch
      %16 = sbr.rel (%p14) target = $region8
    $region5: #{tpu_custom_call.1} parent=1 // loop_body
      %s18 = ssub.s32 %s13, 1
      %s19 = ssub.s32 %s13, 2
      %s26 = sadd.s32 1, %s21
      %p27 = scmp.ge.s32.totalorder %s26, 1
      %s28 = scalar_select %p27, 0, %s26
      %s29 = sadd.s32 1, %s20
      %s30 = scalar_select %p27, %s29, %s20
      %p31 = scmp.ge.s32.totalorder %s30, 2
      %s32 = scalar_select %p31, 0, %s30
      %s34 = sadd.s32 %s33, 1
      %p37 = scmp.eq.s32.totalorder %s13, 1
      %p38 = scmp.ne.s32.totalorder %s33, %s35
      %p39 = scmp.eq.s32.totalorder %s13, 0
      %p40 = por %p38, %p39
      %p41 = scmp.ne.s32.totalorder %s33, %s35
      %p42 = scmp.eq.s32.totalorder %s18, 1
      %p43 = por %p41, %p42
      %p44 = scmp.ne.s32.totalorder %s35, %s36
      %p45 = scmp.eq.s32.totalorder %s18, 0
      %p46 = por %p44, %p45
      %p47 = scmp.ne.s32.totalorder %s35, %s36
      %p48 = scmp.eq.s32.totalorder %s19, 1
      %p49 = por %p47, %p48
      %p51 = scmp.ne.s32.totalorder %s36, %s50
      %p52 = scmp.eq.s32.totalorder %s19, 0
      %p53 = por %p51, %p52
      %s54 = ssub.s32 %s20, %s32
      %s55 = ssub.s32 %s21, %s28
      %s56 = sor.u32 %s54, %s55
      %p57 = scmp.eq.s32.totalorder %s56, 0
      %s59 = sadd.s32 %s58, 1
      %s60 = scalar_select %p57, %s58, %s59
      %p63 = pneg %p57
      %p64 = scmp.eq.s32.totalorder %s13, 1
      %p65 = por %p63, %p64
      %p66 = scmp.ne.s32.totalorder %s58, %s61
      %p67 = scmp.eq.s32.totalorder %s13, 0
      %p68 = por %p66, %p67
      %p69 = scmp.ne.s32.totalorder %s58, %s61
      %p70 = scmp.eq.s32.totalorder %s18, 1
      %p71 = por %p69, %p70
      %p72 = scmp.ne.s32.totalorder %s61, %s62
      %p73 = scmp.eq.s32.totalorder %s18, 0
      %p74 = por %p72, %p73
      %p75 = scmp.ne.s32.totalorder %s61, %s62
      %p76 = scmp.eq.s32.totalorder %s19, 1
      %p77 = por %p75, %p76
      %p79 = scmp.ne.s32.totalorder %s62, %s78
      %p80 = scmp.eq.s32.totalorder %s19, 0
      %p81 = por %p79, %p80
      %s82 = ssub.s32 %s20, %s32
      %p83 = scmp.eq.s32.totalorder %s82, 0
      %s85 = sadd.s32 %s84, 1
      %s86 = scalar_select %p83, %s84, %s85
      %p89 = pneg %p83
      %p90 = scmp.eq.s32.totalorder %s13, 1
      %p91 = por %p89, %p90
      %p92 = scmp.ne.s32.totalorder %s84, %s87
      %p93 = scmp.eq.s32.totalorder %s13, 0
      %p94 = por %p92, %p93
      %p95 = scmp.ne.s32.totalorder %s84, %s87
      %p96 = scmp.eq.s32.totalorder %s18, 1
      %p97 = por %p95, %p96
      %p98 = scmp.ne.s32.totalorder %s87, %s88
      %p99 = scmp.eq.s32.totalorder %s18, 0
      %p100 = por %p98, %p99
      %p101 = scmp.ne.s32.totalorder %s87, %s88
      %p102 = scmp.eq.s32.totalorder %s19, 1
      %p103 = por %p101, %p102
      %p105 = scmp.ne.s32.totalorder %s88, %s104
      %p106 = scmp.eq.s32.totalorder %s19, 0
      %p107 = por %p105, %p106
      %s108 = ssub.s32 %s20, %s32
      %s109 = ssub.s32 %s21, %s28
      %s110 = sor.u32 %s108, %s109
      %p111 = scmp.eq.s32.totalorder %s110, 0
      %s113 = sadd.s32 %s112, 1
      %s114 = scalar_select %p111, %s112, %s113
      %p117 = pneg %p111
      %p118 = scmp.eq.s32.totalorder %s13, 1
      %p119 = por %p117, %p118
      %p120 = scmp.ne.s32.totalorder %s112, %s115
      %p121 = scmp.eq.s32.totalorder %s13, 0
      %p122 = por %p120, %p121
      %p123 = scmp.ne.s32.totalorder %s112, %s115
      %p124 = scmp.eq.s32.totalorder %s18, 1
      %p125 = por %p123, %p124
      %p126 = scmp.ne.s32.totalorder %s115, %s116
      %p127 = scmp.eq.s32.totalorder %s18, 0
      %p128 = por %p126, %p127
      %p129 = scmp.ne.s32.totalorder %s115, %s116
      %p130 = scmp.eq.s32.totalorder %s19, 1
      %p131 = por %p129, %p130
      %p133 = scmp.ne.s32.totalorder %s116, %s132
      %p134 = scmp.eq.s32.totalorder %s19, 0
      %p135 = por %p133, %p134
      %p136 = scmp.le.s32.totalorder 1, %s13
      %p137 = scmp.lt.s32.totalorder %s13, 3
      %p138 = pnand %p136, %p137
      %p139 = pneg %p138
      // Predicated region
      $region9: #{tpu_custom_call.1} parent=5 // pred_check
        _
      $region10: #{tpu_custom_call.1} parent=5 // pred_check_branch
        %141 = sbr.rel (%p138) target = $region12
      $region11: #{tpu_custom_call.1} parent=5 // pred_region
        %s142 = ssub.s32 %s13, 1
        // Predicated region
        $region13: #{tpu_custom_call.1} parent=11 // pred_check
          %p143 = pneg %p46
        $region14: #{tpu_custom_call.1} parent=11 // pred_check_branch
          %145 = sbr.rel (%p143) target = $region16
        $region15: #{tpu_custom_call.1} parent=11 // pred_region
          %147 = vsyncadd [#allocation4], 0
          %s149 = sshll.u32 %s0, 4
          %s150 = int_to_ptr.vmem [resolvable:$true] %s149
          %152 = dma.vmem_to_smem %s150, 16, [#allocation2], [#allocation4]
        $region16: #{tpu_custom_call.1} parent=11 // pred_fallthru
          _
      $region12: #{tpu_custom_call.1} parent=5 // pred_fallthru
        _
      %p153 = scmp.lt.s32.totalorder %s13, 2
      // Predicated region
      $region17: #{tpu_custom_call.1} parent=5 // pred_check
        %p154 = pneg %p153
      $region18: #{tpu_custom_call.1} parent=5 // pred_check_branch
        %156 = sbr.rel (%p154) target = $region20
      $region19: #{tpu_custom_call.1} parent=5 // pred_region
        // Predicated region
        $region21: #{tpu_custom_call.1} parent=19 // pred_check
          %p157 = pneg %p68
        $region22: #{tpu_custom_call.1} parent=19 // pred_check_branch
          %159 = sbr.rel (%p157) target = $region24
        $region23: #{tpu_custom_call.1} parent=19 // pred_region
          %s160 = smul.u32 4, %s21
          %p161 = scmp.lt.s32.totalorder %s20, 1
          %s162 = scalar_select %p161, %s20, 1
          %p163 = scmp.lt.s32.totalorder %s160, 3
          %s164 = scalar_select %p163, %s160, 3
          %s165 = smul.addr %s162, 4
          %s166 = sadd.s32 %s164, %s165
          %s167 = scalar_lea.vmem %s1, %s166
          %s168 = smul.u32 4, %s21
        $region24: #{tpu_custom_call.1} parent=19 // pred_fallthru
          _
        // Predicated region
        $region25: #{tpu_custom_call.1} parent=19 // pred_check
          %p169 = pneg %p94
        $region26: #{tpu_custom_call.1} parent=19 // pred_check_branch
          %171 = sbr.rel (%p169) target = $region28
        $region27: #{tpu_custom_call.1} parent=19 // pred_region
          %p172 = scmp.lt.s32.totalorder %s20, 1
          %s173 = scalar_select %p172, %s20, 1
          %s174 = smul.addr %s173, 64
          %s175 = smul.addr %s174, 8
          %s176 = scalar_lea.vmem %s2, %s175
        $region28: #{tpu_custom_call.1} parent=19 // pred_fallthru
          _
      $region20: #{tpu_custom_call.1} parent=5 // pred_fallthru
        _
      %p177 = scmp.le.s32.totalorder 1, %s13
      %p178 = scmp.lt.s32.totalorder %s13, 3
      %p179 = pnand %p177, %p178
      %p180 = pneg %p179
      // Predicated region
      $region29: #{tpu_custom_call.1} parent=5 // pred_check
        _
      $region30: #{tpu_custom_call.1} parent=5 // pred_check_branch
        %182 = sbr.rel (%p179) target = $region32
      $region31: #{tpu_custom_call.1} parent=5 // pred_region
        %s183 = ssub.s32 %s13, 1
        // Predicated region
        $region33: #{tpu_custom_call.1} parent=31 // pred_check
          %p184 = pneg %p46
        $region34: #{tpu_custom_call.1} parent=31 // pred_check_branch
          %186 = sbr.rel (%p184) target = $region36
        $region35: #{tpu_custom_call.1} parent=31 // pred_region
          %188 = dma.done [#allocation4], 16
        $region36: #{tpu_custom_call.1} parent=31 // pred_fallthru
          _
        %189 = sfence
        %p190 = pneg %p46
        %p191 = pneg %p43
        %s192 = smul.u32 4, %s23
        %p193 = scmp.lt.s32.totalorder %s22, 1
        %s194 = scalar_select %p193, %s22, 1
        %p195 = scmp.lt.s32.totalorder %s192, 3
        %s196 = scalar_select %p195, %s192, 3
        %s197 = smul.addr %s194, 4
        %s198 = sadd.s32 %s196, %s197
        %s199 = scalar_lea.vmem %s1, %s198
        %p200 = pneg %p74
        %p201 = pneg %p71
        %p202 = scmp.lt.s32.totalorder %s22, 1
        %s203 = scalar_select %p202, %s22, 1
        %s204 = smul.addr %s203, 64
        %s205 = smul.addr %s204, 8
        %s206 = scalar_lea.vmem %s2, %s205
        %p207 = pneg %p100
        %p208 = pneg %p97
        %p209 = pneg %p128
        %p210 = pneg %p125
        %s211 = sand.u32 %s115, 1
        %s212 = scalar_lea.sflag [#allocation3], %s211
        %s213 = sand.u32 %s115, 1
        %s214 = smul.addr %s213, 4
        %s215 = scalar_lea.vmem [#allocation5], %s214
        %s216 = smul.u32 4, %s23
        %p217 = scmp.lt.s32.totalorder %s22, 1
        %s218 = scalar_select %p217, %s22, 1
        %p219 = scmp.lt.s32.totalorder %s216, 3
        %s220 = scalar_select %p219, %s216, 3
        %s221 = smul.addr %s218, 4
        %s222 = sadd.s32 %s220, %s221
        %s223 = scalar_lea.vmem %s1, %s222
        %s224 = smul.u32 4, %s23
        %p225 = scmp.lt.s32.totalorder %s22, 1
        %s226 = scalar_select %p225, %s22, 1
        %s227 = smul.addr %s226, 64
        %s228 = smul.addr %s227, 8
        %s229 = scalar_lea.vmem %s2, %s228
        %s230 = smul.u32 4, %s23
        %s231 = sld [smem:[#allocation2]]
        %s232 = sld [smem:[#allocation2 + $0x1]]
        %s233 = sld [smem:[#allocation2 + $0x2]]
        %s234 = sld [smem:[#allocation2 + $0x3]]
        %v235 = vld [vmem:[%s223] sm:$0xf]
        %v236 = vld [vmem:[%s229] sm:$0xff]
        %v237 = vld [vmem:[%s229 + $0x8] sm:$0xff]
        %v238 = vld [vmem:[%s229 + $0x10] sm:$0xff]
        %v239 = vld [vmem:[%s229 + $0x18] sm:$0xff]
        %v240 = vstv %s231
        %v241 = vmul.f32 %v240, %v236
        %v242 = vmul.f32 %v240, %v237
        %v243 = vmul.f32 %v240, %v238
        %v244 = vmul.f32 %v240, %v239
        %v245 = vstv %s232
        %v246 = vadd.f32 %v241, %v245
        %v247 = vadd.f32 %v242, %v245
        %v248 = vadd.f32 %v243, %v245
        %v249 = vadd.f32 %v244, %v245
        %v250 = vstv %s233
        %v251 = vmul.f32 %v250, %v236
        %v252 = vmul.f32 %v250, %v237
        %v253 = vmul.f32 %v250, %v238
        %v254 = vmul.f32 %v250, %v239
        %v255 = vstv %s234
        %v256 = vadd.f32 %v251, %v255
        %v257 = vadd.f32 %v252, %v255
        %v258 = vadd.f32 %v253, %v255
        %v259 = vadd.f32 %v254, %v255
        %261 = vset.pattern.permute.xlu0 0
        %262 = vperm.xlu0 %261, %v246
        %v263 = vpop.permute.xlu0 %262
        %266 = vset.pattern.permute.xlu0 0
        %267 = vperm.xlu0 %266, %v247
        %v268 = vpop.permute.xlu0 %267
        %271 = vset.pattern.permute.xlu0 0
        %272 = vperm.xlu0 %271, %v248
        %v273 = vpop.permute.xlu0 %272
        %276 = vset.pattern.permute.xlu0 0
        %277 = vperm.xlu0 %276, %v249
        %v278 = vpop.permute.xlu0 %277
        %v281 = vperm.slane %v235, 0
        %v282 = vperm.slane %v235, 1
        %v283 = vperm.slane %v235, 2
        %v284 = vperm.slane %v235, 3
        %v289 = vmul.f32 %v263, %v281
        %v290 = vmul.f32 %v263, %v282
        %v291 = vmul.f32 %v263, %v283
        %v292 = vmul.f32 %v263, %v284
        %v293 = vmul.f32 %v268, %v281
        %v294 = vmul.f32 %v268, %v282
        %v295 = vmul.f32 %v268, %v283
        %v296 = vmul.f32 %v268, %v284
        %v297 = vmul.f32 %v273, %v281
        %v298 = vmul.f32 %v273, %v282
        %v299 = vmul.f32 %v273, %v283
        %v300 = vmul.f32 %v273, %v284
        %v301 = vmul.f32 %v278, %v281
        %v302 = vmul.f32 %v278, %v282
        %v303 = vmul.f32 %v278, %v283
        %v304 = vmul.f32 %v278, %v284
        %306 = vset.pattern.permute.xlu0 0
        %307 = vperm.xlu0 %306, %v256
        %v308 = vpop.permute.xlu0 %307
        %311 = vset.pattern.permute.xlu0 0
        %312 = vperm.xlu0 %311, %v257
        %v313 = vpop.permute.xlu0 %312
        %316 = vset.pattern.permute.xlu0 0
        %317 = vperm.xlu0 %316, %v258
        %v318 = vpop.permute.xlu0 %317
        %321 = vset.pattern.permute.xlu0 0
        %322 = vperm.xlu0 %321, %v259
        %v323 = vpop.permute.xlu0 %322
        %v325 = vadd.f32 %v289, %v308
        %v326 = vadd.f32 %v290, %v308
        %v327 = vadd.f32 %v291, %v308
        %v328 = vadd.f32 %v292, %v308
        %v329 = vadd.f32 %v293, %v313
        %v330 = vadd.f32 %v294, %v313
        %v331 = vadd.f32 %v295, %v313
        %v332 = vadd.f32 %v296, %v313
        %v333 = vadd.f32 %v297, %v318
        %v334 = vadd.f32 %v298, %v318
        %v335 = vadd.f32 %v299, %v318
        %v336 = vadd.f32 %v300, %v318
        %v337 = vadd.f32 %v301, %v323
        %v338 = vadd.f32 %v302, %v323
        %v339 = vadd.f32 %v303, %v323
        %v340 = vadd.f32 %v304, %v323
        %v341 = vmax.f32 %v325, %v329
        %v342 = vmax.f32 %v341, %v333
        %v343 = vmax.f32 %v342, %v337
        %v344 = vrot.slane %v343, 4
        %v345 = vmax.f32 %v343, %v344
        %v346 = vrot.slane %v345, 2
        %v347 = vmax.f32 %v345, %v346
        %v348 = vrot.slane %v347, 1
        %v349 = vmax.f32 %v347, %v348
        %v350 = vmax.f32 %v326, %v330
        %v351 = vmax.f32 %v350, %v334
        %v352 = vmax.f32 %v351, %v338
        %v353 = vrot.slane %v352, 4
        %v354 = vmax.f32 %v352, %v353
        %v355 = vrot.slane %v354, 2
        %v356 = vmax.f32 %v354, %v355
        %v357 = vrot.slane %v356, 1
        %v358 = vmax.f32 %v356, %v357
        %v359 = vmax.f32 %v327, %v331
        %v360 = vmax.f32 %v359, %v335
        %v361 = vmax.f32 %v360, %v339
        %v362 = vrot.slane %v361, 4
        %v363 = vmax.f32 %v361, %v362
        %v364 = vrot.slane %v363, 2
        %v365 = vmax.f32 %v363, %v364
        %v366 = vrot.slane %v365, 1
        %v367 = vmax.f32 %v365, %v366
        %v368 = vmax.f32 %v328, %v332
        %v369 = vmax.f32 %v368, %v336
        %v370 = vmax.f32 %v369, %v340
        %v371 = vrot.slane %v370, 4
        %v372 = vmax.f32 %v370, %v371
        %v373 = vrot.slane %v372, 2
        %v374 = vmax.f32 %v372, %v373
        %v375 = vrot.slane %v374, 1
        %v376 = vmax.f32 %v374, %v375
        %v377 = vsub.f32 -inf, %v349
        %v378 = vsub.f32 -inf, %v358
        %v379 = vsub.f32 -inf, %v367
        %v380 = vsub.f32 -inf, %v376
        %v381 = vmul.f32 %v377, 1.442695
        %v382 = vpow.pop %v381
        %v383 = vmul.f32 %v378, 1.442695
        %v384 = vpow.pop %v383
        %v385 = vmul.f32 %v379, 1.442695
        %v386 = vpow.pop %v385
        %v387 = vmul.f32 %v380, 1.442695
        %v388 = vpow.pop %v387
        %v389 = vsub.f32 %v325, %v349
        %v390 = vsub.f32 %v326, %v358
        %v391 = vsub.f32 %v327, %v367
        %v392 = vsub.f32 %v328, %v376
        %v393 = vsub.f32 %v329, %v349
        %v394 = vsub.f32 %v330, %v358
        %v395 = vsub.f32 %v331, %v367
        %v396 = vsub.f32 %v332, %v376
        %v397 = vsub.f32 %v333, %v349
        %v398 = vsub.f32 %v334, %v358
        %v399 = vsub.f32 %v335, %v367
        %v400 = vsub.f32 %v336, %v376
        %v401 = vsub.f32 %v337, %v349
        %v402 = vsub.f32 %v338, %v358
        %v403 = vsub.f32 %v339, %v367
        %v404 = vsub.f32 %v340, %v376
        %v405 = vmul.f32 %v389, 1.442695
        %v406 = vpow.pop %v405
        %v407 = vmul.f32 %v390, 1.442695
        %v408 = vpow.pop %v407
        %v409 = vmul.f32 %v391, 1.442695
        %v410 = vpow.pop %v409
        %v411 = vmul.f32 %v392, 1.442695
        %v412 = vpow.pop %v411
        %v413 = vmul.f32 %v393, 1.442695
        %v414 = vpow.pop %v413
        %v415 = vmul.f32 %v394, 1.442695
        %v416 = vpow.pop %v415
        %v417 = vmul.f32 %v395, 1.442695
        %v418 = vpow.pop %v417
        %v419 = vmul.f32 %v396, 1.442695
        %v420 = vpow.pop %v419
        %v421 = vmul.f32 %v397, 1.442695
        %v422 = vpow.pop %v421
        %v423 = vmul.f32 %v398, 1.442695
        %v424 = vpow.pop %v423
        %v425 = vmul.f32 %v399, 1.442695
        %v426 = vpow.pop %v425
        %v427 = vmul.f32 %v400, 1.442695
        %v428 = vpow.pop %v427
        %v429 = vmul.f32 %v401, 1.442695
        %v430 = vpow.pop %v429
        %v431 = vmul.f32 %v402, 1.442695
        %v432 = vpow.pop %v431
        %v433 = vmul.f32 %v403, 1.442695
        %v434 = vpow.pop %v433
        %v435 = vmul.f32 %v404, 1.442695
        %v436 = vpow.pop %v435
        %v437 = vmul.f32 %v382, 0.0
        %v438 = vmul.f32 %v384, 0.0
        %v439 = vmul.f32 %v386, 0.0
        %v440 = vmul.f32 %v388, 0.0
        %v441 = vadd.f32 %v406, %v414
        %v442 = vadd.f32 %v441, %v422
        %v443 = vadd.f32 %v442, %v430
        %v444 = vrot.slane %v443, 4
        %v445 = vadd.f32 %v443, %v444
        %v446 = vrot.slane %v445, 2
        %v447 = vadd.f32 %v445, %v446
        %v448 = vrot.slane %v447, 1
        %v449 = vadd.f32 %v447, %v448
        %v450 = vadd.f32 %v408, %v416
        %v451 = vadd.f32 %v450, %v424
        %v452 = vadd.f32 %v451, %v432
        %v453 = vrot.slane %v452, 4
        %v454 = vadd.f32 %v452, %v453
        %v455 = vrot.slane %v454, 2
        %v456 = vadd.f32 %v454, %v455
        %v457 = vrot.slane %v456, 1
        %v458 = vadd.f32 %v456, %v457
        %v459 = vadd.f32 %v410, %v418
        %v460 = vadd.f32 %v459, %v426
        %v461 = vadd.f32 %v460, %v434
        %v462 = vrot.slane %v461, 4
        %v463 = vadd.f32 %v461, %v462
        %v464 = vrot.slane %v463, 2
        %v465 = vadd.f32 %v463, %v464
        %v466 = vrot.slane %v465, 1
        %v467 = vadd.f32 %v465, %v466
        %v468 = vadd.f32 %v412, %v420
        %v469 = vadd.f32 %v468, %v428
        %v470 = vadd.f32 %v469, %v436
        %v471 = vrot.slane %v470, 4
        %v472 = vadd.f32 %v470, %v471
        %v473 = vrot.slane %v472, 2
        %v474 = vadd.f32 %v472, %v473
        %v475 = vrot.slane %v474, 1
        %v476 = vadd.f32 %v474, %v475
        %v477 = vadd.f32 %v437, %v449
        %v478 = vadd.f32 %v438, %v458
        %v479 = vadd.f32 %v439, %v467
        %v480 = vadd.f32 %v440, %v476
        %482 = vset.pattern.permute.xlu0 0
        %483 = vperm.xlu0 %482, %v236
        %v484 = vpop.permute.xlu0 %483
        %487 = vset.pattern.permute.xlu0 0
        %488 = vperm.xlu0 %487, %v237
        %v489 = vpop.permute.xlu0 %488
        %492 = vset.pattern.permute.xlu0 0
        %493 = vperm.xlu0 %492, %v238
        %v494 = vpop.permute.xlu0 %493
        %497 = vset.pattern.permute.xlu0 0
        %498 = vperm.xlu0 %497, %v239
        %v499 = vpop.permute.xlu0 %498
        %v501 = vmul.f32 %v406, %v484
        %v502 = vmul.f32 %v408, %v484
        %v503 = vmul.f32 %v410, %v484
        %v504 = vmul.f32 %v412, %v484
        %v505 = vmul.f32 %v414, %v489
        %v506 = vmul.f32 %v416, %v489
        %v507 = vmul.f32 %v418, %v489
        %v508 = vmul.f32 %v420, %v489
        %v509 = vmul.f32 %v422, %v494
        %v510 = vmul.f32 %v424, %v494
        %v511 = vmul.f32 %v426, %v494
        %v512 = vmul.f32 %v428, %v494
        %v513 = vmul.f32 %v430, %v499
        %v514 = vmul.f32 %v432, %v499
        %v515 = vmul.f32 %v434, %v499
        %v516 = vmul.f32 %v436, %v499
        %v517 = vadd.f32 %v501, %v505
        %v518 = vadd.f32 %v517, %v509
        %v519 = vadd.f32 %v518, %v513
        %v520 = vrot.slane %v519, 4
        %v521 = vadd.f32 %v519, %v520
        %v522 = vrot.slane %v521, 2
        %v523 = vadd.f32 %v521, %v522
        %v524 = vrot.slane %v523, 1
        %v525 = vadd.f32 %v523, %v524
        %v526 = vadd.f32 %v502, %v506
        %v527 = vadd.f32 %v526, %v510
        %v528 = vadd.f32 %v527, %v514
        %v529 = vrot.slane %v528, 4
        %v530 = vadd.f32 %v528, %v529
        %v531 = vrot.slane %v530, 2
        %v532 = vadd.f32 %v530, %v531
        %v533 = vrot.slane %v532, 1
        %v534 = vadd.f32 %v532, %v533
        %v535 = vadd.f32 %v503, %v507
        %v536 = vadd.f32 %v535, %v511
        %v537 = vadd.f32 %v536, %v515
        %v538 = vrot.slane %v537, 4
        %v539 = vadd.f32 %v537, %v538
        %v540 = vrot.slane %v539, 2
        %v541 = vadd.f32 %v539, %v540
        %v542 = vrot.slane %v541, 1
        %v543 = vadd.f32 %v541, %v542
        %v544 = vadd.f32 %v504, %v508
        %v545 = vadd.f32 %v544, %v512
        %v546 = vadd.f32 %v545, %v516
        %v547 = vrot.slane %v546, 4
        %v548 = vadd.f32 %v546, %v547
        %v549 = vrot.slane %v548, 2
        %v550 = vadd.f32 %v548, %v549
        %v551 = vrot.slane %v550, 1
        %v552 = vadd.f32 %v550, %v551
        %v553 = vadd.f32 %v437, %v525
        %v554 = vadd.f32 %v438, %v534
        %v555 = vadd.f32 %v439, %v543
        %v556 = vadd.f32 %v440, %v552
        %s557 = scalar_lea.vmem %s229, 32
        %v558 = vld [vmem:[%s557] sm:$0xff]
        %v559 = vld [vmem:[%s557 + $0x8] sm:$0xff]
        %v560 = vld [vmem:[%s557 + $0x10] sm:$0xff]
        %v561 = vld [vmem:[%s557 + $0x18] sm:$0xff]
        %v562 = vmul.f32 %v240, %v558
        %v563 = vmul.f32 %v240, %v559
        %v564 = vmul.f32 %v240, %v560
        %v565 = vmul.f32 %v240, %v561
        %v566 = vadd.f32 %v562, %v245
        %v567 = vadd.f32 %v563, %v245
        %v568 = vadd.f32 %v564, %v245
        %v569 = vadd.f32 %v565, %v245
        %v570 = vmul.f32 %v250, %v558
        %v571 = vmul.f32 %v250, %v559
        %v572 = vmul.f32 %v250, %v560
        %v573 = vmul.f32 %v250, %v561
        %v574 = vadd.f32 %v570, %v255
        %v575 = vadd.f32 %v571, %v255
        %v576 = vadd.f32 %v572, %v255
        %v577 = vadd.f32 %v573, %v255
        %579 = vset.pattern.permute.xlu0 0
        %580 = vperm.xlu0 %579, %v566
        %v581 = vpop.permute.xlu0 %580
        %584 = vset.pattern.permute.xlu0 0
        %585 = vperm.xlu0 %584, %v567
        %v586 = vpop.permute.xlu0 %585
        %589 = vset.pattern.permute.xlu0 0
        %590 = vperm.xlu0 %589, %v568
        %v591 = vpop.permute.xlu0 %590
        %594 = vset.pattern.permute.xlu0 0
        %595 = vperm.xlu0 %594, %v569
        %v596 = vpop.permute.xlu0 %595
        %v598 = vmul.f32 %v581, %v281
        %v599 = vmul.f32 %v581, %v282
        %v600 = vmul.f32 %v581, %v283
        %v601 = vmul.f32 %v581, %v284
        %v602 = vmul.f32 %v586, %v281
        %v603 = vmul.f32 %v586, %v282
        %v604 = vmul.f32 %v586, %v283
        %v605 = vmul.f32 %v586, %v284
        %v606 = vmul.f32 %v591, %v281
        %v607 = vmul.f32 %v591, %v282
        %v608 = vmul.f32 %v591, %v283
        %v609 = vmul.f32 %v591, %v284
        %v610 = vmul.f32 %v596, %v281
        %v611 = vmul.f32 %v596, %v282
        %v612 = vmul.f32 %v596, %v283
        %v613 = vmul.f32 %v596, %v284
        %615 = vset.pattern.permute.xlu0 0
        %616 = vperm.xlu0 %615, %v574
        %v617 = vpop.permute.xlu0 %616
        %620 = vset.pattern.permute.xlu0 0
        %621 = vperm.xlu0 %620, %v575
        %v622 = vpop.permute.xlu0 %621
        %625 = vset.pattern.permute.xlu0 0
        %626 = vperm.xlu0 %625, %v576
        %v627 = vpop.permute.xlu0 %626
        %630 = vset.pattern.permute.xlu0 0
        %631 = vperm.xlu0 %630, %v577
        %v632 = vpop.permute.xlu0 %631
        %v634 = vadd.f32 %v598, %v617
        %v635 = vadd.f32 %v599, %v617
        %v636 = vadd.f32 %v600, %v617
        %v637 = vadd.f32 %v601, %v617
        %v638 = vadd.f32 %v602, %v622
        %v639 = vadd.f32 %v603, %v622
        %v640 = vadd.f32 %v604, %v622
        %v641 = vadd.f32 %v605, %v622
        %v642 = vadd.f32 %v606, %v627
        %v643 = vadd.f32 %v607, %v627
        %v644 = vadd.f32 %v608, %v627
        %v645 = vadd.f32 %v609, %v627
        %v646 = vadd.f32 %v610, %v632
        %v647 = vadd.f32 %v611, %v632
        %v648 = vadd.f32 %v612, %v632
        %v649 = vadd.f32 %v613, %v632
        %v650 = vmax.f32 %v634, %v638
        %v651 = vmax.f32 %v650, %v642
        %v652 = vmax.f32 %v651, %v646
        %v653 = vrot.slane %v652, 4
        %v654 = vmax.f32 %v652, %v653
        %v655 = vrot.slane %v654, 2
        %v656 = vmax.f32 %v654, %v655
        %v657 = vrot.slane %v656, 1
        %v658 = vmax.f32 %v656, %v657
        %v659 = vmax.f32 %v635, %v639
        %v660 = vmax.f32 %v659, %v643
        %v661 = vmax.f32 %v660, %v647
        %v662 = vrot.slane %v661, 4
        %v663 = vmax.f32 %v661, %v662
        %v664 = vrot.slane %v663, 2
        %v665 = vmax.f32 %v663, %v664
        %v666 = vrot.slane %v665, 1
        %v667 = vmax.f32 %v665, %v666
        %v668 = vmax.f32 %v636, %v640
        %v669 = vmax.f32 %v668, %v644
        %v670 = vmax.f32 %v669, %v648
        %v671 = vrot.slane %v670, 4
        %v672 = vmax.f32 %v670, %v671
        %v673 = vrot.slane %v672, 2
        %v674 = vmax.f32 %v672, %v673
        %v675 = vrot.slane %v674, 1
        %v676 = vmax.f32 %v674, %v675
        %v677 = vmax.f32 %v637, %v641
        %v678 = vmax.f32 %v677, %v645
        %v679 = vmax.f32 %v678, %v649
        %v680 = vrot.slane %v679, 4
        %v681 = vmax.f32 %v679, %v680
        %v682 = vrot.slane %v681, 2
        %v683 = vmax.f32 %v681, %v682
        %v684 = vrot.slane %v683, 1
        %v685 = vmax.f32 %v683, %v684
        %v686 = vmax.f32 %v349, %v658
        %v687 = vmax.f32 %v358, %v667
        %v688 = vmax.f32 %v367, %v676
        %v689 = vmax.f32 %v376, %v685
        %v690 = vsub.f32 %v349, %v686
        %v691 = vsub.f32 %v358, %v687
        %v692 = vsub.f32 %v367, %v688
        %v693 = vsub.f32 %v376, %v689
        %v694 = vmul.f32 %v690, 1.442695
        %v695 = vpow.pop %v694
        %v696 = vmul.f32 %v691, 1.442695
        %v697 = vpow.pop %v696
        %v698 = vmul.f32 %v692, 1.442695
        %v699 = vpow.pop %v698
        %v700 = vmul.f32 %v693, 1.442695
        %v701 = vpow.pop %v700
        %v702 = vsub.f32 %v634, %v686
        %v703 = vsub.f32 %v635, %v687
        %v704 = vsub.f32 %v636, %v688
        %v705 = vsub.f32 %v637, %v689
        %v706 = vsub.f32 %v638, %v686
        %v707 = vsub.f32 %v639, %v687
        %v708 = vsub.f32 %v640, %v688
        %v709 = vsub.f32 %v641, %v689
        %v710 = vsub.f32 %v642, %v686
        %v711 = vsub.f32 %v643, %v687
        %v712 = vsub.f32 %v644, %v688
        %v713 = vsub.f32 %v645, %v689
        %v714 = vsub.f32 %v646, %v686
        %v715 = vsub.f32 %v647, %v687
        %v716 = vsub.f32 %v648, %v688
        %v717 = vsub.f32 %v649, %v689
        %v718 = vmul.f32 %v702, 1.442695
        %v719 = vpow.pop %v718
        %v720 = vmul.f32 %v703, 1.442695
        %v721 = vpow.pop %v720
        %v722 = vmul.f32 %v704, 1.442695
        %v723 = vpow.pop %v722
        %v724 = vmul.f32 %v705, 1.442695
        %v725 = vpow.pop %v724
        %v726 = vmul.f32 %v706, 1.442695
        %v727 = vpow.pop %v726
        %v728 = vmul.f32 %v707, 1.442695
        %v729 = vpow.pop %v728
        %v730 = vmul.f32 %v708, 1.442695
        %v731 = vpow.pop %v730
        %v732 = vmul.f32 %v709, 1.442695
        %v733 = vpow.pop %v732
        %v734 = vmul.f32 %v710, 1.442695
        %v735 = vpow.pop %v734
        %v736 = vmul.f32 %v711, 1.442695
        %v737 = vpow.pop %v736
        %v738 = vmul.f32 %v712, 1.442695
        %v739 = vpow.pop %v738
        %v740 = vmul.f32 %v713, 1.442695
        %v741 = vpow.pop %v740
        %v742 = vmul.f32 %v714, 1.442695
        %v743 = vpow.pop %v742
        %v744 = vmul.f32 %v715, 1.442695
        %v745 = vpow.pop %v744
        %v746 = vmul.f32 %v716, 1.442695
        %v747 = vpow.pop %v746
        %v748 = vmul.f32 %v717, 1.442695
        %v749 = vpow.pop %v748
        %v750 = vmul.f32 %v695, %v477
        %v751 = vmul.f32 %v697, %v478
        %v752 = vmul.f32 %v699, %v479
        %v753 = vmul.f32 %v701, %v480
        %v754 = vadd.f32 %v719, %v727
        %v755 = vadd.f32 %v754, %v735
        %v756 = vadd.f32 %v755, %v743
        %v757 = vrot.slane %v756, 4
        %v758 = vadd.f32 %v756, %v757
        %v759 = vrot.slane %v758, 2
        %v760 = vadd.f32 %v758, %v759
        %v761 = vrot.slane %v760, 1
        %v762 = vadd.f32 %v760, %v761
        %v763 = vadd.f32 %v721, %v729
        %v764 = vadd.f32 %v763, %v737
        %v765 = vadd.f32 %v764, %v745
        %v766 = vrot.slane %v765, 4
        %v767 = vadd.f32 %v765, %v766
        %v768 = vrot.slane %v767, 2
        %v769 = vadd.f32 %v767, %v768
        %v770 = vrot.slane %v769, 1
        %v771 = vadd.f32 %v769, %v770
        %v772 = vadd.f32 %v723, %v731
        %v773 = vadd.f32 %v772, %v739
        %v774 = vadd.f32 %v773, %v747
        %v775 = vrot.slane %v774, 4
        %v776 = vadd.f32 %v774, %v775
        %v777 = vrot.slane %v776, 2
        %v778 = vadd.f32 %v776, %v777
        %v779 = vrot.slane %v778, 1
        %v780 = vadd.f32 %v778, %v779
        %v781 = vadd.f32 %v725, %v733
        %v782 = vadd.f32 %v781, %v741
        %v783 = vadd.f32 %v782, %v749
        %v784 = vrot.slane %v783, 4
        %v785 = vadd.f32 %v783, %v784
        %v786 = vrot.slane %v785, 2
        %v787 = vadd.f32 %v785, %v786
        %v788 = vrot.slane %v787, 1
        %v789 = vadd.f32 %v787, %v788
        %v790 = vadd.f32 %v750, %v762
        %v791 = vadd.f32 %v751, %v771
        %v792 = vadd.f32 %v752, %v780
        %v793 = vadd.f32 %v753, %v789
        %v794 = vmul.f32 %v695, %v553
        %v795 = vmul.f32 %v697, %v554
        %v796 = vmul.f32 %v699, %v555
        %v797 = vmul.f32 %v701, %v556
        %799 = vset.pattern.permute.xlu0 0
        %800 = vperm.xlu0 %799, %v558
        %v801 = vpop.permute.xlu0 %800
        %804 = vset.pattern.permute.xlu0 0
        %805 = vperm.xlu0 %804, %v559
        %v806 = vpop.permute.xlu0 %805
        %809 = vset.pattern.permute.xlu0 0
        %810 = vperm.xlu0 %809, %v560
        %v811 = vpop.permute.xlu0 %810
        %814 = vset.pattern.permute.xlu0 0
        %815 = vperm.xlu0 %814, %v561
        %v816 = vpop.permute.xlu0 %815
        %v818 = vmul.f32 %v719, %v801
        %v819 = vmul.f32 %v721, %v801
        %v820 = vmul.f32 %v723, %v801
        %v821 = vmul.f32 %v725, %v801
        %v822 = vmul.f32 %v727, %v806
        %v823 = vmul.f32 %v729, %v806
        %v824 = vmul.f32 %v731, %v806
        %v825 = vmul.f32 %v733, %v806
        %v826 = vmul.f32 %v735, %v811
        %v827 = vmul.f32 %v737, %v811
        %v828 = vmul.f32 %v739, %v811
        %v829 = vmul.f32 %v741, %v811
        %v830 = vmul.f32 %v743, %v816
        %v831 = vmul.f32 %v745, %v816
        %v832 = vmul.f32 %v747, %v816
        %v833 = vmul.f32 %v749, %v816
        %v834 = vadd.f32 %v818, %v822
        %v835 = vadd.f32 %v834, %v826
        %v836 = vadd.f32 %v835, %v830
        %v837 = vrot.slane %v836, 4
        %v838 = vadd.f32 %v836, %v837
        %v839 = vrot.slane %v838, 2
        %v840 = vadd.f32 %v838, %v839
        %v841 = vrot.slane %v840, 1
        %v842 = vadd.f32 %v840, %v841
        %v843 = vadd.f32 %v819, %v823
        %v844 = vadd.f32 %v843, %v827
        %v845 = vadd.f32 %v844, %v831
        %v846 = vrot.slane %v845, 4
        %v847 = vadd.f32 %v845, %v846
        %v848 = vrot.slane %v847, 2
        %v849 = vadd.f32 %v847, %v848
        %v850 = vrot.slane %v849, 1
        %v851 = vadd.f32 %v849, %v850
        %v852 = vadd.f32 %v820, %v824
        %v853 = vadd.f32 %v852, %v828
        %v854 = vadd.f32 %v853, %v832
        %v855 = vrot.slane %v854, 4
        %v856 = vadd.f32 %v854, %v855
        %v857 = vrot.slane %v856, 2
        %v858 = vadd.f32 %v856, %v857
        %v859 = vrot.slane %v858, 1
        %v860 = vadd.f32 %v858, %v859
        %v861 = vadd.f32 %v821, %v825
        %v862 = vadd.f32 %v861, %v829
        %v863 = vadd.f32 %v862, %v833
        %v864 = vrot.slane %v863, 4
        %v865 = vadd.f32 %v863, %v864
        %v866 = vrot.slane %v865, 2
        %v867 = vadd.f32 %v865, %v866
        %v868 = vrot.slane %v867, 1
        %v869 = vadd.f32 %v867, %v868
        %v870 = vadd.f32 %v794, %v842
        %v871 = vadd.f32 %v795, %v851
        %v872 = vadd.f32 %v796, %v860
        %v873 = vadd.f32 %v797, %v869
        %s874 = scalar_lea.vmem %s229, 64
        %v875 = vld [vmem:[%s874] sm:$0xff]
        %v876 = vld [vmem:[%s874 + $0x8] sm:$0xff]
        %v877 = vld [vmem:[%s874 + $0x10] sm:$0xff]
        %v878 = vld [vmem:[%s874 + $0x18] sm:$0xff]
        %v879 = vmul.f32 %v240, %v875
        %v880 = vmul.f32 %v240, %v876
        %v881 = vmul.f32 %v240, %v877
        %v882 = vmul.f32 %v240, %v878
        %v883 = vadd.f32 %v879, %v245
        %v884 = vadd.f32 %v880, %v245
        %v885 = vadd.f32 %v881, %v245
        %v886 = vadd.f32 %v882, %v245
        %v887 = vmul.f32 %v250, %v875
        %v888 = vmul.f32 %v250, %v876
        %v889 = vmul.f32 %v250, %v877
        %v890 = vmul.f32 %v250, %v878
        %v891 = vadd.f32 %v887, %v255
        %v892 = vadd.f32 %v888, %v255
        %v893 = vadd.f32 %v889, %v255
        %v894 = vadd.f32 %v890, %v255
        %896 = vset.pattern.permute.xlu0 0
        %897 = vperm.xlu0 %896, %v883
        %v898 = vpop.permute.xlu0 %897
        %901 = vset.pattern.permute.xlu0 0
        %902 = vperm.xlu0 %901, %v884
        %v903 = vpop.permute.xlu0 %902
        %906 = vset.pattern.permute.xlu0 0
        %907 = vperm.xlu0 %906, %v885
        %v908 = vpop.permute.xlu0 %907
        %911 = vset.pattern.permute.xlu0 0
        %912 = vperm.xlu0 %911, %v886
        %v913 = vpop.permute.xlu0 %912
        %v915 = vmul.f32 %v898, %v281
        %v916 = vmul.f32 %v898, %v282
        %v917 = vmul.f32 %v898, %v283
        %v918 = vmul.f32 %v898, %v284
        %v919 = vmul.f32 %v903, %v281
        %v920 = vmul.f32 %v903, %v282
        %v921 = vmul.f32 %v903, %v283
        %v922 = vmul.f32 %v903, %v284
        %v923 = vmul.f32 %v908, %v281
        %v924 = vmul.f32 %v908, %v282
        %v925 = vmul.f32 %v908, %v283
        %v926 = vmul.f32 %v908, %v284
        %v927 = vmul.f32 %v913, %v281
        %v928 = vmul.f32 %v913, %v282
        %v929 = vmul.f32 %v913, %v283
        %v930 = vmul.f32 %v913, %v284
        %932 = vset.pattern.permute.xlu0 0
        %933 = vperm.xlu0 %932, %v891
        %v934 = vpop.permute.xlu0 %933
        %937 = vset.pattern.permute.xlu0 0
        %938 = vperm.xlu0 %937, %v892
        %v939 = vpop.permute.xlu0 %938
        %942 = vset.pattern.permute.xlu0 0
        %943 = vperm.xlu0 %942, %v893
        %v944 = vpop.permute.xlu0 %943
        %947 = vset.pattern.permute.xlu0 0
        %948 = vperm.xlu0 %947, %v894
        %v949 = vpop.permute.xlu0 %948
        %v951 = vadd.f32 %v915, %v934
        %v952 = vadd.f32 %v916, %v934
        %v953 = vadd.f32 %v917, %v934
        %v954 = vadd.f32 %v918, %v934
        %v955 = vadd.f32 %v919, %v939
        %v956 = vadd.f32 %v920, %v939
        %v957 = vadd.f32 %v921, %v939
        %v958 = vadd.f32 %v922, %v939
        %v959 = vadd.f32 %v923, %v944
        %v960 = vadd.f32 %v924, %v944
        %v961 = vadd.f32 %v925, %v944
        %v962 = vadd.f32 %v926, %v944
        %v963 = vadd.f32 %v927, %v949
        %v964 = vadd.f32 %v928, %v949
        %v965 = vadd.f32 %v929, %v949
        %v966 = vadd.f32 %v930, %v949
        %v967 = vmax.f32 %v951, %v955
        %v968 = vmax.f32 %v967, %v959
        %v969 = vmax.f32 %v968, %v963
        %v970 = vrot.slane %v969, 4
        %v971 = vmax.f32 %v969, %v970
        %v972 = vrot.slane %v971, 2
        %v973 = vmax.f32 %v971, %v972
        %v974 = vrot.slane %v973, 1
        %v975 = vmax.f32 %v973, %v974
        %v976 = vmax.f32 %v952, %v956
        %v977 = vmax.f32 %v976, %v960
        %v978 = vmax.f32 %v977, %v964
        %v979 = vrot.slane %v978, 4
        %v980 = vmax.f32 %v978, %v979
        %v981 = vrot.slane %v980, 2
        %v982 = vmax.f32 %v980, %v981
        %v983 = vrot.slane %v982, 1
        %v984 = vmax.f32 %v982, %v983
        %v985 = vmax.f32 %v953, %v957
        %v986 = vmax.f32 %v985, %v961
        %v987 = vmax.f32 %v986, %v965
        %v988 = vrot.slane %v987, 4
        %v989 = vmax.f32 %v987, %v988
        %v990 = vrot.slane %v989, 2
        %v991 = vmax.f32 %v989, %v990
        %v992 = vrot.slane %v991, 1
        %v993 = vmax.f32 %v991, %v992
        %v994 = vmax.f32 %v954, %v958
        %v995 = vmax.f32 %v994, %v962
        %v996 = vmax.f32 %v995, %v966
        %v997 = vrot.slane %v996, 4
        %v998 = vmax.f32 %v996, %v997
        %v999 = vrot.slane %v998, 2
        %v1000 = vmax.f32 %v998, %v999
        %v1001 = vrot.slane %v1000, 1
        %v1002 = vmax.f32 %v1000, %v1001
        %v1003 = vmax.f32 %v686, %v975
        %v1004 = vmax.f32 %v687, %v984
        %v1005 = vmax.f32 %v688, %v993
        %v1006 = vmax.f32 %v689, %v1002
        %v1007 = vsub.f32 %v686, %v1003
        %v1008 = vsub.f32 %v687, %v1004
        %v1009 = vsub.f32 %v688, %v1005
        %v1010 = vsub.f32 %v689, %v1006
        %v1011 = vmul.f32 %v1007, 1.442695
        %v1012 = vpow.pop %v1011
        %v1013 = vmul.f32 %v1008, 1.442695
        %v1014 = vpow.pop %v1013
        %v1015 = vmul.f32 %v1009, 1.442695
        %v1016 = vpow.pop %v1015
        %v1017 = vmul.f32 %v1010, 1.442695
        %v1018 = vpow.pop %v1017
        %v1019 = vsub.f32 %v951, %v1003
        %v1020 = vsub.f32 %v952, %v1004
        %v1021 = vsub.f32 %v953, %v1005
        %v1022 = vsub.f32 %v954, %v1006
        %v1023 = vsub.f32 %v955, %v1003
        %v1024 = vsub.f32 %v956, %v1004
        %v1025 = vsub.f32 %v957, %v1005
        %v1026 = vsub.f32 %v958, %v1006
        %v1027 = vsub.f32 %v959, %v1003
        %v1028 = vsub.f32 %v960, %v1004
        %v1029 = vsub.f32 %v961, %v1005
        %v1030 = vsub.f32 %v962, %v1006
        %v1031 = vsub.f32 %v963, %v1003
        %v1032 = vsub.f32 %v964, %v1004
        %v1033 = vsub.f32 %v965, %v1005
        %v1034 = vsub.f32 %v966, %v1006
        %v1035 = vmul.f32 %v1019, 1.442695
        %v1036 = vpow.pop %v1035
        %v1037 = vmul.f32 %v1020, 1.442695
        %v1038 = vpow.pop %v1037
        %v1039 = vmul.f32 %v1021, 1.442695
        %v1040 = vpow.pop %v1039
        %v1041 = vmul.f32 %v1022, 1.442695
        %v1042 = vpow.pop %v1041
        %v1043 = vmul.f32 %v1023, 1.442695
        %v1044 = vpow.pop %v1043
        %v1045 = vmul.f32 %v1024, 1.442695
        %v1046 = vpow.pop %v1045
        %v1047 = vmul.f32 %v1025, 1.442695
        %v1048 = vpow.pop %v1047
        %v1049 = vmul.f32 %v1026, 1.442695
        %v1050 = vpow.pop %v1049
        %v1051 = vmul.f32 %v1027, 1.442695
        %v1052 = vpow.pop %v1051
        %v1053 = vmul.f32 %v1028, 1.442695
        %v1054 = vpow.pop %v1053
        %v1055 = vmul.f32 %v1029, 1.442695
        %v1056 = vpow.pop %v1055
        %v1057 = vmul.f32 %v1030, 1.442695
        %v1058 = vpow.pop %v1057
        %v1059 = vmul.f32 %v1031, 1.442695
        %v1060 = vpow.pop %v1059
        %v1061 = vmul.f32 %v1032, 1.442695
        %v1062 = vpow.pop %v1061
        %v1063 = vmul.f32 %v1033, 1.442695
        %v1064 = vpow.pop %v1063
        %v1065 = vmul.f32 %v1034, 1.442695
        %v1066 = vpow.pop %v1065
        %v1067 = vmul.f32 %v1012, %v790
        %v1068 = vmul.f32 %v1014, %v791
        %v1069 = vmul.f32 %v1016, %v792
        %v1070 = vmul.f32 %v1018, %v793
        %v1071 = vadd.f32 %v1036, %v1044
        %v1072 = vadd.f32 %v1071, %v1052
        %v1073 = vadd.f32 %v1072, %v1060
        %v1074 = vrot.slane %v1073, 4
        %v1075 = vadd.f32 %v1073, %v1074
        %v1076 = vrot.slane %v1075, 2
        %v1077 = vadd.f32 %v1075, %v1076
        %v1078 = vrot.slane %v1077, 1
        %v1079 = vadd.f32 %v1077, %v1078
        %v1080 = vadd.f32 %v1038, %v1046
        %v1081 = vadd.f32 %v1080, %v1054
        %v1082 = vadd.f32 %v1081, %v1062
        %v1083 = vrot.slane %v1082, 4
        %v1084 = vadd.f32 %v1082, %v1083
        %v1085 = vrot.slane %v1084, 2
        %v1086 = vadd.f32 %v1084, %v1085
        %v1087 = vrot.slane %v1086, 1
        %v1088 = vadd.f32 %v1086, %v1087
        %v1089 = vadd.f32 %v1040, %v1048
        %v1090 = vadd.f32 %v1089, %v1056
        %v1091 = vadd.f32 %v1090, %v1064
        %v1092 = vrot.slane %v1091, 4
        %v1093 = vadd.f32 %v1091, %v1092
        %v1094 = vrot.slane %v1093, 2
        %v1095 = vadd.f32 %v1093, %v1094
        %v1096 = vrot.slane %v1095, 1
        %v1097 = vadd.f32 %v1095, %v1096
        %v1098 = vadd.f32 %v1042, %v1050
        %v1099 = vadd.f32 %v1098, %v1058
        %v1100 = vadd.f32 %v1099, %v1066
        %v1101 = vrot.slane %v1100, 4
        %v1102 = vadd.f32 %v1100, %v1101
        %v1103 = vrot.slane %v1102, 2
        %v1104 = vadd.f32 %v1102, %v1103
        %v1105 = vrot.slane %v1104, 1
        %v1106 = vadd.f32 %v1104, %v1105
        %v1107 = vadd.f32 %v1067, %v1079
        %v1108 = vadd.f32 %v1068, %v1088
        %v1109 = vadd.f32 %v1069, %v1097
        %v1110 = vadd.f32 %v1070, %v1106
        %v1111 = vmul.f32 %v1012, %v870
        %v1112 = vmul.f32 %v1014, %v871
        %v1113 = vmul.f32 %v1016, %v872
        %v1114 = vmul.f32 %v1018, %v873
        %1116 = vset.pattern.permute.xlu0 0
        %1117 = vperm.xlu0 %1116, %v875
        %v1118 = vpop.permute.xlu0 %1117
        %1121 = vset.pattern.permute.xlu0 0
        %1122 = vperm.xlu0 %1121, %v876
        %v1123 = vpop.permute.xlu0 %1122
        %1126 = vset.pattern.permute.xlu0 0
        %1127 = vperm.xlu0 %1126, %v877
        %v1128 = vpop.permute.xlu0 %1127
        %1131 = vset.pattern.permute.xlu0 0
        %1132 = vperm.xlu0 %1131, %v878
        %v1133 = vpop.permute.xlu0 %1132
        %v1135 = vmul.f32 %v1036, %v1118
        %v1136 = vmul.f32 %v1038, %v1118
        %v1137 = vmul.f32 %v1040, %v1118
        %v1138 = vmul.f32 %v1042, %v1118
        %v1139 = vmul.f32 %v1044, %v1123
        %v1140 = vmul.f32 %v1046, %v1123
        %v1141 = vmul.f32 %v1048, %v1123
        %v1142 = vmul.f32 %v1050, %v1123
        %v1143 = vmul.f32 %v1052, %v1128
        %v1144 = vmul.f32 %v1054, %v1128
        %v1145 = vmul.f32 %v1056, %v1128
        %v1146 = vmul.f32 %v1058, %v1128
        %v1147 = vmul.f32 %v1060, %v1133
        %v1148 = vmul.f32 %v1062, %v1133
        %v1149 = vmul.f32 %v1064, %v1133
        %v1150 = vmul.f32 %v1066, %v1133
        %v1151 = vadd.f32 %v1135, %v1139
        %v1152 = vadd.f32 %v1151, %v1143
        %v1153 = vadd.f32 %v1152, %v1147
        %v1154 = vrot.slane %v1153, 4
        %v1155 = vadd.f32 %v1153, %v1154
        %v1156 = vrot.slane %v1155, 2
        %v1157 = vadd.f32 %v1155, %v1156
        %v1158 = vrot.slane %v1157, 1
        %v1159 = vadd.f32 %v1157, %v1158
        %v1160 = vadd.f32 %v1136, %v1140
        %v1161 = vadd.f32 %v1160, %v1144
        %v1162 = vadd.f32 %v1161, %v1148
        %v1163 = vrot.slane %v1162, 4
        %v1164 = vadd.f32 %v1162, %v1163
        %v1165 = vrot.slane %v1164, 2
        %v1166 = vadd.f32 %v1164, %v1165
        %v1167 = vrot.slane %v1166, 1
        %v1168 = vadd.f32 %v1166, %v1167
        %v1169 = vadd.f32 %v1137, %v1141
        %v1170 = vadd.f32 %v1169, %v1145
        %v1171 = vadd.f32 %v1170, %v1149
        %v1172 = vrot.slane %v1171, 4
        %v1173 = vadd.f32 %v1171, %v1172
        %v1174 = vrot.slane %v1173, 2
        %v1175 = vadd.f32 %v1173, %v1174
        %v1176 = vrot.slane %v1175, 1
        %v1177 = vadd.f32 %v1175, %v1176
        %v1178 = vadd.f32 %v1138, %v1142
        %v1179 = vadd.f32 %v1178, %v1146
        %v1180 = vadd.f32 %v1179, %v1150
        %v1181 = vrot.slane %v1180, 4
        %v1182 = vadd.f32 %v1180, %v1181
        %v1183 = vrot.slane %v1182, 2
        %v1184 = vadd.f32 %v1182, %v1183
        %v1185 = vrot.slane %v1184, 1
        %v1186 = vadd.f32 %v1184, %v1185
        %v1187 = vadd.f32 %v1111, %v1159
        %v1188 = vadd.f32 %v1112, %v1168
        %v1189 = vadd.f32 %v1113, %v1177
        %v1190 = vadd.f32 %v1114, %v1186
        %s1191 = scalar_lea.vmem %s229, 96
        %v1192 = vld [vmem:[%s1191] sm:$0xff]
        %v1193 = vld [vmem:[%s1191 + $0x8] sm:$0xff]
        %v1194 = vld [vmem:[%s1191 + $0x10] sm:$0xff]
        %v1195 = vld [vmem:[%s1191 + $0x18] sm:$0xff]
        %v1196 = vmul.f32 %v240, %v1192
        %v1197 = vmul.f32 %v240, %v1193
        %v1198 = vmul.f32 %v240, %v1194
        %v1199 = vmul.f32 %v240, %v1195
        %v1200 = vadd.f32 %v1196, %v245
        %v1201 = vadd.f32 %v1197, %v245
        %v1202 = vadd.f32 %v1198, %v245
        %v1203 = vadd.f32 %v1199, %v245
        %v1204 = vmul.f32 %v250, %v1192
        %v1205 = vmul.f32 %v250, %v1193
        %v1206 = vmul.f32 %v250, %v1194
        %v1207 = vmul.f32 %v250, %v1195
        %v1208 = vadd.f32 %v1204, %v255
        %v1209 = vadd.f32 %v1205, %v255
        %v1210 = vadd.f32 %v1206, %v255
        %v1211 = vadd.f32 %v1207, %v255
        %1213 = vset.pattern.permute.xlu0 0
        %1214 = vperm.xlu0 %1213, %v1200
        %v1215 = vpop.permute.xlu0 %1214
        %1218 = vset.pattern.permute.xlu0 0
        %1219 = vperm.xlu0 %1218, %v1201
        %v1220 = vpop.permute.xlu0 %1219
        %1223 = vset.pattern.permute.xlu0 0
        %1224 = vperm.xlu0 %1223, %v1202
        %v1225 = vpop.permute.xlu0 %1224
        %1228 = vset.pattern.permute.xlu0 0
        %1229 = vperm.xlu0 %1228, %v1203
        %v1230 = vpop.permute.xlu0 %1229
        %v1232 = vmul.f32 %v1215, %v281
        %v1233 = vmul.f32 %v1215, %v282
        %v1234 = vmul.f32 %v1215, %v283
        %v1235 = vmul.f32 %v1215, %v284
        %v1236 = vmul.f32 %v1220, %v281
        %v1237 = vmul.f32 %v1220, %v282
        %v1238 = vmul.f32 %v1220, %v283
        %v1239 = vmul.f32 %v1220, %v284
        %v1240 = vmul.f32 %v1225, %v281
        %v1241 = vmul.f32 %v1225, %v282
        %v1242 = vmul.f32 %v1225, %v283
        %v1243 = vmul.f32 %v1225, %v284
        %v1244 = vmul.f32 %v1230, %v281
        %v1245 = vmul.f32 %v1230, %v282
        %v1246 = vmul.f32 %v1230, %v283
        %v1247 = vmul.f32 %v1230, %v284
        %1249 = vset.pattern.permute.xlu0 0
        %1250 = vperm.xlu0 %1249, %v1208
        %v1251 = vpop.permute.xlu0 %1250
        %1254 = vset.pattern.permute.xlu0 0
        %1255 = vperm.xlu0 %1254, %v1209
        %v1256 = vpop.permute.xlu0 %1255
        %1259 = vset.pattern.permute.xlu0 0
        %1260 = vperm.xlu0 %1259, %v1210
        %v1261 = vpop.permute.xlu0 %1260
        %1264 = vset.pattern.permute.xlu0 0
        %1265 = vperm.xlu0 %1264, %v1211
        %v1266 = vpop.permute.xlu0 %1265
        %v1268 = vadd.f32 %v1232, %v1251
        %v1269 = vadd.f32 %v1233, %v1251
        %v1270 = vadd.f32 %v1234, %v1251
        %v1271 = vadd.f32 %v1235, %v1251
        %v1272 = vadd.f32 %v1236, %v1256
        %v1273 = vadd.f32 %v1237, %v1256
        %v1274 = vadd.f32 %v1238, %v1256
        %v1275 = vadd.f32 %v1239, %v1256
        %v1276 = vadd.f32 %v1240, %v1261
        %v1277 = vadd.f32 %v1241, %v1261
        %v1278 = vadd.f32 %v1242, %v1261
        %v1279 = vadd.f32 %v1243, %v1261
        %v1280 = vadd.f32 %v1244, %v1266
        %v1281 = vadd.f32 %v1245, %v1266
        %v1282 = vadd.f32 %v1246, %v1266
        %v1283 = vadd.f32 %v1247, %v1266
        %v1284 = vmax.f32 %v1268, %v1272
        %v1285 = vmax.f32 %v1284, %v1276
        %v1286 = vmax.f32 %v1285, %v1280
        %v1287 = vrot.slane %v1286, 4
        %v1288 = vmax.f32 %v1286, %v1287
        %v1289 = vrot.slane %v1288, 2
        %v1290 = vmax.f32 %v1288, %v1289
        %v1291 = vrot.slane %v1290, 1
        %v1292 = vmax.f32 %v1290, %v1291
        %v1293 = vmax.f32 %v1269, %v1273
        %v1294 = vmax.f32 %v1293, %v1277
        %v1295 = vmax.f32 %v1294, %v1281
        %v1296 = vrot.slane %v1295, 4
        %v1297 = vmax.f32 %v1295, %v1296
        %v1298 = vrot.slane %v1297, 2
        %v1299 = vmax.f32 %v1297, %v1298
        %v1300 = vrot.slane %v1299, 1
        %v1301 = vmax.f32 %v1299, %v1300
        %v1302 = vmax.f32 %v1270, %v1274
        %v1303 = vmax.f32 %v1302, %v1278
        %v1304 = vmax.f32 %v1303, %v1282
        %v1305 = vrot.slane %v1304, 4
        %v1306 = vmax.f32 %v1304, %v1305
        %v1307 = vrot.slane %v1306, 2
        %v1308 = vmax.f32 %v1306, %v1307
        %v1309 = vrot.slane %v1308, 1
        %v1310 = vmax.f32 %v1308, %v1309
        %v1311 = vmax.f32 %v1271, %v1275
        %v1312 = vmax.f32 %v1311, %v1279
        %v1313 = vmax.f32 %v1312, %v1283
        %v1314 = vrot.slane %v1313, 4
        %v1315 = vmax.f32 %v1313, %v1314
        %v1316 = vrot.slane %v1315, 2
        %v1317 = vmax.f32 %v1315, %v1316
        %v1318 = vrot.slane %v1317, 1
        %v1319 = vmax.f32 %v1317, %v1318
        %v1320 = vmax.f32 %v1003, %v1292
        %v1321 = vmax.f32 %v1004, %v1301
        %v1322 = vmax.f32 %v1005, %v1310
        %v1323 = vmax.f32 %v1006, %v1319
        %v1324 = vsub.f32 %v1003, %v1320
        %v1325 = vsub.f32 %v1004, %v1321
        %v1326 = vsub.f32 %v1005, %v1322
        %v1327 = vsub.f32 %v1006, %v1323
        %v1328 = vmul.f32 %v1324, 1.442695
        %v1329 = vpow.pop %v1328
        %v1330 = vmul.f32 %v1325, 1.442695
        %v1331 = vpow.pop %v1330
        %v1332 = vmul.f32 %v1326, 1.442695
        %v1333 = vpow.pop %v1332
        %v1334 = vmul.f32 %v1327, 1.442695
        %v1335 = vpow.pop %v1334
        %v1336 = vsub.f32 %v1268, %v1320
        %v1337 = vsub.f32 %v1269, %v1321
        %v1338 = vsub.f32 %v1270, %v1322
        %v1339 = vsub.f32 %v1271, %v1323
        %v1340 = vsub.f32 %v1272, %v1320
        %v1341 = vsub.f32 %v1273, %v1321
        %v1342 = vsub.f32 %v1274, %v1322
        %v1343 = vsub.f32 %v1275, %v1323
        %v1344 = vsub.f32 %v1276, %v1320
        %v1345 = vsub.f32 %v1277, %v1321
        %v1346 = vsub.f32 %v1278, %v1322
        %v1347 = vsub.f32 %v1279, %v1323
        %v1348 = vsub.f32 %v1280, %v1320
        %v1349 = vsub.f32 %v1281, %v1321
        %v1350 = vsub.f32 %v1282, %v1322
        %v1351 = vsub.f32 %v1283, %v1323
        %v1352 = vmul.f32 %v1336, 1.442695
        %v1353 = vpow.pop %v1352
        %v1354 = vmul.f32 %v1337, 1.442695
        %v1355 = vpow.pop %v1354
        %v1356 = vmul.f32 %v1338, 1.442695
        %v1357 = vpow.pop %v1356
        %v1358 = vmul.f32 %v1339, 1.442695
        %v1359 = vpow.pop %v1358
        %v1360 = vmul.f32 %v1340, 1.442695
        %v1361 = vpow.pop %v1360
        %v1362 = vmul.f32 %v1341, 1.442695
        %v1363 = vpow.pop %v1362
        %v1364 = vmul.f32 %v1342, 1.442695
        %v1365 = vpow.pop %v1364
        %v1366 = vmul.f32 %v1343, 1.442695
        %v1367 = vpow.pop %v1366
        %v1368 = vmul.f32 %v1344, 1.442695
        %v1369 = vpow.pop %v1368
        %v1370 = vmul.f32 %v1345, 1.442695
        %v1371 = vpow.pop %v1370
        %v1372 = vmul.f32 %v1346, 1.442695
        %v1373 = vpow.pop %v1372
        %v1374 = vmul.f32 %v1347, 1.442695
        %v1375 = vpow.pop %v1374
        %v1376 = vmul.f32 %v1348, 1.442695
        %v1377 = vpow.pop %v1376
        %v1378 = vmul.f32 %v1349, 1.442695
        %v1379 = vpow.pop %v1378
        %v1380 = vmul.f32 %v1350, 1.442695
        %v1381 = vpow.pop %v1380
        %v1382 = vmul.f32 %v1351, 1.442695
        %v1383 = vpow.pop %v1382
        %v1384 = vmul.f32 %v1329, %v1107
        %v1385 = vmul.f32 %v1331, %v1108
        %v1386 = vmul.f32 %v1333, %v1109
        %v1387 = vmul.f32 %v1335, %v1110
        %v1388 = vadd.f32 %v1353, %v1361
        %v1389 = vadd.f32 %v1388, %v1369
        %v1390 = vadd.f32 %v1389, %v1377
        %v1391 = vrot.slane %v1390, 4
        %v1392 = vadd.f32 %v1390, %v1391
        %v1393 = vrot.slane %v1392, 2
        %v1394 = vadd.f32 %v1392, %v1393
        %v1395 = vrot.slane %v1394, 1
        %v1396 = vadd.f32 %v1394, %v1395
        %v1397 = vadd.f32 %v1355, %v1363
        %v1398 = vadd.f32 %v1397, %v1371
        %v1399 = vadd.f32 %v1398, %v1379
        %v1400 = vrot.slane %v1399, 4
        %v1401 = vadd.f32 %v1399, %v1400
        %v1402 = vrot.slane %v1401, 2
        %v1403 = vadd.f32 %v1401, %v1402
        %v1404 = vrot.slane %v1403, 1
        %v1405 = vadd.f32 %v1403, %v1404
        %v1406 = vadd.f32 %v1357, %v1365
        %v1407 = vadd.f32 %v1406, %v1373
        %v1408 = vadd.f32 %v1407, %v1381
        %v1409 = vrot.slane %v1408, 4
        %v1410 = vadd.f32 %v1408, %v1409
        %v1411 = vrot.slane %v1410, 2
        %v1412 = vadd.f32 %v1410, %v1411
        %v1413 = vrot.slane %v1412, 1
        %v1414 = vadd.f32 %v1412, %v1413
        %v1415 = vadd.f32 %v1359, %v1367
        %v1416 = vadd.f32 %v1415, %v1375
        %v1417 = vadd.f32 %v1416, %v1383
        %v1418 = vrot.slane %v1417, 4
        %v1419 = vadd.f32 %v1417, %v1418
        %v1420 = vrot.slane %v1419, 2
        %v1421 = vadd.f32 %v1419, %v1420
        %v1422 = vrot.slane %v1421, 1
        %v1423 = vadd.f32 %v1421, %v1422
        %v1424 = vadd.f32 %v1384, %v1396
        %v1425 = vadd.f32 %v1385, %v1405
        %v1426 = vadd.f32 %v1386, %v1414
        %v1427 = vadd.f32 %v1387, %v1423
        %v1428 = vmul.f32 %v1329, %v1187
        %v1429 = vmul.f32 %v1331, %v1188
        %v1430 = vmul.f32 %v1333, %v1189
        %v1431 = vmul.f32 %v1335, %v1190
        %1433 = vset.pattern.permute.xlu0 0
        %1434 = vperm.xlu0 %1433, %v1192
        %v1435 = vpop.permute.xlu0 %1434
        %1438 = vset.pattern.permute.xlu0 0
        %1439 = vperm.xlu0 %1438, %v1193
        %v1440 = vpop.permute.xlu0 %1439
        %1443 = vset.pattern.permute.xlu0 0
        %1444 = vperm.xlu0 %1443, %v1194
        %v1445 = vpop.permute.xlu0 %1444
        %1448 = vset.pattern.permute.xlu0 0
        %1449 = vperm.xlu0 %1448, %v1195
        %v1450 = vpop.permute.xlu0 %1449
        %v1452 = vmul.f32 %v1353, %v1435
        %v1453 = vmul.f32 %v1355, %v1435
        %v1454 = vmul.f32 %v1357, %v1435
        %v1455 = vmul.f32 %v1359, %v1435
        %v1456 = vmul.f32 %v1361, %v1440
        %v1457 = vmul.f32 %v1363, %v1440
        %v1458 = vmul.f32 %v1365, %v1440
        %v1459 = vmul.f32 %v1367, %v1440
        %v1460 = vmul.f32 %v1369, %v1445
        %v1461 = vmul.f32 %v1371, %v1445
        %v1462 = vmul.f32 %v1373, %v1445
        %v1463 = vmul.f32 %v1375, %v1445
        %v1464 = vmul.f32 %v1377, %v1450
        %v1465 = vmul.f32 %v1379, %v1450
        %v1466 = vmul.f32 %v1381, %v1450
        %v1467 = vmul.f32 %v1383, %v1450
        %v1468 = vadd.f32 %v1452, %v1456
        %v1469 = vadd.f32 %v1468, %v1460
        %v1470 = vadd.f32 %v1469, %v1464
        %v1471 = vrot.slane %v1470, 4
        %v1472 = vadd.f32 %v1470, %v1471
        %v1473 = vrot.slane %v1472, 2
        %v1474 = vadd.f32 %v1472, %v1473
        %v1475 = vrot.slane %v1474, 1
        %v1476 = vadd.f32 %v1474, %v1475
        %v1477 = vadd.f32 %v1453, %v1457
        %v1478 = vadd.f32 %v1477, %v1461
        %v1479 = vadd.f32 %v1478, %v1465
        %v1480 = vrot.slane %v1479, 4
        %v1481 = vadd.f32 %v1479, %v1480
        %v1482 = vrot.slane %v1481, 2
        %v1483 = vadd.f32 %v1481, %v1482
        %v1484 = vrot.slane %v1483, 1
        %v1485 = vadd.f32 %v1483, %v1484
        %v1486 = vadd.f32 %v1454, %v1458
        %v1487 = vadd.f32 %v1486, %v1462
        %v1488 = vadd.f32 %v1487, %v1466
        %v1489 = vrot.slane %v1488, 4
        %v1490 = vadd.f32 %v1488, %v1489
        %v1491 = vrot.slane %v1490, 2
        %v1492 = vadd.f32 %v1490, %v1491
        %v1493 = vrot.slane %v1492, 1
        %v1494 = vadd.f32 %v1492, %v1493
        %v1495 = vadd.f32 %v1455, %v1459
        %v1496 = vadd.f32 %v1495, %v1463
        %v1497 = vadd.f32 %v1496, %v1467
        %v1498 = vrot.slane %v1497, 4
        %v1499 = vadd.f32 %v1497, %v1498
        %v1500 = vrot.slane %v1499, 2
        %v1501 = vadd.f32 %v1499, %v1500
        %v1502 = vrot.slane %v1501, 1
        %v1503 = vadd.f32 %v1501, %v1502
        %v1504 = vadd.f32 %v1428, %v1476
        %v1505 = vadd.f32 %v1429, %v1485
        %v1506 = vadd.f32 %v1430, %v1494
        %v1507 = vadd.f32 %v1431, %v1503
        %s1508 = scalar_lea.vmem %s229, 128
        %v1509 = vld [vmem:[%s1508] sm:$0xff]
        %v1510 = vld [vmem:[%s1508 + $0x8] sm:$0xff]
        %v1511 = vld [vmem:[%s1508 + $0x10] sm:$0xff]
        %v1512 = vld [vmem:[%s1508 + $0x18] sm:$0xff]
        %v1513 = vmul.f32 %v240, %v1509
        %v1514 = vmul.f32 %v240, %v1510
        %v1515 = vmul.f32 %v240, %v1511
        %v1516 = vmul.f32 %v240, %v1512
        %v1517 = vadd.f32 %v1513, %v245
        %v1518 = vadd.f32 %v1514, %v245
        %v1519 = vadd.f32 %v1515, %v245
        %v1520 = vadd.f32 %v1516, %v245
        %v1521 = vmul.f32 %v250, %v1509
        %v1522 = vmul.f32 %v250, %v1510
        %v1523 = vmul.f32 %v250, %v1511
        %v1524 = vmul.f32 %v250, %v1512
        %v1525 = vadd.f32 %v1521, %v255
        %v1526 = vadd.f32 %v1522, %v255
        %v1527 = vadd.f32 %v1523, %v255
        %v1528 = vadd.f32 %v1524, %v255
        %1530 = vset.pattern.permute.xlu0 0
        %1531 = vperm.xlu0 %1530, %v1517
        %v1532 = vpop.permute.xlu0 %1531
        %1535 = vset.pattern.permute.xlu0 0
        %1536 = vperm.xlu0 %1535, %v1518
        %v1537 = vpop.permute.xlu0 %1536
        %1540 = vset.pattern.permute.xlu0 0
        %1541 = vperm.xlu0 %1540, %v1519
        %v1542 = vpop.permute.xlu0 %1541
        %1545 = vset.pattern.permute.xlu0 0
        %1546 = vperm.xlu0 %1545, %v1520
        %v1547 = vpop.permute.xlu0 %1546
        %v1549 = vmul.f32 %v1532, %v281
        %v1550 = vmul.f32 %v1532, %v282
        %v1551 = vmul.f32 %v1532, %v283
        %v1552 = vmul.f32 %v1532, %v284
        %v1553 = vmul.f32 %v1537, %v281
        %v1554 = vmul.f32 %v1537, %v282
        %v1555 = vmul.f32 %v1537, %v283
        %v1556 = vmul.f32 %v1537, %v284
        %v1557 = vmul.f32 %v1542, %v281
        %v1558 = vmul.f32 %v1542, %v282
        %v1559 = vmul.f32 %v1542, %v283
        %v1560 = vmul.f32 %v1542, %v284
        %v1561 = vmul.f32 %v1547, %v281
        %v1562 = vmul.f32 %v1547, %v282
        %v1563 = vmul.f32 %v1547, %v283
        %v1564 = vmul.f32 %v1547, %v284
        %1566 = vset.pattern.permute.xlu0 0
        %1567 = vperm.xlu0 %1566, %v1525
        %v1568 = vpop.permute.xlu0 %1567
        %1571 = vset.pattern.permute.xlu0 0
        %1572 = vperm.xlu0 %1571, %v1526
        %v1573 = vpop.permute.xlu0 %1572
        %1576 = vset.pattern.permute.xlu0 0
        %1577 = vperm.xlu0 %1576, %v1527
        %v1578 = vpop.permute.xlu0 %1577
        %1581 = vset.pattern.permute.xlu0 0
        %1582 = vperm.xlu0 %1581, %v1528
        %v1583 = vpop.permute.xlu0 %1582
        %v1585 = vadd.f32 %v1549, %v1568
        %v1586 = vadd.f32 %v1550, %v1568
        %v1587 = vadd.f32 %v1551, %v1568
        %v1588 = vadd.f32 %v1552, %v1568
        %v1589 = vadd.f32 %v1553, %v1573
        %v1590 = vadd.f32 %v1554, %v1573
        %v1591 = vadd.f32 %v1555, %v1573
        %v1592 = vadd.f32 %v1556, %v1573
        %v1593 = vadd.f32 %v1557, %v1578
        %v1594 = vadd.f32 %v1558, %v1578
        %v1595 = vadd.f32 %v1559, %v1578
        %v1596 = vadd.f32 %v1560, %v1578
        %v1597 = vadd.f32 %v1561, %v1583
        %v1598 = vadd.f32 %v1562, %v1583
        %v1599 = vadd.f32 %v1563, %v1583
        %v1600 = vadd.f32 %v1564, %v1583
        %v1601 = vmax.f32 %v1585, %v1589
        %v1602 = vmax.f32 %v1601, %v1593
        %v1603 = vmax.f32 %v1602, %v1597
        %v1604 = vrot.slane %v1603, 4
        %v1605 = vmax.f32 %v1603, %v1604
        %v1606 = vrot.slane %v1605, 2
        %v1607 = vmax.f32 %v1605, %v1606
        %v1608 = vrot.slane %v1607, 1
        %v1609 = vmax.f32 %v1607, %v1608
        %v1610 = vmax.f32 %v1586, %v1590
        %v1611 = vmax.f32 %v1610, %v1594
        %v1612 = vmax.f32 %v1611, %v1598
        %v1613 = vrot.slane %v1612, 4
        %v1614 = vmax.f32 %v1612, %v1613
        %v1615 = vrot.slane %v1614, 2
        %v1616 = vmax.f32 %v1614, %v1615
        %v1617 = vrot.slane %v1616, 1
        %v1618 = vmax.f32 %v1616, %v1617
        %v1619 = vmax.f32 %v1587, %v1591
        %v1620 = vmax.f32 %v1619, %v1595
        %v1621 = vmax.f32 %v1620, %v1599
        %v1622 = vrot.slane %v1621, 4
        %v1623 = vmax.f32 %v1621, %v1622
        %v1624 = vrot.slane %v1623, 2
        %v1625 = vmax.f32 %v1623, %v1624
        %v1626 = vrot.slane %v1625, 1
        %v1627 = vmax.f32 %v1625, %v1626
        %v1628 = vmax.f32 %v1588, %v1592
        %v1629 = vmax.f32 %v1628, %v1596
        %v1630 = vmax.f32 %v1629, %v1600
        %v1631 = vrot.slane %v1630, 4
        %v1632 = vmax.f32 %v1630, %v1631
        %v1633 = vrot.slane %v1632, 2
        %v1634 = vmax.f32 %v1632, %v1633
        %v1635 = vrot.slane %v1634, 1
        %v1636 = vmax.f32 %v1634, %v1635
        %v1637 = vmax.f32 %v1320, %v1609
        %v1638 = vmax.f32 %v1321, %v1618
        %v1639 = vmax.f32 %v1322, %v1627
        %v1640 = vmax.f32 %v1323, %v1636
        %v1641 = vsub.f32 %v1320, %v1637
        %v1642 = vsub.f32 %v1321, %v1638
        %v1643 = vsub.f32 %v1322, %v1639
        %v1644 = vsub.f32 %v1323, %v1640
        %v1645 = vmul.f32 %v1641, 1.442695
        %v1646 = vpow.pop %v1645
        %v1647 = vmul.f32 %v1642, 1.442695
        %v1648 = vpow.pop %v1647
        %v1649 = vmul.f32 %v1643, 1.442695
        %v1650 = vpow.pop %v1649
        %v1651 = vmul.f32 %v1644, 1.442695
        %v1652 = vpow.pop %v1651
        %v1653 = vsub.f32 %v1585, %v1637
        %v1654 = vsub.f32 %v1586, %v1638
        %v1655 = vsub.f32 %v1587, %v1639
        %v1656 = vsub.f32 %v1588, %v1640
        %v1657 = vsub.f32 %v1589, %v1637
        %v1658 = vsub.f32 %v1590, %v1638
        %v1659 = vsub.f32 %v1591, %v1639
        %v1660 = vsub.f32 %v1592, %v1640
        %v1661 = vsub.f32 %v1593, %v1637
        %v1662 = vsub.f32 %v1594, %v1638
        %v1663 = vsub.f32 %v1595, %v1639
        %v1664 = vsub.f32 %v1596, %v1640
        %v1665 = vsub.f32 %v1597, %v1637
        %v1666 = vsub.f32 %v1598, %v1638
        %v1667 = vsub.f32 %v1599, %v1639
        %v1668 = vsub.f32 %v1600, %v1640
        %v1669 = vmul.f32 %v1653, 1.442695
        %v1670 = vpow.pop %v1669
        %v1671 = vmul.f32 %v1654, 1.442695
        %v1672 = vpow.pop %v1671
        %v1673 = vmul.f32 %v1655, 1.442695
        %v1674 = vpow.pop %v1673
        %v1675 = vmul.f32 %v1656, 1.442695
        %v1676 = vpow.pop %v1675
        %v1677 = vmul.f32 %v1657, 1.442695
        %v1678 = vpow.pop %v1677
        %v1679 = vmul.f32 %v1658, 1.442695
        %v1680 = vpow.pop %v1679
        %v1681 = vmul.f32 %v1659, 1.442695
        %v1682 = vpow.pop %v1681
        %v1683 = vmul.f32 %v1660, 1.442695
        %v1684 = vpow.pop %v1683
        %v1685 = vmul.f32 %v1661, 1.442695
        %v1686 = vpow.pop %v1685
        %v1687 = vmul.f32 %v1662, 1.442695
        %v1688 = vpow.pop %v1687
        %v1689 = vmul.f32 %v1663, 1.442695
        %v1690 = vpow.pop %v1689
        %v1691 = vmul.f32 %v1664, 1.442695
        %v1692 = vpow.pop %v1691
        %v1693 = vmul.f32 %v1665, 1.442695
        %v1694 = vpow.pop %v1693
        %v1695 = vmul.f32 %v1666, 1.442695
        %v1696 = vpow.pop %v1695
        %v1697 = vmul.f32 %v1667, 1.442695
        %v1698 = vpow.pop %v1697
        %v1699 = vmul.f32 %v1668, 1.442695
        %v1700 = vpow.pop %v1699
        %v1701 = vmul.f32 %v1646, %v1424
        %v1702 = vmul.f32 %v1648, %v1425
        %v1703 = vmul.f32 %v1650, %v1426
        %v1704 = vmul.f32 %v1652, %v1427
        %v1705 = vadd.f32 %v1670, %v1678
        %v1706 = vadd.f32 %v1705, %v1686
        %v1707 = vadd.f32 %v1706, %v1694
        %v1708 = vrot.slane %v1707, 4
        %v1709 = vadd.f32 %v1707, %v1708
        %v1710 = vrot.slane %v1709, 2
        %v1711 = vadd.f32 %v1709, %v1710
        %v1712 = vrot.slane %v1711, 1
        %v1713 = vadd.f32 %v1711, %v1712
        %v1714 = vadd.f32 %v1672, %v1680
        %v1715 = vadd.f32 %v1714, %v1688
        %v1716 = vadd.f32 %v1715, %v1696
        %v1717 = vrot.slane %v1716, 4
        %v1718 = vadd.f32 %v1716, %v1717
        %v1719 = vrot.slane %v1718, 2
        %v1720 = vadd.f32 %v1718, %v1719
        %v1721 = vrot.slane %v1720, 1
        %v1722 = vadd.f32 %v1720, %v1721
        %v1723 = vadd.f32 %v1674, %v1682
        %v1724 = vadd.f32 %v1723, %v1690
        %v1725 = vadd.f32 %v1724, %v1698
        %v1726 = vrot.slane %v1725, 4
        %v1727 = vadd.f32 %v1725, %v1726
        %v1728 = vrot.slane %v1727, 2
        %v1729 = vadd.f32 %v1727, %v1728
        %v1730 = vrot.slane %v1729, 1
        %v1731 = vadd.f32 %v1729, %v1730
        %v1732 = vadd.f32 %v1676, %v1684
        %v1733 = vadd.f32 %v1732, %v1692
        %v1734 = vadd.f32 %v1733, %v1700
        %v1735 = vrot.slane %v1734, 4
        %v1736 = vadd.f32 %v1734, %v1735
        %v1737 = vrot.slane %v1736, 2
        %v1738 = vadd.f32 %v1736, %v1737
        %v1739 = vrot.slane %v1738, 1
        %v1740 = vadd.f32 %v1738, %v1739
        %v1741 = vadd.f32 %v1701, %v1713
        %v1742 = vadd.f32 %v1702, %v1722
        %v1743 = vadd.f32 %v1703, %v1731
        %v1744 = vadd.f32 %v1704, %v1740
        %v1745 = vmul.f32 %v1646, %v1504
        %v1746 = vmul.f32 %v1648, %v1505
        %v1747 = vmul.f32 %v1650, %v1506
        %v1748 = vmul.f32 %v1652, %v1507
        %1750 = vset.pattern.permute.xlu0 0
        %1751 = vperm.xlu0 %1750, %v1509
        %v1752 = vpop.permute.xlu0 %1751
        %1755 = vset.pattern.permute.xlu0 0
        %1756 = vperm.xlu0 %1755, %v1510
        %v1757 = vpop.permute.xlu0 %1756
        %1760 = vset.pattern.permute.xlu0 0
        %1761 = vperm.xlu0 %1760, %v1511
        %v1762 = vpop.permute.xlu0 %1761
        %1765 = vset.pattern.permute.xlu0 0
        %1766 = vperm.xlu0 %1765, %v1512
        %v1767 = vpop.permute.xlu0 %1766
        %v1769 = vmul.f32 %v1670, %v1752
        %v1770 = vmul.f32 %v1672, %v1752
        %v1771 = vmul.f32 %v1674, %v1752
        %v1772 = vmul.f32 %v1676, %v1752
        %v1773 = vmul.f32 %v1678, %v1757
        %v1774 = vmul.f32 %v1680, %v1757
        %v1775 = vmul.f32 %v1682, %v1757
        %v1776 = vmul.f32 %v1684, %v1757
        %v1777 = vmul.f32 %v1686, %v1762
        %v1778 = vmul.f32 %v1688, %v1762
        %v1779 = vmul.f32 %v1690, %v1762
        %v1780 = vmul.f32 %v1692, %v1762
        %v1781 = vmul.f32 %v1694, %v1767
        %v1782 = vmul.f32 %v1696, %v1767
        %v1783 = vmul.f32 %v1698, %v1767
        %v1784 = vmul.f32 %v1700, %v1767
        %v1785 = vadd.f32 %v1769, %v1773
        %v1786 = vadd.f32 %v1785, %v1777
        %v1787 = vadd.f32 %v1786, %v1781
        %v1788 = vrot.slane %v1787, 4
        %v1789 = vadd.f32 %v1787, %v1788
        %v1790 = vrot.slane %v1789, 2
        %v1791 = vadd.f32 %v1789, %v1790
        %v1792 = vrot.slane %v1791, 1
        %v1793 = vadd.f32 %v1791, %v1792
        %v1794 = vadd.f32 %v1770, %v1774
        %v1795 = vadd.f32 %v1794, %v1778
        %v1796 = vadd.f32 %v1795, %v1782
        %v1797 = vrot.slane %v1796, 4
        %v1798 = vadd.f32 %v1796, %v1797
        %v1799 = vrot.slane %v1798, 2
        %v1800 = vadd.f32 %v1798, %v1799
        %v1801 = vrot.slane %v1800, 1
        %v1802 = vadd.f32 %v1800, %v1801
        %v1803 = vadd.f32 %v1771, %v1775
        %v1804 = vadd.f32 %v1803, %v1779
        %v1805 = vadd.f32 %v1804, %v1783
        %v1806 = vrot.slane %v1805, 4
        %v1807 = vadd.f32 %v1805, %v1806
        %v1808 = vrot.slane %v1807, 2
        %v1809 = vadd.f32 %v1807, %v1808
        %v1810 = vrot.slane %v1809, 1
        %v1811 = vadd.f32 %v1809, %v1810
        %v1812 = vadd.f32 %v1772, %v1776
        %v1813 = vadd.f32 %v1812, %v1780
        %v1814 = vadd.f32 %v1813, %v1784
        %v1815 = vrot.slane %v1814, 4
        %v1816 = vadd.f32 %v1814, %v1815
        %v1817 = vrot.slane %v1816, 2
        %v1818 = vadd.f32 %v1816, %v1817
        %v1819 = vrot.slane %v1818, 1
        %v1820 = vadd.f32 %v1818, %v1819
        %v1821 = vadd.f32 %v1745, %v1793
        %v1822 = vadd.f32 %v1746, %v1802
        %v1823 = vadd.f32 %v1747, %v1811
        %v1824 = vadd.f32 %v1748, %v1820
        %s1825 = scalar_lea.vmem %s229, 160
        %v1826 = vld [vmem:[%s1825] sm:$0xff]
        %v1827 = vld [vmem:[%s1825 + $0x8] sm:$0xff]
        %v1828 = vld [vmem:[%s1825 + $0x10] sm:$0xff]
        %v1829 = vld [vmem:[%s1825 + $0x18] sm:$0xff]
        %v1830 = vmul.f32 %v240, %v1826
        %v1831 = vmul.f32 %v240, %v1827
        %v1832 = vmul.f32 %v240, %v1828
        %v1833 = vmul.f32 %v240, %v1829
        %v1834 = vadd.f32 %v1830, %v245
        %v1835 = vadd.f32 %v1831, %v245
        %v1836 = vadd.f32 %v1832, %v245
        %v1837 = vadd.f32 %v1833, %v245
        %v1838 = vmul.f32 %v250, %v1826
        %v1839 = vmul.f32 %v250, %v1827
        %v1840 = vmul.f32 %v250, %v1828
        %v1841 = vmul.f32 %v250, %v1829
        %v1842 = vadd.f32 %v1838, %v255
        %v1843 = vadd.f32 %v1839, %v255
        %v1844 = vadd.f32 %v1840, %v255
        %v1845 = vadd.f32 %v1841, %v255
        %1847 = vset.pattern.permute.xlu0 0
        %1848 = vperm.xlu0 %1847, %v1834
        %v1849 = vpop.permute.xlu0 %1848
        %1852 = vset.pattern.permute.xlu0 0
        %1853 = vperm.xlu0 %1852, %v1835
        %v1854 = vpop.permute.xlu0 %1853
        %1857 = vset.pattern.permute.xlu0 0
        %1858 = vperm.xlu0 %1857, %v1836
        %v1859 = vpop.permute.xlu0 %1858
        %1862 = vset.pattern.permute.xlu0 0
        %1863 = vperm.xlu0 %1862, %v1837
        %v1864 = vpop.permute.xlu0 %1863
        %v1866 = vmul.f32 %v1849, %v281
        %v1867 = vmul.f32 %v1849, %v282
        %v1868 = vmul.f32 %v1849, %v283
        %v1869 = vmul.f32 %v1849, %v284
        %v1870 = vmul.f32 %v1854, %v281
        %v1871 = vmul.f32 %v1854, %v282
        %v1872 = vmul.f32 %v1854, %v283
        %v1873 = vmul.f32 %v1854, %v284
        %v1874 = vmul.f32 %v1859, %v281
        %v1875 = vmul.f32 %v1859, %v282
        %v1876 = vmul.f32 %v1859, %v283
        %v1877 = vmul.f32 %v1859, %v284
        %v1878 = vmul.f32 %v1864, %v281
        %v1879 = vmul.f32 %v1864, %v282
        %v1880 = vmul.f32 %v1864, %v283
        %v1881 = vmul.f32 %v1864, %v284
        %1883 = vset.pattern.permute.xlu0 0
        %1884 = vperm.xlu0 %1883, %v1842
        %v1885 = vpop.permute.xlu0 %1884
        %1888 = vset.pattern.permute.xlu0 0
        %1889 = vperm.xlu0 %1888, %v1843
        %v1890 = vpop.permute.xlu0 %1889
        %1893 = vset.pattern.permute.xlu0 0
        %1894 = vperm.xlu0 %1893, %v1844
        %v1895 = vpop.permute.xlu0 %1894
        %1898 = vset.pattern.permute.xlu0 0
        %1899 = vperm.xlu0 %1898, %v1845
        %v1900 = vpop.permute.xlu0 %1899
        %v1902 = vadd.f32 %v1866, %v1885
        %v1903 = vadd.f32 %v1867, %v1885
        %v1904 = vadd.f32 %v1868, %v1885
        %v1905 = vadd.f32 %v1869, %v1885
        %v1906 = vadd.f32 %v1870, %v1890
        %v1907 = vadd.f32 %v1871, %v1890
        %v1908 = vadd.f32 %v1872, %v1890
        %v1909 = vadd.f32 %v1873, %v1890
        %v1910 = vadd.f32 %v1874, %v1895
        %v1911 = vadd.f32 %v1875, %v1895
        %v1912 = vadd.f32 %v1876, %v1895
        %v1913 = vadd.f32 %v1877, %v1895
        %v1914 = vadd.f32 %v1878, %v1900
        %v1915 = vadd.f32 %v1879, %v1900
        %v1916 = vadd.f32 %v1880, %v1900
        %v1917 = vadd.f32 %v1881, %v1900
        %v1918 = vmax.f32 %v1902, %v1906
        %v1919 = vmax.f32 %v1918, %v1910
        %v1920 = vmax.f32 %v1919, %v1914
        %v1921 = vrot.slane %v1920, 4
        %v1922 = vmax.f32 %v1920, %v1921
        %v1923 = vrot.slane %v1922, 2
        %v1924 = vmax.f32 %v1922, %v1923
        %v1925 = vrot.slane %v1924, 1
        %v1926 = vmax.f32 %v1924, %v1925
        %v1927 = vmax.f32 %v1903, %v1907
        %v1928 = vmax.f32 %v1927, %v1911
        %v1929 = vmax.f32 %v1928, %v1915
        %v1930 = vrot.slane %v1929, 4
        %v1931 = vmax.f32 %v1929, %v1930
        %v1932 = vrot.slane %v1931, 2
        %v1933 = vmax.f32 %v1931, %v1932
        %v1934 = vrot.slane %v1933, 1
        %v1935 = vmax.f32 %v1933, %v1934
        %v1936 = vmax.f32 %v1904, %v1908
        %v1937 = vmax.f32 %v1936, %v1912
        %v1938 = vmax.f32 %v1937, %v1916
        %v1939 = vrot.slane %v1938, 4
        %v1940 = vmax.f32 %v1938, %v1939
        %v1941 = vrot.slane %v1940, 2
        %v1942 = vmax.f32 %v1940, %v1941
        %v1943 = vrot.slane %v1942, 1
        %v1944 = vmax.f32 %v1942, %v1943
        %v1945 = vmax.f32 %v1905, %v1909
        %v1946 = vmax.f32 %v1945, %v1913
        %v1947 = vmax.f32 %v1946, %v1917
        %v1948 = vrot.slane %v1947, 4
        %v1949 = vmax.f32 %v1947, %v1948
        %v1950 = vrot.slane %v1949, 2
        %v1951 = vmax.f32 %v1949, %v1950
        %v1952 = vrot.slane %v1951, 1
        %v1953 = vmax.f32 %v1951, %v1952
        %v1954 = vmax.f32 %v1637, %v1926
        %v1955 = vmax.f32 %v1638, %v1935
        %v1956 = vmax.f32 %v1639, %v1944
        %v1957 = vmax.f32 %v1640, %v1953
        %v1958 = vsub.f32 %v1637, %v1954
        %v1959 = vsub.f32 %v1638, %v1955
        %v1960 = vsub.f32 %v1639, %v1956
        %v1961 = vsub.f32 %v1640, %v1957
        %v1962 = vmul.f32 %v1958, 1.442695
        %v1963 = vpow.pop %v1962
        %v1964 = vmul.f32 %v1959, 1.442695
        %v1965 = vpow.pop %v1964
        %v1966 = vmul.f32 %v1960, 1.442695
        %v1967 = vpow.pop %v1966
        %v1968 = vmul.f32 %v1961, 1.442695
        %v1969 = vpow.pop %v1968
        %v1970 = vsub.f32 %v1902, %v1954
        %v1971 = vsub.f32 %v1903, %v1955
        %v1972 = vsub.f32 %v1904, %v1956
        %v1973 = vsub.f32 %v1905, %v1957
        %v1974 = vsub.f32 %v1906, %v1954
        %v1975 = vsub.f32 %v1907, %v1955
        %v1976 = vsub.f32 %v1908, %v1956
        %v1977 = vsub.f32 %v1909, %v1957
        %v1978 = vsub.f32 %v1910, %v1954
        %v1979 = vsub.f32 %v1911, %v1955
        %v1980 = vsub.f32 %v1912, %v1956
        %v1981 = vsub.f32 %v1913, %v1957
        %v1982 = vsub.f32 %v1914, %v1954
        %v1983 = vsub.f32 %v1915, %v1955
        %v1984 = vsub.f32 %v1916, %v1956
        %v1985 = vsub.f32 %v1917, %v1957
        %v1986 = vmul.f32 %v1970, 1.442695
        %v1987 = vpow.pop %v1986
        %v1988 = vmul.f32 %v1971, 1.442695
        %v1989 = vpow.pop %v1988
        %v1990 = vmul.f32 %v1972, 1.442695
        %v1991 = vpow.pop %v1990
        %v1992 = vmul.f32 %v1973, 1.442695
        %v1993 = vpow.pop %v1992
        %v1994 = vmul.f32 %v1974, 1.442695
        %v1995 = vpow.pop %v1994
        %v1996 = vmul.f32 %v1975, 1.442695
        %v1997 = vpow.pop %v1996
        %v1998 = vmul.f32 %v1976, 1.442695
        %v1999 = vpow.pop %v1998
        %v2000 = vmul.f32 %v1977, 1.442695
        %v2001 = vpow.pop %v2000
        %v2002 = vmul.f32 %v1978, 1.442695
        %v2003 = vpow.pop %v2002
        %v2004 = vmul.f32 %v1979, 1.442695
        %v2005 = vpow.pop %v2004
        %v2006 = vmul.f32 %v1980, 1.442695
        %v2007 = vpow.pop %v2006
        %v2008 = vmul.f32 %v1981, 1.442695
        %v2009 = vpow.pop %v2008
        %v2010 = vmul.f32 %v1982, 1.442695
        %v2011 = vpow.pop %v2010
        %v2012 = vmul.f32 %v1983, 1.442695
        %v2013 = vpow.pop %v2012
        %v2014 = vmul.f32 %v1984, 1.442695
        %v2015 = vpow.pop %v2014
        %v2016 = vmul.f32 %v1985, 1.442695
        %v2017 = vpow.pop %v2016
        %v2018 = vmul.f32 %v1963, %v1741
        %v2019 = vmul.f32 %v1965, %v1742
        %v2020 = vmul.f32 %v1967, %v1743
        %v2021 = vmul.f32 %v1969, %v1744
        %v2022 = vadd.f32 %v1987, %v1995
        %v2023 = vadd.f32 %v2022, %v2003
        %v2024 = vadd.f32 %v2023, %v2011
        %v2025 = vrot.slane %v2024, 4
        %v2026 = vadd.f32 %v2024, %v2025
        %v2027 = vrot.slane %v2026, 2
        %v2028 = vadd.f32 %v2026, %v2027
        %v2029 = vrot.slane %v2028, 1
        %v2030 = vadd.f32 %v2028, %v2029
        %v2031 = vadd.f32 %v1989, %v1997
        %v2032 = vadd.f32 %v2031, %v2005
        %v2033 = vadd.f32 %v2032, %v2013
        %v2034 = vrot.slane %v2033, 4
        %v2035 = vadd.f32 %v2033, %v2034
        %v2036 = vrot.slane %v2035, 2
        %v2037 = vadd.f32 %v2035, %v2036
        %v2038 = vrot.slane %v2037, 1
        %v2039 = vadd.f32 %v2037, %v2038
        %v2040 = vadd.f32 %v1991, %v1999
        %v2041 = vadd.f32 %v2040, %v2007
        %v2042 = vadd.f32 %v2041, %v2015
        %v2043 = vrot.slane %v2042, 4
        %v2044 = vadd.f32 %v2042, %v2043
        %v2045 = vrot.slane %v2044, 2
        %v2046 = vadd.f32 %v2044, %v2045
        %v2047 = vrot.slane %v2046, 1
        %v2048 = vadd.f32 %v2046, %v2047
        %v2049 = vadd.f32 %v1993, %v2001
        %v2050 = vadd.f32 %v2049, %v2009
        %v2051 = vadd.f32 %v2050, %v2017
        %v2052 = vrot.slane %v2051, 4
        %v2053 = vadd.f32 %v2051, %v2052
        %v2054 = vrot.slane %v2053, 2
        %v2055 = vadd.f32 %v2053, %v2054
        %v2056 = vrot.slane %v2055, 1
        %v2057 = vadd.f32 %v2055, %v2056
        %v2058 = vadd.f32 %v2018, %v2030
        %v2059 = vadd.f32 %v2019, %v2039
        %v2060 = vadd.f32 %v2020, %v2048
        %v2061 = vadd.f32 %v2021, %v2057
        %v2062 = vmul.f32 %v1963, %v1821
        %v2063 = vmul.f32 %v1965, %v1822
        %v2064 = vmul.f32 %v1967, %v1823
        %v2065 = vmul.f32 %v1969, %v1824
        %2067 = vset.pattern.permute.xlu0 0
        %2068 = vperm.xlu0 %2067, %v1826
        %v2069 = vpop.permute.xlu0 %2068
        %2072 = vset.pattern.permute.xlu0 0
        %2073 = vperm.xlu0 %2072, %v1827
        %v2074 = vpop.permute.xlu0 %2073
        %2077 = vset.pattern.permute.xlu0 0
        %2078 = vperm.xlu0 %2077, %v1828
        %v2079 = vpop.permute.xlu0 %2078
        %2082 = vset.pattern.permute.xlu0 0
        %2083 = vperm.xlu0 %2082, %v1829
        %v2084 = vpop.permute.xlu0 %2083
        %v2086 = vmul.f32 %v1987, %v2069
        %v2087 = vmul.f32 %v1989, %v2069
        %v2088 = vmul.f32 %v1991, %v2069
        %v2089 = vmul.f32 %v1993, %v2069
        %v2090 = vmul.f32 %v1995, %v2074
        %v2091 = vmul.f32 %v1997, %v2074
        %v2092 = vmul.f32 %v1999, %v2074
        %v2093 = vmul.f32 %v2001, %v2074
        %v2094 = vmul.f32 %v2003, %v2079
        %v2095 = vmul.f32 %v2005, %v2079
        %v2096 = vmul.f32 %v2007, %v2079
        %v2097 = vmul.f32 %v2009, %v2079
        %v2098 = vmul.f32 %v2011, %v2084
        %v2099 = vmul.f32 %v2013, %v2084
        %v2100 = vmul.f32 %v2015, %v2084
        %v2101 = vmul.f32 %v2017, %v2084
        %v2102 = vadd.f32 %v2086, %v2090
        %v2103 = vadd.f32 %v2102, %v2094
        %v2104 = vadd.f32 %v2103, %v2098
        %v2105 = vrot.slane %v2104, 4
        %v2106 = vadd.f32 %v2104, %v2105
        %v2107 = vrot.slane %v2106, 2
        %v2108 = vadd.f32 %v2106, %v2107
        %v2109 = vrot.slane %v2108, 1
        %v2110 = vadd.f32 %v2108, %v2109
        %v2111 = vadd.f32 %v2087, %v2091
        %v2112 = vadd.f32 %v2111, %v2095
        %v2113 = vadd.f32 %v2112, %v2099
        %v2114 = vrot.slane %v2113, 4
        %v2115 = vadd.f32 %v2113, %v2114
        %v2116 = vrot.slane %v2115, 2
        %v2117 = vadd.f32 %v2115, %v2116
        %v2118 = vrot.slane %v2117, 1
        %v2119 = vadd.f32 %v2117, %v2118
        %v2120 = vadd.f32 %v2088, %v2092
        %v2121 = vadd.f32 %v2120, %v2096
        %v2122 = vadd.f32 %v2121, %v2100
        %v2123 = vrot.slane %v2122, 4
        %v2124 = vadd.f32 %v2122, %v2123
        %v2125 = vrot.slane %v2124, 2
        %v2126 = vadd.f32 %v2124, %v2125
        %v2127 = vrot.slane %v2126, 1
        %v2128 = vadd.f32 %v2126, %v2127
        %v2129 = vadd.f32 %v2089, %v2093
        %v2130 = vadd.f32 %v2129, %v2097
        %v2131 = vadd.f32 %v2130, %v2101
        %v2132 = vrot.slane %v2131, 4
        %v2133 = vadd.f32 %v2131, %v2132
        %v2134 = vrot.slane %v2133, 2
        %v2135 = vadd.f32 %v2133, %v2134
        %v2136 = vrot.slane %v2135, 1
        %v2137 = vadd.f32 %v2135, %v2136
        %v2138 = vadd.f32 %v2062, %v2110
        %v2139 = vadd.f32 %v2063, %v2119
        %v2140 = vadd.f32 %v2064, %v2128
        %v2141 = vadd.f32 %v2065, %v2137
        %s2142 = scalar_lea.vmem %s229, 192
        %v2143 = vld [vmem:[%s2142] sm:$0xff]
        %v2144 = vld [vmem:[%s2142 + $0x8] sm:$0xff]
        %v2145 = vld [vmem:[%s2142 + $0x10] sm:$0xff]
        %v2146 = vld [vmem:[%s2142 + $0x18] sm:$0xff]
        %v2147 = vmul.f32 %v240, %v2143
        %v2148 = vmul.f32 %v240, %v2144
        %v2149 = vmul.f32 %v240, %v2145
        %v2150 = vmul.f32 %v240, %v2146
        %v2151 = vadd.f32 %v2147, %v245
        %v2152 = vadd.f32 %v2148, %v245
        %v2153 = vadd.f32 %v2149, %v245
        %v2154 = vadd.f32 %v2150, %v245
        %v2155 = vmul.f32 %v250, %v2143
        %v2156 = vmul.f32 %v250, %v2144
        %v2157 = vmul.f32 %v250, %v2145
        %v2158 = vmul.f32 %v250, %v2146
        %v2159 = vadd.f32 %v2155, %v255
        %v2160 = vadd.f32 %v2156, %v255
        %v2161 = vadd.f32 %v2157, %v255
        %v2162 = vadd.f32 %v2158, %v255
        %2164 = vset.pattern.permute.xlu0 0
        %2165 = vperm.xlu0 %2164, %v2151
        %v2166 = vpop.permute.xlu0 %2165
        %2169 = vset.pattern.permute.xlu0 0
        %2170 = vperm.xlu0 %2169, %v2152
        %v2171 = vpop.permute.xlu0 %2170
        %2174 = vset.pattern.permute.xlu0 0
        %2175 = vperm.xlu0 %2174, %v2153
        %v2176 = vpop.permute.xlu0 %2175
        %2179 = vset.pattern.permute.xlu0 0
        %2180 = vperm.xlu0 %2179, %v2154
        %v2181 = vpop.permute.xlu0 %2180
        %v2183 = vmul.f32 %v2166, %v281
        %v2184 = vmul.f32 %v2166, %v282
        %v2185 = vmul.f32 %v2166, %v283
        %v2186 = vmul.f32 %v2166, %v284
        %v2187 = vmul.f32 %v2171, %v281
        %v2188 = vmul.f32 %v2171, %v282
        %v2189 = vmul.f32 %v2171, %v283
        %v2190 = vmul.f32 %v2171, %v284
        %v2191 = vmul.f32 %v2176, %v281
        %v2192 = vmul.f32 %v2176, %v282
        %v2193 = vmul.f32 %v2176, %v283
        %v2194 = vmul.f32 %v2176, %v284
        %v2195 = vmul.f32 %v2181, %v281
        %v2196 = vmul.f32 %v2181, %v282
        %v2197 = vmul.f32 %v2181, %v283
        %v2198 = vmul.f32 %v2181, %v284
        %2200 = vset.pattern.permute.xlu0 0
        %2201 = vperm.xlu0 %2200, %v2159
        %v2202 = vpop.permute.xlu0 %2201
        %2205 = vset.pattern.permute.xlu0 0
        %2206 = vperm.xlu0 %2205, %v2160
        %v2207 = vpop.permute.xlu0 %2206
        %2210 = vset.pattern.permute.xlu0 0
        %2211 = vperm.xlu0 %2210, %v2161
        %v2212 = vpop.permute.xlu0 %2211
        %2215 = vset.pattern.permute.xlu0 0
        %2216 = vperm.xlu0 %2215, %v2162
        %v2217 = vpop.permute.xlu0 %2216
        %v2219 = vadd.f32 %v2183, %v2202
        %v2220 = vadd.f32 %v2184, %v2202
        %v2221 = vadd.f32 %v2185, %v2202
        %v2222 = vadd.f32 %v2186, %v2202
        %v2223 = vadd.f32 %v2187, %v2207
        %v2224 = vadd.f32 %v2188, %v2207
        %v2225 = vadd.f32 %v2189, %v2207
        %v2226 = vadd.f32 %v2190, %v2207
        %v2227 = vadd.f32 %v2191, %v2212
        %v2228 = vadd.f32 %v2192, %v2212
        %v2229 = vadd.f32 %v2193, %v2212
        %v2230 = vadd.f32 %v2194, %v2212
        %v2231 = vadd.f32 %v2195, %v2217
        %v2232 = vadd.f32 %v2196, %v2217
        %v2233 = vadd.f32 %v2197, %v2217
        %v2234 = vadd.f32 %v2198, %v2217
        %v2235 = vmax.f32 %v2219, %v2223
        %v2236 = vmax.f32 %v2235, %v2227
        %v2237 = vmax.f32 %v2236, %v2231
        %v2238 = vrot.slane %v2237, 4
        %v2239 = vmax.f32 %v2237, %v2238
        %v2240 = vrot.slane %v2239, 2
        %v2241 = vmax.f32 %v2239, %v2240
        %v2242 = vrot.slane %v2241, 1
        %v2243 = vmax.f32 %v2241, %v2242
        %v2244 = vmax.f32 %v2220, %v2224
        %v2245 = vmax.f32 %v2244, %v2228
        %v2246 = vmax.f32 %v2245, %v2232
        %v2247 = vrot.slane %v2246, 4
        %v2248 = vmax.f32 %v2246, %v2247
        %v2249 = vrot.slane %v2248, 2
        %v2250 = vmax.f32 %v2248, %v2249
        %v2251 = vrot.slane %v2250, 1
        %v2252 = vmax.f32 %v2250, %v2251
        %v2253 = vmax.f32 %v2221, %v2225
        %v2254 = vmax.f32 %v2253, %v2229
        %v2255 = vmax.f32 %v2254, %v2233
        %v2256 = vrot.slane %v2255, 4
        %v2257 = vmax.f32 %v2255, %v2256
        %v2258 = vrot.slane %v2257, 2
        %v2259 = vmax.f32 %v2257, %v2258
        %v2260 = vrot.slane %v2259, 1
        %v2261 = vmax.f32 %v2259, %v2260
        %v2262 = vmax.f32 %v2222, %v2226
        %v2263 = vmax.f32 %v2262, %v2230
        %v2264 = vmax.f32 %v2263, %v2234
        %v2265 = vrot.slane %v2264, 4
        %v2266 = vmax.f32 %v2264, %v2265
        %v2267 = vrot.slane %v2266, 2
        %v2268 = vmax.f32 %v2266, %v2267
        %v2269 = vrot.slane %v2268, 1
        %v2270 = vmax.f32 %v2268, %v2269
        %v2271 = vmax.f32 %v1954, %v2243
        %v2272 = vmax.f32 %v1955, %v2252
        %v2273 = vmax.f32 %v1956, %v2261
        %v2274 = vmax.f32 %v1957, %v2270
        %v2275 = vsub.f32 %v1954, %v2271
        %v2276 = vsub.f32 %v1955, %v2272
        %v2277 = vsub.f32 %v1956, %v2273
        %v2278 = vsub.f32 %v1957, %v2274
        %v2279 = vmul.f32 %v2275, 1.442695
        %v2280 = vpow.pop %v2279
        %v2281 = vmul.f32 %v2276, 1.442695
        %v2282 = vpow.pop %v2281
        %v2283 = vmul.f32 %v2277, 1.442695
        %v2284 = vpow.pop %v2283
        %v2285 = vmul.f32 %v2278, 1.442695
        %v2286 = vpow.pop %v2285
        %v2287 = vsub.f32 %v2219, %v2271
        %v2288 = vsub.f32 %v2220, %v2272
        %v2289 = vsub.f32 %v2221, %v2273
        %v2290 = vsub.f32 %v2222, %v2274
        %v2291 = vsub.f32 %v2223, %v2271
        %v2292 = vsub.f32 %v2224, %v2272
        %v2293 = vsub.f32 %v2225, %v2273
        %v2294 = vsub.f32 %v2226, %v2274
        %v2295 = vsub.f32 %v2227, %v2271
        %v2296 = vsub.f32 %v2228, %v2272
        %v2297 = vsub.f32 %v2229, %v2273
        %v2298 = vsub.f32 %v2230, %v2274
        %v2299 = vsub.f32 %v2231, %v2271
        %v2300 = vsub.f32 %v2232, %v2272
        %v2301 = vsub.f32 %v2233, %v2273
        %v2302 = vsub.f32 %v2234, %v2274
        %v2303 = vmul.f32 %v2287, 1.442695
        %v2304 = vpow.pop %v2303
        %v2305 = vmul.f32 %v2288, 1.442695
        %v2306 = vpow.pop %v2305
        %v2307 = vmul.f32 %v2289, 1.442695
        %v2308 = vpow.pop %v2307
        %v2309 = vmul.f32 %v2290, 1.442695
        %v2310 = vpow.pop %v2309
        %v2311 = vmul.f32 %v2291, 1.442695
        %v2312 = vpow.pop %v2311
        %v2313 = vmul.f32 %v2292, 1.442695
        %v2314 = vpow.pop %v2313
        %v2315 = vmul.f32 %v2293, 1.442695
        %v2316 = vpow.pop %v2315
        %v2317 = vmul.f32 %v2294, 1.442695
        %v2318 = vpow.pop %v2317
        %v2319 = vmul.f32 %v2295, 1.442695
        %v2320 = vpow.pop %v2319
        %v2321 = vmul.f32 %v2296, 1.442695
        %v2322 = vpow.pop %v2321
        %v2323 = vmul.f32 %v2297, 1.442695
        %v2324 = vpow.pop %v2323
        %v2325 = vmul.f32 %v2298, 1.442695
        %v2326 = vpow.pop %v2325
        %v2327 = vmul.f32 %v2299, 1.442695
        %v2328 = vpow.pop %v2327
        %v2329 = vmul.f32 %v2300, 1.442695
        %v2330 = vpow.pop %v2329
        %v2331 = vmul.f32 %v2301, 1.442695
        %v2332 = vpow.pop %v2331
        %v2333 = vmul.f32 %v2302, 1.442695
        %v2334 = vpow.pop %v2333
        %v2335 = vmul.f32 %v2280, %v2058
        %v2336 = vmul.f32 %v2282, %v2059
        %v2337 = vmul.f32 %v2284, %v2060
        %v2338 = vmul.f32 %v2286, %v2061
        %v2339 = vadd.f32 %v2304, %v2312
        %v2340 = vadd.f32 %v2339, %v2320
        %v2341 = vadd.f32 %v2340, %v2328
        %v2342 = vrot.slane %v2341, 4
        %v2343 = vadd.f32 %v2341, %v2342
        %v2344 = vrot.slane %v2343, 2
        %v2345 = vadd.f32 %v2343, %v2344
        %v2346 = vrot.slane %v2345, 1
        %v2347 = vadd.f32 %v2345, %v2346
        %v2348 = vadd.f32 %v2306, %v2314
        %v2349 = vadd.f32 %v2348, %v2322
        %v2350 = vadd.f32 %v2349, %v2330
        %v2351 = vrot.slane %v2350, 4
        %v2352 = vadd.f32 %v2350, %v2351
        %v2353 = vrot.slane %v2352, 2
        %v2354 = vadd.f32 %v2352, %v2353
        %v2355 = vrot.slane %v2354, 1
        %v2356 = vadd.f32 %v2354, %v2355
        %v2357 = vadd.f32 %v2308, %v2316
        %v2358 = vadd.f32 %v2357, %v2324
        %v2359 = vadd.f32 %v2358, %v2332
        %v2360 = vrot.slane %v2359, 4
        %v2361 = vadd.f32 %v2359, %v2360
        %v2362 = vrot.slane %v2361, 2
        %v2363 = vadd.f32 %v2361, %v2362
        %v2364 = vrot.slane %v2363, 1
        %v2365 = vadd.f32 %v2363, %v2364
        %v2366 = vadd.f32 %v2310, %v2318
        %v2367 = vadd.f32 %v2366, %v2326
        %v2368 = vadd.f32 %v2367, %v2334
        %v2369 = vrot.slane %v2368, 4
        %v2370 = vadd.f32 %v2368, %v2369
        %v2371 = vrot.slane %v2370, 2
        %v2372 = vadd.f32 %v2370, %v2371
        %v2373 = vrot.slane %v2372, 1
        %v2374 = vadd.f32 %v2372, %v2373
        %v2375 = vadd.f32 %v2335, %v2347
        %v2376 = vadd.f32 %v2336, %v2356
        %v2377 = vadd.f32 %v2337, %v2365
        %v2378 = vadd.f32 %v2338, %v2374
        %v2379 = vmul.f32 %v2280, %v2138
        %v2380 = vmul.f32 %v2282, %v2139
        %v2381 = vmul.f32 %v2284, %v2140
        %v2382 = vmul.f32 %v2286, %v2141
        %2384 = vset.pattern.permute.xlu0 0
        %2385 = vperm.xlu0 %2384, %v2143
        %v2386 = vpop.permute.xlu0 %2385
        %2389 = vset.pattern.permute.xlu0 0
        %2390 = vperm.xlu0 %2389, %v2144
        %v2391 = vpop.permute.xlu0 %2390
        %2394 = vset.pattern.permute.xlu0 0
        %2395 = vperm.xlu0 %2394, %v2145
        %v2396 = vpop.permute.xlu0 %2395
        %2399 = vset.pattern.permute.xlu0 0
        %2400 = vperm.xlu0 %2399, %v2146
        %v2401 = vpop.permute.xlu0 %2400
        %v2403 = vmul.f32 %v2304, %v2386
        %v2404 = vmul.f32 %v2306, %v2386
        %v2405 = vmul.f32 %v2308, %v2386
        %v2406 = vmul.f32 %v2310, %v2386
        %v2407 = vmul.f32 %v2312, %v2391
        %v2408 = vmul.f32 %v2314, %v2391
        %v2409 = vmul.f32 %v2316, %v2391
        %v2410 = vmul.f32 %v2318, %v2391
        %v2411 = vmul.f32 %v2320, %v2396
        %v2412 = vmul.f32 %v2322, %v2396
        %v2413 = vmul.f32 %v2324, %v2396
        %v2414 = vmul.f32 %v2326, %v2396
        %v2415 = vmul.f32 %v2328, %v2401
        %v2416 = vmul.f32 %v2330, %v2401
        %v2417 = vmul.f32 %v2332, %v2401
        %v2418 = vmul.f32 %v2334, %v2401
        %v2419 = vadd.f32 %v2403, %v2407
        %v2420 = vadd.f32 %v2419, %v2411
        %v2421 = vadd.f32 %v2420, %v2415
        %v2422 = vrot.slane %v2421, 4
        %v2423 = vadd.f32 %v2421, %v2422
        %v2424 = vrot.slane %v2423, 2
        %v2425 = vadd.f32 %v2423, %v2424
        %v2426 = vrot.slane %v2425, 1
        %v2427 = vadd.f32 %v2425, %v2426
        %v2428 = vadd.f32 %v2404, %v2408
        %v2429 = vadd.f32 %v2428, %v2412
        %v2430 = vadd.f32 %v2429, %v2416
        %v2431 = vrot.slane %v2430, 4
        %v2432 = vadd.f32 %v2430, %v2431
        %v2433 = vrot.slane %v2432, 2
        %v2434 = vadd.f32 %v2432, %v2433
        %v2435 = vrot.slane %v2434, 1
        %v2436 = vadd.f32 %v2434, %v2435
        %v2437 = vadd.f32 %v2405, %v2409
        %v2438 = vadd.f32 %v2437, %v2413
        %v2439 = vadd.f32 %v2438, %v2417
        %v2440 = vrot.slane %v2439, 4
        %v2441 = vadd.f32 %v2439, %v2440
        %v2442 = vrot.slane %v2441, 2
        %v2443 = vadd.f32 %v2441, %v2442
        %v2444 = vrot.slane %v2443, 1
        %v2445 = vadd.f32 %v2443, %v2444
        %v2446 = vadd.f32 %v2406, %v2410
        %v2447 = vadd.f32 %v2446, %v2414
        %v2448 = vadd.f32 %v2447, %v2418
        %v2449 = vrot.slane %v2448, 4
        %v2450 = vadd.f32 %v2448, %v2449
        %v2451 = vrot.slane %v2450, 2
        %v2452 = vadd.f32 %v2450, %v2451
        %v2453 = vrot.slane %v2452, 1
        %v2454 = vadd.f32 %v2452, %v2453
        %v2455 = vadd.f32 %v2379, %v2427
        %v2456 = vadd.f32 %v2380, %v2436
        %v2457 = vadd.f32 %v2381, %v2445
        %v2458 = vadd.f32 %v2382, %v2454
        %s2459 = scalar_lea.vmem %s229, 224
        %v2460 = vld [vmem:[%s2459] sm:$0xff]
        %v2461 = vld [vmem:[%s2459 + $0x8] sm:$0xff]
        %v2462 = vld [vmem:[%s2459 + $0x10] sm:$0xff]
        %v2463 = vld [vmem:[%s2459 + $0x18] sm:$0xff]
        %v2464 = vmul.f32 %v240, %v2460
        %v2465 = vmul.f32 %v240, %v2461
        %v2466 = vmul.f32 %v240, %v2462
        %v2467 = vmul.f32 %v240, %v2463
        %v2468 = vadd.f32 %v2464, %v245
        %v2469 = vadd.f32 %v2465, %v245
        %v2470 = vadd.f32 %v2466, %v245
        %v2471 = vadd.f32 %v2467, %v245
        %v2472 = vmul.f32 %v250, %v2460
        %v2473 = vmul.f32 %v250, %v2461
        %v2474 = vmul.f32 %v250, %v2462
        %v2475 = vmul.f32 %v250, %v2463
        %v2476 = vadd.f32 %v2472, %v255
        %v2477 = vadd.f32 %v2473, %v255
        %v2478 = vadd.f32 %v2474, %v255
        %v2479 = vadd.f32 %v2475, %v255
        %2481 = vset.pattern.permute.xlu0 0
        %2482 = vperm.xlu0 %2481, %v2468
        %v2483 = vpop.permute.xlu0 %2482
        %2486 = vset.pattern.permute.xlu0 0
        %2487 = vperm.xlu0 %2486, %v2469
        %v2488 = vpop.permute.xlu0 %2487
        %2491 = vset.pattern.permute.xlu0 0
        %2492 = vperm.xlu0 %2491, %v2470
        %v2493 = vpop.permute.xlu0 %2492
        %2496 = vset.pattern.permute.xlu0 0
        %2497 = vperm.xlu0 %2496, %v2471
        %v2498 = vpop.permute.xlu0 %2497
        %v2500 = vmul.f32 %v2483, %v281
        %v2501 = vmul.f32 %v2483, %v282
        %v2502 = vmul.f32 %v2483, %v283
        %v2503 = vmul.f32 %v2483, %v284
        %v2504 = vmul.f32 %v2488, %v281
        %v2505 = vmul.f32 %v2488, %v282
        %v2506 = vmul.f32 %v2488, %v283
        %v2507 = vmul.f32 %v2488, %v284
        %v2508 = vmul.f32 %v2493, %v281
        %v2509 = vmul.f32 %v2493, %v282
        %v2510 = vmul.f32 %v2493, %v283
        %v2511 = vmul.f32 %v2493, %v284
        %v2512 = vmul.f32 %v2498, %v281
        %v2513 = vmul.f32 %v2498, %v282
        %v2514 = vmul.f32 %v2498, %v283
        %v2515 = vmul.f32 %v2498, %v284
        %2517 = vset.pattern.permute.xlu0 0
        %2518 = vperm.xlu0 %2517, %v2476
        %v2519 = vpop.permute.xlu0 %2518
        %2522 = vset.pattern.permute.xlu0 0
        %2523 = vperm.xlu0 %2522, %v2477
        %v2524 = vpop.permute.xlu0 %2523
        %2527 = vset.pattern.permute.xlu0 0
        %2528 = vperm.xlu0 %2527, %v2478
        %v2529 = vpop.permute.xlu0 %2528
        %2532 = vset.pattern.permute.xlu0 0
        %2533 = vperm.xlu0 %2532, %v2479
        %v2534 = vpop.permute.xlu0 %2533
        %v2536 = vadd.f32 %v2500, %v2519
        %v2537 = vadd.f32 %v2501, %v2519
        %v2538 = vadd.f32 %v2502, %v2519
        %v2539 = vadd.f32 %v2503, %v2519
        %v2540 = vadd.f32 %v2504, %v2524
        %v2541 = vadd.f32 %v2505, %v2524
        %v2542 = vadd.f32 %v2506, %v2524
        %v2543 = vadd.f32 %v2507, %v2524
        %v2544 = vadd.f32 %v2508, %v2529
        %v2545 = vadd.f32 %v2509, %v2529
        %v2546 = vadd.f32 %v2510, %v2529
        %v2547 = vadd.f32 %v2511, %v2529
        %v2548 = vadd.f32 %v2512, %v2534
        %v2549 = vadd.f32 %v2513, %v2534
        %v2550 = vadd.f32 %v2514, %v2534
        %v2551 = vadd.f32 %v2515, %v2534
        %v2552 = vmax.f32 %v2536, %v2540
        %v2553 = vmax.f32 %v2552, %v2544
        %v2554 = vmax.f32 %v2553, %v2548
        %v2555 = vrot.slane %v2554, 4
        %v2556 = vmax.f32 %v2554, %v2555
        %v2557 = vrot.slane %v2556, 2
        %v2558 = vmax.f32 %v2556, %v2557
        %v2559 = vrot.slane %v2558, 1
        %v2560 = vmax.f32 %v2558, %v2559
        %v2561 = vmax.f32 %v2537, %v2541
        %v2562 = vmax.f32 %v2561, %v2545
        %v2563 = vmax.f32 %v2562, %v2549
        %v2564 = vrot.slane %v2563, 4
        %v2565 = vmax.f32 %v2563, %v2564
        %v2566 = vrot.slane %v2565, 2
        %v2567 = vmax.f32 %v2565, %v2566
        %v2568 = vrot.slane %v2567, 1
        %v2569 = vmax.f32 %v2567, %v2568
        %v2570 = vmax.f32 %v2538, %v2542
        %v2571 = vmax.f32 %v2570, %v2546
        %v2572 = vmax.f32 %v2571, %v2550
        %v2573 = vrot.slane %v2572, 4
        %v2574 = vmax.f32 %v2572, %v2573
        %v2575 = vrot.slane %v2574, 2
        %v2576 = vmax.f32 %v2574, %v2575
        %v2577 = vrot.slane %v2576, 1
        %v2578 = vmax.f32 %v2576, %v2577
        %v2579 = vmax.f32 %v2539, %v2543
        %v2580 = vmax.f32 %v2579, %v2547
        %v2581 = vmax.f32 %v2580, %v2551
        %v2582 = vrot.slane %v2581, 4
        %v2583 = vmax.f32 %v2581, %v2582
        %v2584 = vrot.slane %v2583, 2
        %v2585 = vmax.f32 %v2583, %v2584
        %v2586 = vrot.slane %v2585, 1
        %v2587 = vmax.f32 %v2585, %v2586
        %v2588 = vmax.f32 %v2271, %v2560
        %v2589 = vmax.f32 %v2272, %v2569
        %v2590 = vmax.f32 %v2273, %v2578
        %v2591 = vmax.f32 %v2274, %v2587
        %v2592 = vsub.f32 %v2271, %v2588
        %v2593 = vsub.f32 %v2272, %v2589
        %v2594 = vsub.f32 %v2273, %v2590
        %v2595 = vsub.f32 %v2274, %v2591
        %v2596 = vmul.f32 %v2592, 1.442695
        %v2597 = vpow.pop %v2596
        %v2598 = vmul.f32 %v2593, 1.442695
        %v2599 = vpow.pop %v2598
        %v2600 = vmul.f32 %v2594, 1.442695
        %v2601 = vpow.pop %v2600
        %v2602 = vmul.f32 %v2595, 1.442695
        %v2603 = vpow.pop %v2602
        %v2604 = vsub.f32 %v2536, %v2588
        %v2605 = vsub.f32 %v2537, %v2589
        %v2606 = vsub.f32 %v2538, %v2590
        %v2607 = vsub.f32 %v2539, %v2591
        %v2608 = vsub.f32 %v2540, %v2588
        %v2609 = vsub.f32 %v2541, %v2589
        %v2610 = vsub.f32 %v2542, %v2590
        %v2611 = vsub.f32 %v2543, %v2591
        %v2612 = vsub.f32 %v2544, %v2588
        %v2613 = vsub.f32 %v2545, %v2589
        %v2614 = vsub.f32 %v2546, %v2590
        %v2615 = vsub.f32 %v2547, %v2591
        %v2616 = vsub.f32 %v2548, %v2588
        %v2617 = vsub.f32 %v2549, %v2589
        %v2618 = vsub.f32 %v2550, %v2590
        %v2619 = vsub.f32 %v2551, %v2591
        %v2620 = vmul.f32 %v2604, 1.442695
        %v2621 = vpow.pop %v2620
        %v2622 = vmul.f32 %v2605, 1.442695
        %v2623 = vpow.pop %v2622
        %v2624 = vmul.f32 %v2606, 1.442695
        %v2625 = vpow.pop %v2624
        %v2626 = vmul.f32 %v2607, 1.442695
        %v2627 = vpow.pop %v2626
        %v2628 = vmul.f32 %v2608, 1.442695
        %v2629 = vpow.pop %v2628
        %v2630 = vmul.f32 %v2609, 1.442695
        %v2631 = vpow.pop %v2630
        %v2632 = vmul.f32 %v2610, 1.442695
        %v2633 = vpow.pop %v2632
        %v2634 = vmul.f32 %v2611, 1.442695
        %v2635 = vpow.pop %v2634
        %v2636 = vmul.f32 %v2612, 1.442695
        %v2637 = vpow.pop %v2636
        %v2638 = vmul.f32 %v2613, 1.442695
        %v2639 = vpow.pop %v2638
        %v2640 = vmul.f32 %v2614, 1.442695
        %v2641 = vpow.pop %v2640
        %v2642 = vmul.f32 %v2615, 1.442695
        %v2643 = vpow.pop %v2642
        %v2644 = vmul.f32 %v2616, 1.442695
        %v2645 = vpow.pop %v2644
        %v2646 = vmul.f32 %v2617, 1.442695
        %v2647 = vpow.pop %v2646
        %v2648 = vmul.f32 %v2618, 1.442695
        %v2649 = vpow.pop %v2648
        %v2650 = vmul.f32 %v2619, 1.442695
        %v2651 = vpow.pop %v2650
        %v2652 = vmul.f32 %v2597, %v2375
        %v2653 = vmul.f32 %v2599, %v2376
        %v2654 = vmul.f32 %v2601, %v2377
        %v2655 = vmul.f32 %v2603, %v2378
        %v2656 = vadd.f32 %v2621, %v2629
        %v2657 = vadd.f32 %v2656, %v2637
        %v2658 = vadd.f32 %v2657, %v2645
        %v2659 = vrot.slane %v2658, 4
        %v2660 = vadd.f32 %v2658, %v2659
        %v2661 = vrot.slane %v2660, 2
        %v2662 = vadd.f32 %v2660, %v2661
        %v2663 = vrot.slane %v2662, 1
        %v2664 = vadd.f32 %v2662, %v2663
        %v2665 = vadd.f32 %v2623, %v2631
        %v2666 = vadd.f32 %v2665, %v2639
        %v2667 = vadd.f32 %v2666, %v2647
        %v2668 = vrot.slane %v2667, 4
        %v2669 = vadd.f32 %v2667, %v2668
        %v2670 = vrot.slane %v2669, 2
        %v2671 = vadd.f32 %v2669, %v2670
        %v2672 = vrot.slane %v2671, 1
        %v2673 = vadd.f32 %v2671, %v2672
        %v2674 = vadd.f32 %v2625, %v2633
        %v2675 = vadd.f32 %v2674, %v2641
        %v2676 = vadd.f32 %v2675, %v2649
        %v2677 = vrot.slane %v2676, 4
        %v2678 = vadd.f32 %v2676, %v2677
        %v2679 = vrot.slane %v2678, 2
        %v2680 = vadd.f32 %v2678, %v2679
        %v2681 = vrot.slane %v2680, 1
        %v2682 = vadd.f32 %v2680, %v2681
        %v2683 = vadd.f32 %v2627, %v2635
        %v2684 = vadd.f32 %v2683, %v2643
        %v2685 = vadd.f32 %v2684, %v2651
        %v2686 = vrot.slane %v2685, 4
        %v2687 = vadd.f32 %v2685, %v2686
        %v2688 = vrot.slane %v2687, 2
        %v2689 = vadd.f32 %v2687, %v2688
        %v2690 = vrot.slane %v2689, 1
        %v2691 = vadd.f32 %v2689, %v2690
        %v2692 = vadd.f32 %v2652, %v2664
        %v2693 = vadd.f32 %v2653, %v2673
        %v2694 = vadd.f32 %v2654, %v2682
        %v2695 = vadd.f32 %v2655, %v2691
        %v2696 = vmul.f32 %v2597, %v2455
        %v2697 = vmul.f32 %v2599, %v2456
        %v2698 = vmul.f32 %v2601, %v2457
        %v2699 = vmul.f32 %v2603, %v2458
        %2701 = vset.pattern.permute.xlu0 0
        %2702 = vperm.xlu0 %2701, %v2460
        %v2703 = vpop.permute.xlu0 %2702
        %2706 = vset.pattern.permute.xlu0 0
        %2707 = vperm.xlu0 %2706, %v2461
        %v2708 = vpop.permute.xlu0 %2707
        %2711 = vset.pattern.permute.xlu0 0
        %2712 = vperm.xlu0 %2711, %v2462
        %v2713 = vpop.permute.xlu0 %2712
        %2716 = vset.pattern.permute.xlu0 0
        %2717 = vperm.xlu0 %2716, %v2463
        %v2718 = vpop.permute.xlu0 %2717
        %v2720 = vmul.f32 %v2621, %v2703
        %v2721 = vmul.f32 %v2623, %v2703
        %v2722 = vmul.f32 %v2625, %v2703
        %v2723 = vmul.f32 %v2627, %v2703
        %v2724 = vmul.f32 %v2629, %v2708
        %v2725 = vmul.f32 %v2631, %v2708
        %v2726 = vmul.f32 %v2633, %v2708
        %v2727 = vmul.f32 %v2635, %v2708
        %v2728 = vmul.f32 %v2637, %v2713
        %v2729 = vmul.f32 %v2639, %v2713
        %v2730 = vmul.f32 %v2641, %v2713
        %v2731 = vmul.f32 %v2643, %v2713
        %v2732 = vmul.f32 %v2645, %v2718
        %v2733 = vmul.f32 %v2647, %v2718
        %v2734 = vmul.f32 %v2649, %v2718
        %v2735 = vmul.f32 %v2651, %v2718
        %v2736 = vadd.f32 %v2720, %v2724
        %v2737 = vadd.f32 %v2736, %v2728
        %v2738 = vadd.f32 %v2737, %v2732
        %v2739 = vrot.slane %v2738, 4
        %v2740 = vadd.f32 %v2738, %v2739
        %v2741 = vrot.slane %v2740, 2
        %v2742 = vadd.f32 %v2740, %v2741
        %v2743 = vrot.slane %v2742, 1
        %v2744 = vadd.f32 %v2742, %v2743
        %v2745 = vadd.f32 %v2721, %v2725
        %v2746 = vadd.f32 %v2745, %v2729
        %v2747 = vadd.f32 %v2746, %v2733
        %v2748 = vrot.slane %v2747, 4
        %v2749 = vadd.f32 %v2747, %v2748
        %v2750 = vrot.slane %v2749, 2
        %v2751 = vadd.f32 %v2749, %v2750
        %v2752 = vrot.slane %v2751, 1
        %v2753 = vadd.f32 %v2751, %v2752
        %v2754 = vadd.f32 %v2722, %v2726
        %v2755 = vadd.f32 %v2754, %v2730
        %v2756 = vadd.f32 %v2755, %v2734
        %v2757 = vrot.slane %v2756, 4
        %v2758 = vadd.f32 %v2756, %v2757
        %v2759 = vrot.slane %v2758, 2
        %v2760 = vadd.f32 %v2758, %v2759
        %v2761 = vrot.slane %v2760, 1
        %v2762 = vadd.f32 %v2760, %v2761
        %v2763 = vadd.f32 %v2723, %v2727
        %v2764 = vadd.f32 %v2763, %v2731
        %v2765 = vadd.f32 %v2764, %v2735
        %v2766 = vrot.slane %v2765, 4
        %v2767 = vadd.f32 %v2765, %v2766
        %v2768 = vrot.slane %v2767, 2
        %v2769 = vadd.f32 %v2767, %v2768
        %v2770 = vrot.slane %v2769, 1
        %v2771 = vadd.f32 %v2769, %v2770
        %v2772 = vadd.f32 %v2696, %v2744
        %v2773 = vadd.f32 %v2697, %v2753
        %v2774 = vadd.f32 %v2698, %v2762
        %v2775 = vadd.f32 %v2699, %v2771
        %s2776 = scalar_lea.vmem %s229, 256
        %v2777 = vld [vmem:[%s2776] sm:$0xff]
        %v2778 = vld [vmem:[%s2776 + $0x8] sm:$0xff]
        %v2779 = vld [vmem:[%s2776 + $0x10] sm:$0xff]
        %v2780 = vld [vmem:[%s2776 + $0x18] sm:$0xff]
        %v2781 = vmul.f32 %v240, %v2777
        %v2782 = vmul.f32 %v240, %v2778
        %v2783 = vmul.f32 %v240, %v2779
        %v2784 = vmul.f32 %v240, %v2780
        %v2785 = vadd.f32 %v2781, %v245
        %v2786 = vadd.f32 %v2782, %v245
        %v2787 = vadd.f32 %v2783, %v245
        %v2788 = vadd.f32 %v2784, %v245
        %v2789 = vmul.f32 %v250, %v2777
        %v2790 = vmul.f32 %v250, %v2778
        %v2791 = vmul.f32 %v250, %v2779
        %v2792 = vmul.f32 %v250, %v2780
        %v2793 = vadd.f32 %v2789, %v255
        %v2794 = vadd.f32 %v2790, %v255
        %v2795 = vadd.f32 %v2791, %v255
        %v2796 = vadd.f32 %v2792, %v255
        %2798 = vset.pattern.permute.xlu0 0
        %2799 = vperm.xlu0 %2798, %v2785
        %v2800 = vpop.permute.xlu0 %2799
        %2803 = vset.pattern.permute.xlu0 0
        %2804 = vperm.xlu0 %2803, %v2786
        %v2805 = vpop.permute.xlu0 %2804
        %2808 = vset.pattern.permute.xlu0 0
        %2809 = vperm.xlu0 %2808, %v2787
        %v2810 = vpop.permute.xlu0 %2809
        %2813 = vset.pattern.permute.xlu0 0
        %2814 = vperm.xlu0 %2813, %v2788
        %v2815 = vpop.permute.xlu0 %2814
        %v2817 = vmul.f32 %v2800, %v281
        %v2818 = vmul.f32 %v2800, %v282
        %v2819 = vmul.f32 %v2800, %v283
        %v2820 = vmul.f32 %v2800, %v284
        %v2821 = vmul.f32 %v2805, %v281
        %v2822 = vmul.f32 %v2805, %v282
        %v2823 = vmul.f32 %v2805, %v283
        %v2824 = vmul.f32 %v2805, %v284
        %v2825 = vmul.f32 %v2810, %v281
        %v2826 = vmul.f32 %v2810, %v282
        %v2827 = vmul.f32 %v2810, %v283
        %v2828 = vmul.f32 %v2810, %v284
        %v2829 = vmul.f32 %v2815, %v281
        %v2830 = vmul.f32 %v2815, %v282
        %v2831 = vmul.f32 %v2815, %v283
        %v2832 = vmul.f32 %v2815, %v284
        %2834 = vset.pattern.permute.xlu0 0
        %2835 = vperm.xlu0 %2834, %v2793
        %v2836 = vpop.permute.xlu0 %2835
        %2839 = vset.pattern.permute.xlu0 0
        %2840 = vperm.xlu0 %2839, %v2794
        %v2841 = vpop.permute.xlu0 %2840
        %2844 = vset.pattern.permute.xlu0 0
        %2845 = vperm.xlu0 %2844, %v2795
        %v2846 = vpop.permute.xlu0 %2845
        %2849 = vset.pattern.permute.xlu0 0
        %2850 = vperm.xlu0 %2849, %v2796
        %v2851 = vpop.permute.xlu0 %2850
        %v2853 = vadd.f32 %v2817, %v2836
        %v2854 = vadd.f32 %v2818, %v2836
        %v2855 = vadd.f32 %v2819, %v2836
        %v2856 = vadd.f32 %v2820, %v2836
        %v2857 = vadd.f32 %v2821, %v2841
        %v2858 = vadd.f32 %v2822, %v2841
        %v2859 = vadd.f32 %v2823, %v2841
        %v2860 = vadd.f32 %v2824, %v2841
        %v2861 = vadd.f32 %v2825, %v2846
        %v2862 = vadd.f32 %v2826, %v2846
        %v2863 = vadd.f32 %v2827, %v2846
        %v2864 = vadd.f32 %v2828, %v2846
        %v2865 = vadd.f32 %v2829, %v2851
        %v2866 = vadd.f32 %v2830, %v2851
        %v2867 = vadd.f32 %v2831, %v2851
        %v2868 = vadd.f32 %v2832, %v2851
        %v2869 = vmax.f32 %v2853, %v2857
        %v2870 = vmax.f32 %v2869, %v2861
        %v2871 = vmax.f32 %v2870, %v2865
        %v2872 = vrot.slane %v2871, 4
        %v2873 = vmax.f32 %v2871, %v2872
        %v2874 = vrot.slane %v2873, 2
        %v2875 = vmax.f32 %v2873, %v2874
        %v2876 = vrot.slane %v2875, 1
        %v2877 = vmax.f32 %v2875, %v2876
        %v2878 = vmax.f32 %v2854, %v2858
        %v2879 = vmax.f32 %v2878, %v2862
        %v2880 = vmax.f32 %v2879, %v2866
        %v2881 = vrot.slane %v2880, 4
        %v2882 = vmax.f32 %v2880, %v2881
        %v2883 = vrot.slane %v2882, 2
        %v2884 = vmax.f32 %v2882, %v2883
        %v2885 = vrot.slane %v2884, 1
        %v2886 = vmax.f32 %v2884, %v2885
        %v2887 = vmax.f32 %v2855, %v2859
        %v2888 = vmax.f32 %v2887, %v2863
        %v2889 = vmax.f32 %v2888, %v2867
        %v2890 = vrot.slane %v2889, 4
        %v2891 = vmax.f32 %v2889, %v2890
        %v2892 = vrot.slane %v2891, 2
        %v2893 = vmax.f32 %v2891, %v2892
        %v2894 = vrot.slane %v2893, 1
        %v2895 = vmax.f32 %v2893, %v2894
        %v2896 = vmax.f32 %v2856, %v2860
        %v2897 = vmax.f32 %v2896, %v2864
        %v2898 = vmax.f32 %v2897, %v2868
        %v2899 = vrot.slane %v2898, 4
        %v2900 = vmax.f32 %v2898, %v2899
        %v2901 = vrot.slane %v2900, 2
        %v2902 = vmax.f32 %v2900, %v2901
        %v2903 = vrot.slane %v2902, 1
        %v2904 = vmax.f32 %v2902, %v2903
        %v2905 = vmax.f32 %v2588, %v2877
        %v2906 = vmax.f32 %v2589, %v2886
        %v2907 = vmax.f32 %v2590, %v2895
        %v2908 = vmax.f32 %v2591, %v2904
        %v2909 = vsub.f32 %v2588, %v2905
        %v2910 = vsub.f32 %v2589, %v2906
        %v2911 = vsub.f32 %v2590, %v2907
        %v2912 = vsub.f32 %v2591, %v2908
        %v2913 = vmul.f32 %v2909, 1.442695
        %v2914 = vpow.pop %v2913
        %v2915 = vmul.f32 %v2910, 1.442695
        %v2916 = vpow.pop %v2915
        %v2917 = vmul.f32 %v2911, 1.442695
        %v2918 = vpow.pop %v2917
        %v2919 = vmul.f32 %v2912, 1.442695
        %v2920 = vpow.pop %v2919
        %v2921 = vsub.f32 %v2853, %v2905
        %v2922 = vsub.f32 %v2854, %v2906
        %v2923 = vsub.f32 %v2855, %v2907
        %v2924 = vsub.f32 %v2856, %v2908
        %v2925 = vsub.f32 %v2857, %v2905
        %v2926 = vsub.f32 %v2858, %v2906
        %v2927 = vsub.f32 %v2859, %v2907
        %v2928 = vsub.f32 %v2860, %v2908
        %v2929 = vsub.f32 %v2861, %v2905
        %v2930 = vsub.f32 %v2862, %v2906
        %v2931 = vsub.f32 %v2863, %v2907
        %v2932 = vsub.f32 %v2864, %v2908
        %v2933 = vsub.f32 %v2865, %v2905
        %v2934 = vsub.f32 %v2866, %v2906
        %v2935 = vsub.f32 %v2867, %v2907
        %v2936 = vsub.f32 %v2868, %v2908
        %v2937 = vmul.f32 %v2921, 1.442695
        %v2938 = vpow.pop %v2937
        %v2939 = vmul.f32 %v2922, 1.442695
        %v2940 = vpow.pop %v2939
        %v2941 = vmul.f32 %v2923, 1.442695
        %v2942 = vpow.pop %v2941
        %v2943 = vmul.f32 %v2924, 1.442695
        %v2944 = vpow.pop %v2943
        %v2945 = vmul.f32 %v2925, 1.442695
        %v2946 = vpow.pop %v2945
        %v2947 = vmul.f32 %v2926, 1.442695
        %v2948 = vpow.pop %v2947
        %v2949 = vmul.f32 %v2927, 1.442695
        %v2950 = vpow.pop %v2949
        %v2951 = vmul.f32 %v2928, 1.442695
        %v2952 = vpow.pop %v2951
        %v2953 = vmul.f32 %v2929, 1.442695
        %v2954 = vpow.pop %v2953
        %v2955 = vmul.f32 %v2930, 1.442695
        %v2956 = vpow.pop %v2955
        %v2957 = vmul.f32 %v2931, 1.442695
        %v2958 = vpow.pop %v2957
        %v2959 = vmul.f32 %v2932, 1.442695
        %v2960 = vpow.pop %v2959
        %v2961 = vmul.f32 %v2933, 1.442695
        %v2962 = vpow.pop %v2961
        %v2963 = vmul.f32 %v2934, 1.442695
        %v2964 = vpow.pop %v2963
        %v2965 = vmul.f32 %v2935, 1.442695
        %v2966 = vpow.pop %v2965
        %v2967 = vmul.f32 %v2936, 1.442695
        %v2968 = vpow.pop %v2967
        %v2969 = vmul.f32 %v2914, %v2692
        %v2970 = vmul.f32 %v2916, %v2693
        %v2971 = vmul.f32 %v2918, %v2694
        %v2972 = vmul.f32 %v2920, %v2695
        %v2973 = vadd.f32 %v2938, %v2946
        %v2974 = vadd.f32 %v2973, %v2954
        %v2975 = vadd.f32 %v2974, %v2962
        %v2976 = vrot.slane %v2975, 4
        %v2977 = vadd.f32 %v2975, %v2976
        %v2978 = vrot.slane %v2977, 2
        %v2979 = vadd.f32 %v2977, %v2978
        %v2980 = vrot.slane %v2979, 1
        %v2981 = vadd.f32 %v2979, %v2980
        %v2982 = vadd.f32 %v2940, %v2948
        %v2983 = vadd.f32 %v2982, %v2956
        %v2984 = vadd.f32 %v2983, %v2964
        %v2985 = vrot.slane %v2984, 4
        %v2986 = vadd.f32 %v2984, %v2985
        %v2987 = vrot.slane %v2986, 2
        %v2988 = vadd.f32 %v2986, %v2987
        %v2989 = vrot.slane %v2988, 1
        %v2990 = vadd.f32 %v2988, %v2989
        %v2991 = vadd.f32 %v2942, %v2950
        %v2992 = vadd.f32 %v2991, %v2958
        %v2993 = vadd.f32 %v2992, %v2966
        %v2994 = vrot.slane %v2993, 4
        %v2995 = vadd.f32 %v2993, %v2994
        %v2996 = vrot.slane %v2995, 2
        %v2997 = vadd.f32 %v2995, %v2996
        %v2998 = vrot.slane %v2997, 1
        %v2999 = vadd.f32 %v2997, %v2998
        %v3000 = vadd.f32 %v2944, %v2952
        %v3001 = vadd.f32 %v3000, %v2960
        %v3002 = vadd.f32 %v3001, %v2968
        %v3003 = vrot.slane %v3002, 4
        %v3004 = vadd.f32 %v3002, %v3003
        %v3005 = vrot.slane %v3004, 2
        %v3006 = vadd.f32 %v3004, %v3005
        %v3007 = vrot.slane %v3006, 1
        %v3008 = vadd.f32 %v3006, %v3007
        %v3009 = vadd.f32 %v2969, %v2981
        %v3010 = vadd.f32 %v2970, %v2990
        %v3011 = vadd.f32 %v2971, %v2999
        %v3012 = vadd.f32 %v2972, %v3008
        %v3013 = vmul.f32 %v2914, %v2772
        %v3014 = vmul.f32 %v2916, %v2773
        %v3015 = vmul.f32 %v2918, %v2774
        %v3016 = vmul.f32 %v2920, %v2775
        %3018 = vset.pattern.permute.xlu0 0
        %3019 = vperm.xlu0 %3018, %v2777
        %v3020 = vpop.permute.xlu0 %3019
        %3023 = vset.pattern.permute.xlu0 0
        %3024 = vperm.xlu0 %3023, %v2778
        %v3025 = vpop.permute.xlu0 %3024
        %3028 = vset.pattern.permute.xlu0 0
        %3029 = vperm.xlu0 %3028, %v2779
        %v3030 = vpop.permute.xlu0 %3029
        %3033 = vset.pattern.permute.xlu0 0
        %3034 = vperm.xlu0 %3033, %v2780
        %v3035 = vpop.permute.xlu0 %3034
        %v3037 = vmul.f32 %v2938, %v3020
        %v3038 = vmul.f32 %v2940, %v3020
        %v3039 = vmul.f32 %v2942, %v3020
        %v3040 = vmul.f32 %v2944, %v3020
        %v3041 = vmul.f32 %v2946, %v3025
        %v3042 = vmul.f32 %v2948, %v3025
        %v3043 = vmul.f32 %v2950, %v3025
        %v3044 = vmul.f32 %v2952, %v3025
        %v3045 = vmul.f32 %v2954, %v3030
        %v3046 = vmul.f32 %v2956, %v3030
        %v3047 = vmul.f32 %v2958, %v3030
        %v3048 = vmul.f32 %v2960, %v3030
        %v3049 = vmul.f32 %v2962, %v3035
        %v3050 = vmul.f32 %v2964, %v3035
        %v3051 = vmul.f32 %v2966, %v3035
        %v3052 = vmul.f32 %v2968, %v3035
        %v3053 = vadd.f32 %v3037, %v3041
        %v3054 = vadd.f32 %v3053, %v3045
        %v3055 = vadd.f32 %v3054, %v3049
        %v3056 = vrot.slane %v3055, 4
        %v3057 = vadd.f32 %v3055, %v3056
        %v3058 = vrot.slane %v3057, 2
        %v3059 = vadd.f32 %v3057, %v3058
        %v3060 = vrot.slane %v3059, 1
        %v3061 = vadd.f32 %v3059, %v3060
        %v3062 = vadd.f32 %v3038, %v3042
        %v3063 = vadd.f32 %v3062, %v3046
        %v3064 = vadd.f32 %v3063, %v3050
        %v3065 = vrot.slane %v3064, 4
        %v3066 = vadd.f32 %v3064, %v3065
        %v3067 = vrot.slane %v3066, 2
        %v3068 = vadd.f32 %v3066, %v3067
        %v3069 = vrot.slane %v3068, 1
        %v3070 = vadd.f32 %v3068, %v3069
        %v3071 = vadd.f32 %v3039, %v3043
        %v3072 = vadd.f32 %v3071, %v3047
        %v3073 = vadd.f32 %v3072, %v3051
        %v3074 = vrot.slane %v3073, 4
        %v3075 = vadd.f32 %v3073, %v3074
        %v3076 = vrot.slane %v3075, 2
        %v3077 = vadd.f32 %v3075, %v3076
        %v3078 = vrot.slane %v3077, 1
        %v3079 = vadd.f32 %v3077, %v3078
        %v3080 = vadd.f32 %v3040, %v3044
        %v3081 = vadd.f32 %v3080, %v3048
        %v3082 = vadd.f32 %v3081, %v3052
        %v3083 = vrot.slane %v3082, 4
        %v3084 = vadd.f32 %v3082, %v3083
        %v3085 = vrot.slane %v3084, 2
        %v3086 = vadd.f32 %v3084, %v3085
        %v3087 = vrot.slane %v3086, 1
        %v3088 = vadd.f32 %v3086, %v3087
        %v3089 = vadd.f32 %v3013, %v3061
        %v3090 = vadd.f32 %v3014, %v3070
        %v3091 = vadd.f32 %v3015, %v3079
        %v3092 = vadd.f32 %v3016, %v3088
        %s3093 = scalar_lea.vmem %s229, 288
        %v3094 = vld [vmem:[%s3093] sm:$0xff]
        %v3095 = vld [vmem:[%s3093 + $0x8] sm:$0xff]
        %v3096 = vld [vmem:[%s3093 + $0x10] sm:$0xff]
        %v3097 = vld [vmem:[%s3093 + $0x18] sm:$0xff]
        %v3098 = vmul.f32 %v240, %v3094
        %v3099 = vmul.f32 %v240, %v3095
        %v3100 = vmul.f32 %v240, %v3096
        %v3101 = vmul.f32 %v240, %v3097
        %v3102 = vadd.f32 %v3098, %v245
        %v3103 = vadd.f32 %v3099, %v245
        %v3104 = vadd.f32 %v3100, %v245
        %v3105 = vadd.f32 %v3101, %v245
        %v3106 = vmul.f32 %v250, %v3094
        %v3107 = vmul.f32 %v250, %v3095
        %v3108 = vmul.f32 %v250, %v3096
        %v3109 = vmul.f32 %v250, %v3097
        %v3110 = vadd.f32 %v3106, %v255
        %v3111 = vadd.f32 %v3107, %v255
        %v3112 = vadd.f32 %v3108, %v255
        %v3113 = vadd.f32 %v3109, %v255
        %3115 = vset.pattern.permute.xlu0 0
        %3116 = vperm.xlu0 %3115, %v3102
        %v3117 = vpop.permute.xlu0 %3116
        %3120 = vset.pattern.permute.xlu0 0
        %3121 = vperm.xlu0 %3120, %v3103
        %v3122 = vpop.permute.xlu0 %3121
        %3125 = vset.pattern.permute.xlu0 0
        %3126 = vperm.xlu0 %3125, %v3104
        %v3127 = vpop.permute.xlu0 %3126
        %3130 = vset.pattern.permute.xlu0 0
        %3131 = vperm.xlu0 %3130, %v3105
        %v3132 = vpop.permute.xlu0 %3131
        %v3134 = vmul.f32 %v3117, %v281
        %v3135 = vmul.f32 %v3117, %v282
        %v3136 = vmul.f32 %v3117, %v283
        %v3137 = vmul.f32 %v3117, %v284
        %v3138 = vmul.f32 %v3122, %v281
        %v3139 = vmul.f32 %v3122, %v282
        %v3140 = vmul.f32 %v3122, %v283
        %v3141 = vmul.f32 %v3122, %v284
        %v3142 = vmul.f32 %v3127, %v281
        %v3143 = vmul.f32 %v3127, %v282
        %v3144 = vmul.f32 %v3127, %v283
        %v3145 = vmul.f32 %v3127, %v284
        %v3146 = vmul.f32 %v3132, %v281
        %v3147 = vmul.f32 %v3132, %v282
        %v3148 = vmul.f32 %v3132, %v283
        %v3149 = vmul.f32 %v3132, %v284
        %3151 = vset.pattern.permute.xlu0 0
        %3152 = vperm.xlu0 %3151, %v3110
        %v3153 = vpop.permute.xlu0 %3152
        %3156 = vset.pattern.permute.xlu0 0
        %3157 = vperm.xlu0 %3156, %v3111
        %v3158 = vpop.permute.xlu0 %3157
        %3161 = vset.pattern.permute.xlu0 0
        %3162 = vperm.xlu0 %3161, %v3112
        %v3163 = vpop.permute.xlu0 %3162
        %3166 = vset.pattern.permute.xlu0 0
        %3167 = vperm.xlu0 %3166, %v3113
        %v3168 = vpop.permute.xlu0 %3167
        %v3170 = vadd.f32 %v3134, %v3153
        %v3171 = vadd.f32 %v3135, %v3153
        %v3172 = vadd.f32 %v3136, %v3153
        %v3173 = vadd.f32 %v3137, %v3153
        %v3174 = vadd.f32 %v3138, %v3158
        %v3175 = vadd.f32 %v3139, %v3158
        %v3176 = vadd.f32 %v3140, %v3158
        %v3177 = vadd.f32 %v3141, %v3158
        %v3178 = vadd.f32 %v3142, %v3163
        %v3179 = vadd.f32 %v3143, %v3163
        %v3180 = vadd.f32 %v3144, %v3163
        %v3181 = vadd.f32 %v3145, %v3163
        %v3182 = vadd.f32 %v3146, %v3168
        %v3183 = vadd.f32 %v3147, %v3168
        %v3184 = vadd.f32 %v3148, %v3168
        %v3185 = vadd.f32 %v3149, %v3168
        %v3186 = vmax.f32 %v3170, %v3174
        %v3187 = vmax.f32 %v3186, %v3178
        %v3188 = vmax.f32 %v3187, %v3182
        %v3189 = vrot.slane %v3188, 4
        %v3190 = vmax.f32 %v3188, %v3189
        %v3191 = vrot.slane %v3190, 2
        %v3192 = vmax.f32 %v3190, %v3191
        %v3193 = vrot.slane %v3192, 1
        %v3194 = vmax.f32 %v3192, %v3193
        %v3195 = vmax.f32 %v3171, %v3175
        %v3196 = vmax.f32 %v3195, %v3179
        %v3197 = vmax.f32 %v3196, %v3183
        %v3198 = vrot.slane %v3197, 4
        %v3199 = vmax.f32 %v3197, %v3198
        %v3200 = vrot.slane %v3199, 2
        %v3201 = vmax.f32 %v3199, %v3200
        %v3202 = vrot.slane %v3201, 1
        %v3203 = vmax.f32 %v3201, %v3202
        %v3204 = vmax.f32 %v3172, %v3176
        %v3205 = vmax.f32 %v3204, %v3180
        %v3206 = vmax.f32 %v3205, %v3184
        %v3207 = vrot.slane %v3206, 4
        %v3208 = vmax.f32 %v3206, %v3207
        %v3209 = vrot.slane %v3208, 2
        %v3210 = vmax.f32 %v3208, %v3209
        %v3211 = vrot.slane %v3210, 1
        %v3212 = vmax.f32 %v3210, %v3211
        %v3213 = vmax.f32 %v3173, %v3177
        %v3214 = vmax.f32 %v3213, %v3181
        %v3215 = vmax.f32 %v3214, %v3185
        %v3216 = vrot.slane %v3215, 4
        %v3217 = vmax.f32 %v3215, %v3216
        %v3218 = vrot.slane %v3217, 2
        %v3219 = vmax.f32 %v3217, %v3218
        %v3220 = vrot.slane %v3219, 1
        %v3221 = vmax.f32 %v3219, %v3220
        %v3222 = vmax.f32 %v2905, %v3194
        %v3223 = vmax.f32 %v2906, %v3203
        %v3224 = vmax.f32 %v2907, %v3212
        %v3225 = vmax.f32 %v2908, %v3221
        %v3226 = vsub.f32 %v2905, %v3222
        %v3227 = vsub.f32 %v2906, %v3223
        %v3228 = vsub.f32 %v2907, %v3224
        %v3229 = vsub.f32 %v2908, %v3225
        %v3230 = vmul.f32 %v3226, 1.442695
        %v3231 = vpow.pop %v3230
        %v3232 = vmul.f32 %v3227, 1.442695
        %v3233 = vpow.pop %v3232
        %v3234 = vmul.f32 %v3228, 1.442695
        %v3235 = vpow.pop %v3234
        %v3236 = vmul.f32 %v3229, 1.442695
        %v3237 = vpow.pop %v3236
        %v3238 = vsub.f32 %v3170, %v3222
        %v3239 = vsub.f32 %v3171, %v3223
        %v3240 = vsub.f32 %v3172, %v3224
        %v3241 = vsub.f32 %v3173, %v3225
        %v3242 = vsub.f32 %v3174, %v3222
        %v3243 = vsub.f32 %v3175, %v3223
        %v3244 = vsub.f32 %v3176, %v3224
        %v3245 = vsub.f32 %v3177, %v3225
        %v3246 = vsub.f32 %v3178, %v3222
        %v3247 = vsub.f32 %v3179, %v3223
        %v3248 = vsub.f32 %v3180, %v3224
        %v3249 = vsub.f32 %v3181, %v3225
        %v3250 = vsub.f32 %v3182, %v3222
        %v3251 = vsub.f32 %v3183, %v3223
        %v3252 = vsub.f32 %v3184, %v3224
        %v3253 = vsub.f32 %v3185, %v3225
        %v3254 = vmul.f32 %v3238, 1.442695
        %v3255 = vpow.pop %v3254
        %v3256 = vmul.f32 %v3239, 1.442695
        %v3257 = vpow.pop %v3256
        %v3258 = vmul.f32 %v3240, 1.442695
        %v3259 = vpow.pop %v3258
        %v3260 = vmul.f32 %v3241, 1.442695
        %v3261 = vpow.pop %v3260
        %v3262 = vmul.f32 %v3242, 1.442695
        %v3263 = vpow.pop %v3262
        %v3264 = vmul.f32 %v3243, 1.442695
        %v3265 = vpow.pop %v3264
        %v3266 = vmul.f32 %v3244, 1.442695
        %v3267 = vpow.pop %v3266
        %v3268 = vmul.f32 %v3245, 1.442695
        %v3269 = vpow.pop %v3268
        %v3270 = vmul.f32 %v3246, 1.442695
        %v3271 = vpow.pop %v3270
        %v3272 = vmul.f32 %v3247, 1.442695
        %v3273 = vpow.pop %v3272
        %v3274 = vmul.f32 %v3248, 1.442695
        %v3275 = vpow.pop %v3274
        %v3276 = vmul.f32 %v3249, 1.442695
        %v3277 = vpow.pop %v3276
        %v3278 = vmul.f32 %v3250, 1.442695
        %v3279 = vpow.pop %v3278
        %v3280 = vmul.f32 %v3251, 1.442695
        %v3281 = vpow.pop %v3280
        %v3282 = vmul.f32 %v3252, 1.442695
        %v3283 = vpow.pop %v3282
        %v3284 = vmul.f32 %v3253, 1.442695
        %v3285 = vpow.pop %v3284
        %v3286 = vmul.f32 %v3231, %v3009
        %v3287 = vmul.f32 %v3233, %v3010
        %v3288 = vmul.f32 %v3235, %v3011
        %v3289 = vmul.f32 %v3237, %v3012
        %v3290 = vadd.f32 %v3255, %v3263
        %v3291 = vadd.f32 %v3290, %v3271
        %v3292 = vadd.f32 %v3291, %v3279
        %v3293 = vrot.slane %v3292, 4
        %v3294 = vadd.f32 %v3292, %v3293
        %v3295 = vrot.slane %v3294, 2
        %v3296 = vadd.f32 %v3294, %v3295
        %v3297 = vrot.slane %v3296, 1
        %v3298 = vadd.f32 %v3296, %v3297
        %v3299 = vadd.f32 %v3257, %v3265
        %v3300 = vadd.f32 %v3299, %v3273
        %v3301 = vadd.f32 %v3300, %v3281
        %v3302 = vrot.slane %v3301, 4
        %v3303 = vadd.f32 %v3301, %v3302
        %v3304 = vrot.slane %v3303, 2
        %v3305 = vadd.f32 %v3303, %v3304
        %v3306 = vrot.slane %v3305, 1
        %v3307 = vadd.f32 %v3305, %v3306
        %v3308 = vadd.f32 %v3259, %v3267
        %v3309 = vadd.f32 %v3308, %v3275
        %v3310 = vadd.f32 %v3309, %v3283
        %v3311 = vrot.slane %v3310, 4
        %v3312 = vadd.f32 %v3310, %v3311
        %v3313 = vrot.slane %v3312, 2
        %v3314 = vadd.f32 %v3312, %v3313
        %v3315 = vrot.slane %v3314, 1
        %v3316 = vadd.f32 %v3314, %v3315
        %v3317 = vadd.f32 %v3261, %v3269
        %v3318 = vadd.f32 %v3317, %v3277
        %v3319 = vadd.f32 %v3318, %v3285
        %v3320 = vrot.slane %v3319, 4
        %v3321 = vadd.f32 %v3319, %v3320
        %v3322 = vrot.slane %v3321, 2
        %v3323 = vadd.f32 %v3321, %v3322
        %v3324 = vrot.slane %v3323, 1
        %v3325 = vadd.f32 %v3323, %v3324
        %v3326 = vadd.f32 %v3286, %v3298
        %v3327 = vadd.f32 %v3287, %v3307
        %v3328 = vadd.f32 %v3288, %v3316
        %v3329 = vadd.f32 %v3289, %v3325
        %v3330 = vmul.f32 %v3231, %v3089
        %v3331 = vmul.f32 %v3233, %v3090
        %v3332 = vmul.f32 %v3235, %v3091
        %v3333 = vmul.f32 %v3237, %v3092
        %3335 = vset.pattern.permute.xlu0 0
        %3336 = vperm.xlu0 %3335, %v3094
        %v3337 = vpop.permute.xlu0 %3336
        %3340 = vset.pattern.permute.xlu0 0
        %3341 = vperm.xlu0 %3340, %v3095
        %v3342 = vpop.permute.xlu0 %3341
        %3345 = vset.pattern.permute.xlu0 0
        %3346 = vperm.xlu0 %3345, %v3096
        %v3347 = vpop.permute.xlu0 %3346
        %3350 = vset.pattern.permute.xlu0 0
        %3351 = vperm.xlu0 %3350, %v3097
        %v3352 = vpop.permute.xlu0 %3351
        %v3354 = vmul.f32 %v3255, %v3337
        %v3355 = vmul.f32 %v3257, %v3337
        %v3356 = vmul.f32 %v3259, %v3337
        %v3357 = vmul.f32 %v3261, %v3337
        %v3358 = vmul.f32 %v3263, %v3342
        %v3359 = vmul.f32 %v3265, %v3342
        %v3360 = vmul.f32 %v3267, %v3342
        %v3361 = vmul.f32 %v3269, %v3342
        %v3362 = vmul.f32 %v3271, %v3347
        %v3363 = vmul.f32 %v3273, %v3347
        %v3364 = vmul.f32 %v3275, %v3347
        %v3365 = vmul.f32 %v3277, %v3347
        %v3366 = vmul.f32 %v3279, %v3352
        %v3367 = vmul.f32 %v3281, %v3352
        %v3368 = vmul.f32 %v3283, %v3352
        %v3369 = vmul.f32 %v3285, %v3352
        %v3370 = vadd.f32 %v3354, %v3358
        %v3371 = vadd.f32 %v3370, %v3362
        %v3372 = vadd.f32 %v3371, %v3366
        %v3373 = vrot.slane %v3372, 4
        %v3374 = vadd.f32 %v3372, %v3373
        %v3375 = vrot.slane %v3374, 2
        %v3376 = vadd.f32 %v3374, %v3375
        %v3377 = vrot.slane %v3376, 1
        %v3378 = vadd.f32 %v3376, %v3377
        %v3379 = vadd.f32 %v3355, %v3359
        %v3380 = vadd.f32 %v3379, %v3363
        %v3381 = vadd.f32 %v3380, %v3367
        %v3382 = vrot.slane %v3381, 4
        %v3383 = vadd.f32 %v3381, %v3382
        %v3384 = vrot.slane %v3383, 2
        %v3385 = vadd.f32 %v3383, %v3384
        %v3386 = vrot.slane %v3385, 1
        %v3387 = vadd.f32 %v3385, %v3386
        %v3388 = vadd.f32 %v3356, %v3360
        %v3389 = vadd.f32 %v3388, %v3364
        %v3390 = vadd.f32 %v3389, %v3368
        %v3391 = vrot.slane %v3390, 4
        %v3392 = vadd.f32 %v3390, %v3391
        %v3393 = vrot.slane %v3392, 2
        %v3394 = vadd.f32 %v3392, %v3393
        %v3395 = vrot.slane %v3394, 1
        %v3396 = vadd.f32 %v3394, %v3395
        %v3397 = vadd.f32 %v3357, %v3361
        %v3398 = vadd.f32 %v3397, %v3365
        %v3399 = vadd.f32 %v3398, %v3369
        %v3400 = vrot.slane %v3399, 4
        %v3401 = vadd.f32 %v3399, %v3400
        %v3402 = vrot.slane %v3401, 2
        %v3403 = vadd.f32 %v3401, %v3402
        %v3404 = vrot.slane %v3403, 1
        %v3405 = vadd.f32 %v3403, %v3404
        %v3406 = vadd.f32 %v3330, %v3378
        %v3407 = vadd.f32 %v3331, %v3387
        %v3408 = vadd.f32 %v3332, %v3396
        %v3409 = vadd.f32 %v3333, %v3405
        %s3410 = scalar_lea.vmem %s229, 320
        %v3411 = vld [vmem:[%s3410] sm:$0xff]
        %v3412 = vld [vmem:[%s3410 + $0x8] sm:$0xff]
        %v3413 = vld [vmem:[%s3410 + $0x10] sm:$0xff]
        %v3414 = vld [vmem:[%s3410 + $0x18] sm:$0xff]
        %v3415 = vmul.f32 %v240, %v3411
        %v3416 = vmul.f32 %v240, %v3412
        %v3417 = vmul.f32 %v240, %v3413
        %v3418 = vmul.f32 %v240, %v3414
        %v3419 = vadd.f32 %v3415, %v245
        %v3420 = vadd.f32 %v3416, %v245
        %v3421 = vadd.f32 %v3417, %v245
        %v3422 = vadd.f32 %v3418, %v245
        %v3423 = vmul.f32 %v250, %v3411
        %v3424 = vmul.f32 %v250, %v3412
        %v3425 = vmul.f32 %v250, %v3413
        %v3426 = vmul.f32 %v250, %v3414
        %v3427 = vadd.f32 %v3423, %v255
        %v3428 = vadd.f32 %v3424, %v255
        %v3429 = vadd.f32 %v3425, %v255
        %v3430 = vadd.f32 %v3426, %v255
        %3432 = vset.pattern.permute.xlu0 0
        %3433 = vperm.xlu0 %3432, %v3419
        %v3434 = vpop.permute.xlu0 %3433
        %3437 = vset.pattern.permute.xlu0 0
        %3438 = vperm.xlu0 %3437, %v3420
        %v3439 = vpop.permute.xlu0 %3438
        %3442 = vset.pattern.permute.xlu0 0
        %3443 = vperm.xlu0 %3442, %v3421
        %v3444 = vpop.permute.xlu0 %3443
        %3447 = vset.pattern.permute.xlu0 0
        %3448 = vperm.xlu0 %3447, %v3422
        %v3449 = vpop.permute.xlu0 %3448
        %v3451 = vmul.f32 %v3434, %v281
        %v3452 = vmul.f32 %v3434, %v282
        %v3453 = vmul.f32 %v3434, %v283
        %v3454 = vmul.f32 %v3434, %v284
        %v3455 = vmul.f32 %v3439, %v281
        %v3456 = vmul.f32 %v3439, %v282
        %v3457 = vmul.f32 %v3439, %v283
        %v3458 = vmul.f32 %v3439, %v284
        %v3459 = vmul.f32 %v3444, %v281
        %v3460 = vmul.f32 %v3444, %v282
        %v3461 = vmul.f32 %v3444, %v283
        %v3462 = vmul.f32 %v3444, %v284
        %v3463 = vmul.f32 %v3449, %v281
        %v3464 = vmul.f32 %v3449, %v282
        %v3465 = vmul.f32 %v3449, %v283
        %v3466 = vmul.f32 %v3449, %v284
        %3468 = vset.pattern.permute.xlu0 0
        %3469 = vperm.xlu0 %3468, %v3427
        %v3470 = vpop.permute.xlu0 %3469
        %3473 = vset.pattern.permute.xlu0 0
        %3474 = vperm.xlu0 %3473, %v3428
        %v3475 = vpop.permute.xlu0 %3474
        %3478 = vset.pattern.permute.xlu0 0
        %3479 = vperm.xlu0 %3478, %v3429
        %v3480 = vpop.permute.xlu0 %3479
        %3483 = vset.pattern.permute.xlu0 0
        %3484 = vperm.xlu0 %3483, %v3430
        %v3485 = vpop.permute.xlu0 %3484
        %v3487 = vadd.f32 %v3451, %v3470
        %v3488 = vadd.f32 %v3452, %v3470
        %v3489 = vadd.f32 %v3453, %v3470
        %v3490 = vadd.f32 %v3454, %v3470
        %v3491 = vadd.f32 %v3455, %v3475
        %v3492 = vadd.f32 %v3456, %v3475
        %v3493 = vadd.f32 %v3457, %v3475
        %v3494 = vadd.f32 %v3458, %v3475
        %v3495 = vadd.f32 %v3459, %v3480
        %v3496 = vadd.f32 %v3460, %v3480
        %v3497 = vadd.f32 %v3461, %v3480
        %v3498 = vadd.f32 %v3462, %v3480
        %v3499 = vadd.f32 %v3463, %v3485
        %v3500 = vadd.f32 %v3464, %v3485
        %v3501 = vadd.f32 %v3465, %v3485
        %v3502 = vadd.f32 %v3466, %v3485
        %v3503 = vmax.f32 %v3487, %v3491
        %v3504 = vmax.f32 %v3503, %v3495
        %v3505 = vmax.f32 %v3504, %v3499
        %v3506 = vrot.slane %v3505, 4
        %v3507 = vmax.f32 %v3505, %v3506
        %v3508 = vrot.slane %v3507, 2
        %v3509 = vmax.f32 %v3507, %v3508
        %v3510 = vrot.slane %v3509, 1
        %v3511 = vmax.f32 %v3509, %v3510
        %v3512 = vmax.f32 %v3488, %v3492
        %v3513 = vmax.f32 %v3512, %v3496
        %v3514 = vmax.f32 %v3513, %v3500
        %v3515 = vrot.slane %v3514, 4
        %v3516 = vmax.f32 %v3514, %v3515
        %v3517 = vrot.slane %v3516, 2
        %v3518 = vmax.f32 %v3516, %v3517
        %v3519 = vrot.slane %v3518, 1
        %v3520 = vmax.f32 %v3518, %v3519
        %v3521 = vmax.f32 %v3489, %v3493
        %v3522 = vmax.f32 %v3521, %v3497
        %v3523 = vmax.f32 %v3522, %v3501
        %v3524 = vrot.slane %v3523, 4
        %v3525 = vmax.f32 %v3523, %v3524
        %v3526 = vrot.slane %v3525, 2
        %v3527 = vmax.f32 %v3525, %v3526
        %v3528 = vrot.slane %v3527, 1
        %v3529 = vmax.f32 %v3527, %v3528
        %v3530 = vmax.f32 %v3490, %v3494
        %v3531 = vmax.f32 %v3530, %v3498
        %v3532 = vmax.f32 %v3531, %v3502
        %v3533 = vrot.slane %v3532, 4
        %v3534 = vmax.f32 %v3532, %v3533
        %v3535 = vrot.slane %v3534, 2
        %v3536 = vmax.f32 %v3534, %v3535
        %v3537 = vrot.slane %v3536, 1
        %v3538 = vmax.f32 %v3536, %v3537
        %v3539 = vmax.f32 %v3222, %v3511
        %v3540 = vmax.f32 %v3223, %v3520
        %v3541 = vmax.f32 %v3224, %v3529
        %v3542 = vmax.f32 %v3225, %v3538
        %v3543 = vsub.f32 %v3222, %v3539
        %v3544 = vsub.f32 %v3223, %v3540
        %v3545 = vsub.f32 %v3224, %v3541
        %v3546 = vsub.f32 %v3225, %v3542
        %v3547 = vmul.f32 %v3543, 1.442695
        %v3548 = vpow.pop %v3547
        %v3549 = vmul.f32 %v3544, 1.442695
        %v3550 = vpow.pop %v3549
        %v3551 = vmul.f32 %v3545, 1.442695
        %v3552 = vpow.pop %v3551
        %v3553 = vmul.f32 %v3546, 1.442695
        %v3554 = vpow.pop %v3553
        %v3555 = vsub.f32 %v3487, %v3539
        %v3556 = vsub.f32 %v3488, %v3540
        %v3557 = vsub.f32 %v3489, %v3541
        %v3558 = vsub.f32 %v3490, %v3542
        %v3559 = vsub.f32 %v3491, %v3539
        %v3560 = vsub.f32 %v3492, %v3540
        %v3561 = vsub.f32 %v3493, %v3541
        %v3562 = vsub.f32 %v3494, %v3542
        %v3563 = vsub.f32 %v3495, %v3539
        %v3564 = vsub.f32 %v3496, %v3540
        %v3565 = vsub.f32 %v3497, %v3541
        %v3566 = vsub.f32 %v3498, %v3542
        %v3567 = vsub.f32 %v3499, %v3539
        %v3568 = vsub.f32 %v3500, %v3540
        %v3569 = vsub.f32 %v3501, %v3541
        %v3570 = vsub.f32 %v3502, %v3542
        %v3571 = vmul.f32 %v3555, 1.442695
        %v3572 = vpow.pop %v3571
        %v3573 = vmul.f32 %v3556, 1.442695
        %v3574 = vpow.pop %v3573
        %v3575 = vmul.f32 %v3557, 1.442695
        %v3576 = vpow.pop %v3575
        %v3577 = vmul.f32 %v3558, 1.442695
        %v3578 = vpow.pop %v3577
        %v3579 = vmul.f32 %v3559, 1.442695
        %v3580 = vpow.pop %v3579
        %v3581 = vmul.f32 %v3560, 1.442695
        %v3582 = vpow.pop %v3581
        %v3583 = vmul.f32 %v3561, 1.442695
        %v3584 = vpow.pop %v3583
        %v3585 = vmul.f32 %v3562, 1.442695
        %v3586 = vpow.pop %v3585
        %v3587 = vmul.f32 %v3563, 1.442695
        %v3588 = vpow.pop %v3587
        %v3589 = vmul.f32 %v3564, 1.442695
        %v3590 = vpow.pop %v3589
        %v3591 = vmul.f32 %v3565, 1.442695
        %v3592 = vpow.pop %v3591
        %v3593 = vmul.f32 %v3566, 1.442695
        %v3594 = vpow.pop %v3593
        %v3595 = vmul.f32 %v3567, 1.442695
        %v3596 = vpow.pop %v3595
        %v3597 = vmul.f32 %v3568, 1.442695
        %v3598 = vpow.pop %v3597
        %v3599 = vmul.f32 %v3569, 1.442695
        %v3600 = vpow.pop %v3599
        %v3601 = vmul.f32 %v3570, 1.442695
        %v3602 = vpow.pop %v3601
        %v3603 = vmul.f32 %v3548, %v3326
        %v3604 = vmul.f32 %v3550, %v3327
        %v3605 = vmul.f32 %v3552, %v3328
        %v3606 = vmul.f32 %v3554, %v3329
        %v3607 = vadd.f32 %v3572, %v3580
        %v3608 = vadd.f32 %v3607, %v3588
        %v3609 = vadd.f32 %v3608, %v3596
        %v3610 = vrot.slane %v3609, 4
        %v3611 = vadd.f32 %v3609, %v3610
        %v3612 = vrot.slane %v3611, 2
        %v3613 = vadd.f32 %v3611, %v3612
        %v3614 = vrot.slane %v3613, 1
        %v3615 = vadd.f32 %v3613, %v3614
        %v3616 = vadd.f32 %v3574, %v3582
        %v3617 = vadd.f32 %v3616, %v3590
        %v3618 = vadd.f32 %v3617, %v3598
        %v3619 = vrot.slane %v3618, 4
        %v3620 = vadd.f32 %v3618, %v3619
        %v3621 = vrot.slane %v3620, 2
        %v3622 = vadd.f32 %v3620, %v3621
        %v3623 = vrot.slane %v3622, 1
        %v3624 = vadd.f32 %v3622, %v3623
        %v3625 = vadd.f32 %v3576, %v3584
        %v3626 = vadd.f32 %v3625, %v3592
        %v3627 = vadd.f32 %v3626, %v3600
        %v3628 = vrot.slane %v3627, 4
        %v3629 = vadd.f32 %v3627, %v3628
        %v3630 = vrot.slane %v3629, 2
        %v3631 = vadd.f32 %v3629, %v3630
        %v3632 = vrot.slane %v3631, 1
        %v3633 = vadd.f32 %v3631, %v3632
        %v3634 = vadd.f32 %v3578, %v3586
        %v3635 = vadd.f32 %v3634, %v3594
        %v3636 = vadd.f32 %v3635, %v3602
        %v3637 = vrot.slane %v3636, 4
        %v3638 = vadd.f32 %v3636, %v3637
        %v3639 = vrot.slane %v3638, 2
        %v3640 = vadd.f32 %v3638, %v3639
        %v3641 = vrot.slane %v3640, 1
        %v3642 = vadd.f32 %v3640, %v3641
        %v3643 = vadd.f32 %v3603, %v3615
        %v3644 = vadd.f32 %v3604, %v3624
        %v3645 = vadd.f32 %v3605, %v3633
        %v3646 = vadd.f32 %v3606, %v3642
        %v3647 = vmul.f32 %v3548, %v3406
        %v3648 = vmul.f32 %v3550, %v3407
        %v3649 = vmul.f32 %v3552, %v3408
        %v3650 = vmul.f32 %v3554, %v3409
        %3652 = vset.pattern.permute.xlu0 0
        %3653 = vperm.xlu0 %3652, %v3411
        %v3654 = vpop.permute.xlu0 %3653
        %3657 = vset.pattern.permute.xlu0 0
        %3658 = vperm.xlu0 %3657, %v3412
        %v3659 = vpop.permute.xlu0 %3658
        %3662 = vset.pattern.permute.xlu0 0
        %3663 = vperm.xlu0 %3662, %v3413
        %v3664 = vpop.permute.xlu0 %3663
        %3667 = vset.pattern.permute.xlu0 0
        %3668 = vperm.xlu0 %3667, %v3414
        %v3669 = vpop.permute.xlu0 %3668
        %v3671 = vmul.f32 %v3572, %v3654
        %v3672 = vmul.f32 %v3574, %v3654
        %v3673 = vmul.f32 %v3576, %v3654
        %v3674 = vmul.f32 %v3578, %v3654
        %v3675 = vmul.f32 %v3580, %v3659
        %v3676 = vmul.f32 %v3582, %v3659
        %v3677 = vmul.f32 %v3584, %v3659
        %v3678 = vmul.f32 %v3586, %v3659
        %v3679 = vmul.f32 %v3588, %v3664
        %v3680 = vmul.f32 %v3590, %v3664
        %v3681 = vmul.f32 %v3592, %v3664
        %v3682 = vmul.f32 %v3594, %v3664
        %v3683 = vmul.f32 %v3596, %v3669
        %v3684 = vmul.f32 %v3598, %v3669
        %v3685 = vmul.f32 %v3600, %v3669
        %v3686 = vmul.f32 %v3602, %v3669
        %v3687 = vadd.f32 %v3671, %v3675
        %v3688 = vadd.f32 %v3687, %v3679
        %v3689 = vadd.f32 %v3688, %v3683
        %v3690 = vrot.slane %v3689, 4
        %v3691 = vadd.f32 %v3689, %v3690
        %v3692 = vrot.slane %v3691, 2
        %v3693 = vadd.f32 %v3691, %v3692
        %v3694 = vrot.slane %v3693, 1
        %v3695 = vadd.f32 %v3693, %v3694
        %v3696 = vadd.f32 %v3672, %v3676
        %v3697 = vadd.f32 %v3696, %v3680
        %v3698 = vadd.f32 %v3697, %v3684
        %v3699 = vrot.slane %v3698, 4
        %v3700 = vadd.f32 %v3698, %v3699
        %v3701 = vrot.slane %v3700, 2
        %v3702 = vadd.f32 %v3700, %v3701
        %v3703 = vrot.slane %v3702, 1
        %v3704 = vadd.f32 %v3702, %v3703
        %v3705 = vadd.f32 %v3673, %v3677
        %v3706 = vadd.f32 %v3705, %v3681
        %v3707 = vadd.f32 %v3706, %v3685
        %v3708 = vrot.slane %v3707, 4
        %v3709 = vadd.f32 %v3707, %v3708
        %v3710 = vrot.slane %v3709, 2
        %v3711 = vadd.f32 %v3709, %v3710
        %v3712 = vrot.slane %v3711, 1
        %v3713 = vadd.f32 %v3711, %v3712
        %v3714 = vadd.f32 %v3674, %v3678
        %v3715 = vadd.f32 %v3714, %v3682
        %v3716 = vadd.f32 %v3715, %v3686
        %v3717 = vrot.slane %v3716, 4
        %v3718 = vadd.f32 %v3716, %v3717
        %v3719 = vrot.slane %v3718, 2
        %v3720 = vadd.f32 %v3718, %v3719
        %v3721 = vrot.slane %v3720, 1
        %v3722 = vadd.f32 %v3720, %v3721
        %v3723 = vadd.f32 %v3647, %v3695
        %v3724 = vadd.f32 %v3648, %v3704
        %v3725 = vadd.f32 %v3649, %v3713
        %v3726 = vadd.f32 %v3650, %v3722
        %s3727 = scalar_lea.vmem %s229, 352
        %v3728 = vld [vmem:[%s3727] sm:$0xff]
        %v3729 = vld [vmem:[%s3727 + $0x8] sm:$0xff]
        %v3730 = vld [vmem:[%s3727 + $0x10] sm:$0xff]
        %v3731 = vld [vmem:[%s3727 + $0x18] sm:$0xff]
        %v3732 = vmul.f32 %v240, %v3728
        %v3733 = vmul.f32 %v240, %v3729
        %v3734 = vmul.f32 %v240, %v3730
        %v3735 = vmul.f32 %v240, %v3731
        %v3736 = vadd.f32 %v3732, %v245
        %v3737 = vadd.f32 %v3733, %v245
        %v3738 = vadd.f32 %v3734, %v245
        %v3739 = vadd.f32 %v3735, %v245
        %v3740 = vmul.f32 %v250, %v3728
        %v3741 = vmul.f32 %v250, %v3729
        %v3742 = vmul.f32 %v250, %v3730
        %v3743 = vmul.f32 %v250, %v3731
        %v3744 = vadd.f32 %v3740, %v255
        %v3745 = vadd.f32 %v3741, %v255
        %v3746 = vadd.f32 %v3742, %v255
        %v3747 = vadd.f32 %v3743, %v255
        %3749 = vset.pattern.permute.xlu0 0
        %3750 = vperm.xlu0 %3749, %v3736
        %v3751 = vpop.permute.xlu0 %3750
        %3754 = vset.pattern.permute.xlu0 0
        %3755 = vperm.xlu0 %3754, %v3737
        %v3756 = vpop.permute.xlu0 %3755
        %3759 = vset.pattern.permute.xlu0 0
        %3760 = vperm.xlu0 %3759, %v3738
        %v3761 = vpop.permute.xlu0 %3760
        %3764 = vset.pattern.permute.xlu0 0
        %3765 = vperm.xlu0 %3764, %v3739
        %v3766 = vpop.permute.xlu0 %3765
        %v3768 = vmul.f32 %v3751, %v281
        %v3769 = vmul.f32 %v3751, %v282
        %v3770 = vmul.f32 %v3751, %v283
        %v3771 = vmul.f32 %v3751, %v284
        %v3772 = vmul.f32 %v3756, %v281
        %v3773 = vmul.f32 %v3756, %v282
        %v3774 = vmul.f32 %v3756, %v283
        %v3775 = vmul.f32 %v3756, %v284
        %v3776 = vmul.f32 %v3761, %v281
        %v3777 = vmul.f32 %v3761, %v282
        %v3778 = vmul.f32 %v3761, %v283
        %v3779 = vmul.f32 %v3761, %v284
        %v3780 = vmul.f32 %v3766, %v281
        %v3781 = vmul.f32 %v3766, %v282
        %v3782 = vmul.f32 %v3766, %v283
        %v3783 = vmul.f32 %v3766, %v284
        %3785 = vset.pattern.permute.xlu0 0
        %3786 = vperm.xlu0 %3785, %v3744
        %v3787 = vpop.permute.xlu0 %3786
        %3790 = vset.pattern.permute.xlu0 0
        %3791 = vperm.xlu0 %3790, %v3745
        %v3792 = vpop.permute.xlu0 %3791
        %3795 = vset.pattern.permute.xlu0 0
        %3796 = vperm.xlu0 %3795, %v3746
        %v3797 = vpop.permute.xlu0 %3796
        %3800 = vset.pattern.permute.xlu0 0
        %3801 = vperm.xlu0 %3800, %v3747
        %v3802 = vpop.permute.xlu0 %3801
        %v3804 = vadd.f32 %v3768, %v3787
        %v3805 = vadd.f32 %v3769, %v3787
        %v3806 = vadd.f32 %v3770, %v3787
        %v3807 = vadd.f32 %v3771, %v3787
        %v3808 = vadd.f32 %v3772, %v3792
        %v3809 = vadd.f32 %v3773, %v3792
        %v3810 = vadd.f32 %v3774, %v3792
        %v3811 = vadd.f32 %v3775, %v3792
        %v3812 = vadd.f32 %v3776, %v3797
        %v3813 = vadd.f32 %v3777, %v3797
        %v3814 = vadd.f32 %v3778, %v3797
        %v3815 = vadd.f32 %v3779, %v3797
        %v3816 = vadd.f32 %v3780, %v3802
        %v3817 = vadd.f32 %v3781, %v3802
        %v3818 = vadd.f32 %v3782, %v3802
        %v3819 = vadd.f32 %v3783, %v3802
        %v3820 = vmax.f32 %v3804, %v3808
        %v3821 = vmax.f32 %v3820, %v3812
        %v3822 = vmax.f32 %v3821, %v3816
        %v3823 = vrot.slane %v3822, 4
        %v3824 = vmax.f32 %v3822, %v3823
        %v3825 = vrot.slane %v3824, 2
        %v3826 = vmax.f32 %v3824, %v3825
        %v3827 = vrot.slane %v3826, 1
        %v3828 = vmax.f32 %v3826, %v3827
        %v3829 = vmax.f32 %v3805, %v3809
        %v3830 = vmax.f32 %v3829, %v3813
        %v3831 = vmax.f32 %v3830, %v3817
        %v3832 = vrot.slane %v3831, 4
        %v3833 = vmax.f32 %v3831, %v3832
        %v3834 = vrot.slane %v3833, 2
        %v3835 = vmax.f32 %v3833, %v3834
        %v3836 = vrot.slane %v3835, 1
        %v3837 = vmax.f32 %v3835, %v3836
        %v3838 = vmax.f32 %v3806, %v3810
        %v3839 = vmax.f32 %v3838, %v3814
        %v3840 = vmax.f32 %v3839, %v3818
        %v3841 = vrot.slane %v3840, 4
        %v3842 = vmax.f32 %v3840, %v3841
        %v3843 = vrot.slane %v3842, 2
        %v3844 = vmax.f32 %v3842, %v3843
        %v3845 = vrot.slane %v3844, 1
        %v3846 = vmax.f32 %v3844, %v3845
        %v3847 = vmax.f32 %v3807, %v3811
        %v3848 = vmax.f32 %v3847, %v3815
        %v3849 = vmax.f32 %v3848, %v3819
        %v3850 = vrot.slane %v3849, 4
        %v3851 = vmax.f32 %v3849, %v3850
        %v3852 = vrot.slane %v3851, 2
        %v3853 = vmax.f32 %v3851, %v3852
        %v3854 = vrot.slane %v3853, 1
        %v3855 = vmax.f32 %v3853, %v3854
        %v3856 = vmax.f32 %v3539, %v3828
        %v3857 = vmax.f32 %v3540, %v3837
        %v3858 = vmax.f32 %v3541, %v3846
        %v3859 = vmax.f32 %v3542, %v3855
        %v3860 = vsub.f32 %v3539, %v3856
        %v3861 = vsub.f32 %v3540, %v3857
        %v3862 = vsub.f32 %v3541, %v3858
        %v3863 = vsub.f32 %v3542, %v3859
        %v3864 = vmul.f32 %v3860, 1.442695
        %v3865 = vpow.pop %v3864
        %v3866 = vmul.f32 %v3861, 1.442695
        %v3867 = vpow.pop %v3866
        %v3868 = vmul.f32 %v3862, 1.442695
        %v3869 = vpow.pop %v3868
        %v3870 = vmul.f32 %v3863, 1.442695
        %v3871 = vpow.pop %v3870
        %v3872 = vsub.f32 %v3804, %v3856
        %v3873 = vsub.f32 %v3805, %v3857
        %v3874 = vsub.f32 %v3806, %v3858
        %v3875 = vsub.f32 %v3807, %v3859
        %v3876 = vsub.f32 %v3808, %v3856
        %v3877 = vsub.f32 %v3809, %v3857
        %v3878 = vsub.f32 %v3810, %v3858
        %v3879 = vsub.f32 %v3811, %v3859
        %v3880 = vsub.f32 %v3812, %v3856
        %v3881 = vsub.f32 %v3813, %v3857
        %v3882 = vsub.f32 %v3814, %v3858
        %v3883 = vsub.f32 %v3815, %v3859
        %v3884 = vsub.f32 %v3816, %v3856
        %v3885 = vsub.f32 %v3817, %v3857
        %v3886 = vsub.f32 %v3818, %v3858
        %v3887 = vsub.f32 %v3819, %v3859
        %v3888 = vmul.f32 %v3872, 1.442695
        %v3889 = vpow.pop %v3888
        %v3890 = vmul.f32 %v3873, 1.442695
        %v3891 = vpow.pop %v3890
        %v3892 = vmul.f32 %v3874, 1.442695
        %v3893 = vpow.pop %v3892
        %v3894 = vmul.f32 %v3875, 1.442695
        %v3895 = vpow.pop %v3894
        %v3896 = vmul.f32 %v3876, 1.442695
        %v3897 = vpow.pop %v3896
        %v3898 = vmul.f32 %v3877, 1.442695
        %v3899 = vpow.pop %v3898
        %v3900 = vmul.f32 %v3878, 1.442695
        %v3901 = vpow.pop %v3900
        %v3902 = vmul.f32 %v3879, 1.442695
        %v3903 = vpow.pop %v3902
        %v3904 = vmul.f32 %v3880, 1.442695
        %v3905 = vpow.pop %v3904
        %v3906 = vmul.f32 %v3881, 1.442695
        %v3907 = vpow.pop %v3906
        %v3908 = vmul.f32 %v3882, 1.442695
        %v3909 = vpow.pop %v3908
        %v3910 = vmul.f32 %v3883, 1.442695
        %v3911 = vpow.pop %v3910
        %v3912 = vmul.f32 %v3884, 1.442695
        %v3913 = vpow.pop %v3912
        %v3914 = vmul.f32 %v3885, 1.442695
        %v3915 = vpow.pop %v3914
        %v3916 = vmul.f32 %v3886, 1.442695
        %v3917 = vpow.pop %v3916
        %v3918 = vmul.f32 %v3887, 1.442695
        %v3919 = vpow.pop %v3918
        %v3920 = vmul.f32 %v3865, %v3643
        %v3921 = vmul.f32 %v3867, %v3644
        %v3922 = vmul.f32 %v3869, %v3645
        %v3923 = vmul.f32 %v3871, %v3646
        %v3924 = vadd.f32 %v3889, %v3897
        %v3925 = vadd.f32 %v3924, %v3905
        %v3926 = vadd.f32 %v3925, %v3913
        %v3927 = vrot.slane %v3926, 4
        %v3928 = vadd.f32 %v3926, %v3927
        %v3929 = vrot.slane %v3928, 2
        %v3930 = vadd.f32 %v3928, %v3929
        %v3931 = vrot.slane %v3930, 1
        %v3932 = vadd.f32 %v3930, %v3931
        %v3933 = vadd.f32 %v3891, %v3899
        %v3934 = vadd.f32 %v3933, %v3907
        %v3935 = vadd.f32 %v3934, %v3915
        %v3936 = vrot.slane %v3935, 4
        %v3937 = vadd.f32 %v3935, %v3936
        %v3938 = vrot.slane %v3937, 2
        %v3939 = vadd.f32 %v3937, %v3938
        %v3940 = vrot.slane %v3939, 1
        %v3941 = vadd.f32 %v3939, %v3940
        %v3942 = vadd.f32 %v3893, %v3901
        %v3943 = vadd.f32 %v3942, %v3909
        %v3944 = vadd.f32 %v3943, %v3917
        %v3945 = vrot.slane %v3944, 4
        %v3946 = vadd.f32 %v3944, %v3945
        %v3947 = vrot.slane %v3946, 2
        %v3948 = vadd.f32 %v3946, %v3947
        %v3949 = vrot.slane %v3948, 1
        %v3950 = vadd.f32 %v3948, %v3949
        %v3951 = vadd.f32 %v3895, %v3903
        %v3952 = vadd.f32 %v3951, %v3911
        %v3953 = vadd.f32 %v3952, %v3919
        %v3954 = vrot.slane %v3953, 4
        %v3955 = vadd.f32 %v3953, %v3954
        %v3956 = vrot.slane %v3955, 2
        %v3957 = vadd.f32 %v3955, %v3956
        %v3958 = vrot.slane %v3957, 1
        %v3959 = vadd.f32 %v3957, %v3958
        %v3960 = vadd.f32 %v3920, %v3932
        %v3961 = vadd.f32 %v3921, %v3941
        %v3962 = vadd.f32 %v3922, %v3950
        %v3963 = vadd.f32 %v3923, %v3959
        %v3964 = vmul.f32 %v3865, %v3723
        %v3965 = vmul.f32 %v3867, %v3724
        %v3966 = vmul.f32 %v3869, %v3725
        %v3967 = vmul.f32 %v3871, %v3726
        %3969 = vset.pattern.permute.xlu0 0
        %3970 = vperm.xlu0 %3969, %v3728
        %v3971 = vpop.permute.xlu0 %3970
        %3974 = vset.pattern.permute.xlu0 0
        %3975 = vperm.xlu0 %3974, %v3729
        %v3976 = vpop.permute.xlu0 %3975
        %3979 = vset.pattern.permute.xlu0 0
        %3980 = vperm.xlu0 %3979, %v3730
        %v3981 = vpop.permute.xlu0 %3980
        %3984 = vset.pattern.permute.xlu0 0
        %3985 = vperm.xlu0 %3984, %v3731
        %v3986 = vpop.permute.xlu0 %3985
        %v3988 = vmul.f32 %v3889, %v3971
        %v3989 = vmul.f32 %v3891, %v3971
        %v3990 = vmul.f32 %v3893, %v3971
        %v3991 = vmul.f32 %v3895, %v3971
        %v3992 = vmul.f32 %v3897, %v3976
        %v3993 = vmul.f32 %v3899, %v3976
        %v3994 = vmul.f32 %v3901, %v3976
        %v3995 = vmul.f32 %v3903, %v3976
        %v3996 = vmul.f32 %v3905, %v3981
        %v3997 = vmul.f32 %v3907, %v3981
        %v3998 = vmul.f32 %v3909, %v3981
        %v3999 = vmul.f32 %v3911, %v3981
        %v4000 = vmul.f32 %v3913, %v3986
        %v4001 = vmul.f32 %v3915, %v3986
        %v4002 = vmul.f32 %v3917, %v3986
        %v4003 = vmul.f32 %v3919, %v3986
        %v4004 = vadd.f32 %v3988, %v3992
        %v4005 = vadd.f32 %v4004, %v3996
        %v4006 = vadd.f32 %v4005, %v4000
        %v4007 = vrot.slane %v4006, 4
        %v4008 = vadd.f32 %v4006, %v4007
        %v4009 = vrot.slane %v4008, 2
        %v4010 = vadd.f32 %v4008, %v4009
        %v4011 = vrot.slane %v4010, 1
        %v4012 = vadd.f32 %v4010, %v4011
        %v4013 = vadd.f32 %v3989, %v3993
        %v4014 = vadd.f32 %v4013, %v3997
        %v4015 = vadd.f32 %v4014, %v4001
        %v4016 = vrot.slane %v4015, 4
        %v4017 = vadd.f32 %v4015, %v4016
        %v4018 = vrot.slane %v4017, 2
        %v4019 = vadd.f32 %v4017, %v4018
        %v4020 = vrot.slane %v4019, 1
        %v4021 = vadd.f32 %v4019, %v4020
        %v4022 = vadd.f32 %v3990, %v3994
        %v4023 = vadd.f32 %v4022, %v3998
        %v4024 = vadd.f32 %v4023, %v4002
        %v4025 = vrot.slane %v4024, 4
        %v4026 = vadd.f32 %v4024, %v4025
        %v4027 = vrot.slane %v4026, 2
        %v4028 = vadd.f32 %v4026, %v4027
        %v4029 = vrot.slane %v4028, 1
        %v4030 = vadd.f32 %v4028, %v4029
        %v4031 = vadd.f32 %v3991, %v3995
        %v4032 = vadd.f32 %v4031, %v3999
        %v4033 = vadd.f32 %v4032, %v4003
        %v4034 = vrot.slane %v4033, 4
        %v4035 = vadd.f32 %v4033, %v4034
        %v4036 = vrot.slane %v4035, 2
        %v4037 = vadd.f32 %v4035, %v4036
        %v4038 = vrot.slane %v4037, 1
        %v4039 = vadd.f32 %v4037, %v4038
        %v4040 = vadd.f32 %v3964, %v4012
        %v4041 = vadd.f32 %v3965, %v4021
        %v4042 = vadd.f32 %v3966, %v4030
        %v4043 = vadd.f32 %v3967, %v4039
        %s4044 = scalar_lea.vmem %s229, 384
        %v4045 = vld [vmem:[%s4044] sm:$0xff]
        %v4046 = vld [vmem:[%s4044 + $0x8] sm:$0xff]
        %v4047 = vld [vmem:[%s4044 + $0x10] sm:$0xff]
        %v4048 = vld [vmem:[%s4044 + $0x18] sm:$0xff]
        %v4049 = vmul.f32 %v240, %v4045
        %v4050 = vmul.f32 %v240, %v4046
        %v4051 = vmul.f32 %v240, %v4047
        %v4052 = vmul.f32 %v240, %v4048
        %v4053 = vadd.f32 %v4049, %v245
        %v4054 = vadd.f32 %v4050, %v245
        %v4055 = vadd.f32 %v4051, %v245
        %v4056 = vadd.f32 %v4052, %v245
        %v4057 = vmul.f32 %v250, %v4045
        %v4058 = vmul.f32 %v250, %v4046
        %v4059 = vmul.f32 %v250, %v4047
        %v4060 = vmul.f32 %v250, %v4048
        %v4061 = vadd.f32 %v4057, %v255
        %v4062 = vadd.f32 %v4058, %v255
        %v4063 = vadd.f32 %v4059, %v255
        %v4064 = vadd.f32 %v4060, %v255
        %4066 = vset.pattern.permute.xlu0 0
        %4067 = vperm.xlu0 %4066, %v4053
        %v4068 = vpop.permute.xlu0 %4067
        %4071 = vset.pattern.permute.xlu0 0
        %4072 = vperm.xlu0 %4071, %v4054
        %v4073 = vpop.permute.xlu0 %4072
        %4076 = vset.pattern.permute.xlu0 0
        %4077 = vperm.xlu0 %4076, %v4055
        %v4078 = vpop.permute.xlu0 %4077
        %4081 = vset.pattern.permute.xlu0 0
        %4082 = vperm.xlu0 %4081, %v4056
        %v4083 = vpop.permute.xlu0 %4082
        %v4085 = vmul.f32 %v4068, %v281
        %v4086 = vmul.f32 %v4068, %v282
        %v4087 = vmul.f32 %v4068, %v283
        %v4088 = vmul.f32 %v4068, %v284
        %v4089 = vmul.f32 %v4073, %v281
        %v4090 = vmul.f32 %v4073, %v282
        %v4091 = vmul.f32 %v4073, %v283
        %v4092 = vmul.f32 %v4073, %v284
        %v4093 = vmul.f32 %v4078, %v281
        %v4094 = vmul.f32 %v4078, %v282
        %v4095 = vmul.f32 %v4078, %v283
        %v4096 = vmul.f32 %v4078, %v284
        %v4097 = vmul.f32 %v4083, %v281
        %v4098 = vmul.f32 %v4083, %v282
        %v4099 = vmul.f32 %v4083, %v283
        %v4100 = vmul.f32 %v4083, %v284
        %4102 = vset.pattern.permute.xlu0 0
        %4103 = vperm.xlu0 %4102, %v4061
        %v4104 = vpop.permute.xlu0 %4103
        %4107 = vset.pattern.permute.xlu0 0
        %4108 = vperm.xlu0 %4107, %v4062
        %v4109 = vpop.permute.xlu0 %4108
        %4112 = vset.pattern.permute.xlu0 0
        %4113 = vperm.xlu0 %4112, %v4063
        %v4114 = vpop.permute.xlu0 %4113
        %4117 = vset.pattern.permute.xlu0 0
        %4118 = vperm.xlu0 %4117, %v4064
        %v4119 = vpop.permute.xlu0 %4118
        %v4121 = vadd.f32 %v4085, %v4104
        %v4122 = vadd.f32 %v4086, %v4104
        %v4123 = vadd.f32 %v4087, %v4104
        %v4124 = vadd.f32 %v4088, %v4104
        %v4125 = vadd.f32 %v4089, %v4109
        %v4126 = vadd.f32 %v4090, %v4109
        %v4127 = vadd.f32 %v4091, %v4109
        %v4128 = vadd.f32 %v4092, %v4109
        %v4129 = vadd.f32 %v4093, %v4114
        %v4130 = vadd.f32 %v4094, %v4114
        %v4131 = vadd.f32 %v4095, %v4114
        %v4132 = vadd.f32 %v4096, %v4114
        %v4133 = vadd.f32 %v4097, %v4119
        %v4134 = vadd.f32 %v4098, %v4119
        %v4135 = vadd.f32 %v4099, %v4119
        %v4136 = vadd.f32 %v4100, %v4119
        %v4137 = vmax.f32 %v4121, %v4125
        %v4138 = vmax.f32 %v4137, %v4129
        %v4139 = vmax.f32 %v4138, %v4133
        %v4140 = vrot.slane %v4139, 4
        %v4141 = vmax.f32 %v4139, %v4140
        %v4142 = vrot.slane %v4141, 2
        %v4143 = vmax.f32 %v4141, %v4142
        %v4144 = vrot.slane %v4143, 1
        %v4145 = vmax.f32 %v4143, %v4144
        %v4146 = vmax.f32 %v4122, %v4126
        %v4147 = vmax.f32 %v4146, %v4130
        %v4148 = vmax.f32 %v4147, %v4134
        %v4149 = vrot.slane %v4148, 4
        %v4150 = vmax.f32 %v4148, %v4149
        %v4151 = vrot.slane %v4150, 2
        %v4152 = vmax.f32 %v4150, %v4151
        %v4153 = vrot.slane %v4152, 1
        %v4154 = vmax.f32 %v4152, %v4153
        %v4155 = vmax.f32 %v4123, %v4127
        %v4156 = vmax.f32 %v4155, %v4131
        %v4157 = vmax.f32 %v4156, %v4135
        %v4158 = vrot.slane %v4157, 4
        %v4159 = vmax.f32 %v4157, %v4158
        %v4160 = vrot.slane %v4159, 2
        %v4161 = vmax.f32 %v4159, %v4160
        %v4162 = vrot.slane %v4161, 1
        %v4163 = vmax.f32 %v4161, %v4162
        %v4164 = vmax.f32 %v4124, %v4128
        %v4165 = vmax.f32 %v4164, %v4132
        %v4166 = vmax.f32 %v4165, %v4136
        %v4167 = vrot.slane %v4166, 4
        %v4168 = vmax.f32 %v4166, %v4167
        %v4169 = vrot.slane %v4168, 2
        %v4170 = vmax.f32 %v4168, %v4169
        %v4171 = vrot.slane %v4170, 1
        %v4172 = vmax.f32 %v4170, %v4171
        %v4173 = vmax.f32 %v3856, %v4145
        %v4174 = vmax.f32 %v3857, %v4154
        %v4175 = vmax.f32 %v3858, %v4163
        %v4176 = vmax.f32 %v3859, %v4172
        %v4177 = vsub.f32 %v3856, %v4173
        %v4178 = vsub.f32 %v3857, %v4174
        %v4179 = vsub.f32 %v3858, %v4175
        %v4180 = vsub.f32 %v3859, %v4176
        %v4181 = vmul.f32 %v4177, 1.442695
        %v4182 = vpow.pop %v4181
        %v4183 = vmul.f32 %v4178, 1.442695
        %v4184 = vpow.pop %v4183
        %v4185 = vmul.f32 %v4179, 1.442695
        %v4186 = vpow.pop %v4185
        %v4187 = vmul.f32 %v4180, 1.442695
        %v4188 = vpow.pop %v4187
        %v4189 = vsub.f32 %v4121, %v4173
        %v4190 = vsub.f32 %v4122, %v4174
        %v4191 = vsub.f32 %v4123, %v4175
        %v4192 = vsub.f32 %v4124, %v4176
        %v4193 = vsub.f32 %v4125, %v4173
        %v4194 = vsub.f32 %v4126, %v4174
        %v4195 = vsub.f32 %v4127, %v4175
        %v4196 = vsub.f32 %v4128, %v4176
        %v4197 = vsub.f32 %v4129, %v4173
        %v4198 = vsub.f32 %v4130, %v4174
        %v4199 = vsub.f32 %v4131, %v4175
        %v4200 = vsub.f32 %v4132, %v4176
        %v4201 = vsub.f32 %v4133, %v4173
        %v4202 = vsub.f32 %v4134, %v4174
        %v4203 = vsub.f32 %v4135, %v4175
        %v4204 = vsub.f32 %v4136, %v4176
        %v4205 = vmul.f32 %v4189, 1.442695
        %v4206 = vpow.pop %v4205
        %v4207 = vmul.f32 %v4190, 1.442695
        %v4208 = vpow.pop %v4207
        %v4209 = vmul.f32 %v4191, 1.442695
        %v4210 = vpow.pop %v4209
        %v4211 = vmul.f32 %v4192, 1.442695
        %v4212 = vpow.pop %v4211
        %v4213 = vmul.f32 %v4193, 1.442695
        %v4214 = vpow.pop %v4213
        %v4215 = vmul.f32 %v4194, 1.442695
        %v4216 = vpow.pop %v4215
        %v4217 = vmul.f32 %v4195, 1.442695
        %v4218 = vpow.pop %v4217
        %v4219 = vmul.f32 %v4196, 1.442695
        %v4220 = vpow.pop %v4219
        %v4221 = vmul.f32 %v4197, 1.442695
        %v4222 = vpow.pop %v4221
        %v4223 = vmul.f32 %v4198, 1.442695
        %v4224 = vpow.pop %v4223
        %v4225 = vmul.f32 %v4199, 1.442695
        %v4226 = vpow.pop %v4225
        %v4227 = vmul.f32 %v4200, 1.442695
        %v4228 = vpow.pop %v4227
        %v4229 = vmul.f32 %v4201, 1.442695
        %v4230 = vpow.pop %v4229
        %v4231 = vmul.f32 %v4202, 1.442695
        %v4232 = vpow.pop %v4231
        %v4233 = vmul.f32 %v4203, 1.442695
        %v4234 = vpow.pop %v4233
        %v4235 = vmul.f32 %v4204, 1.442695
        %v4236 = vpow.pop %v4235
        %v4237 = vmul.f32 %v4182, %v3960
        %v4238 = vmul.f32 %v4184, %v3961
        %v4239 = vmul.f32 %v4186, %v3962
        %v4240 = vmul.f32 %v4188, %v3963
        %v4241 = vadd.f32 %v4206, %v4214
        %v4242 = vadd.f32 %v4241, %v4222
        %v4243 = vadd.f32 %v4242, %v4230
        %v4244 = vrot.slane %v4243, 4
        %v4245 = vadd.f32 %v4243, %v4244
        %v4246 = vrot.slane %v4245, 2
        %v4247 = vadd.f32 %v4245, %v4246
        %v4248 = vrot.slane %v4247, 1
        %v4249 = vadd.f32 %v4247, %v4248
        %v4250 = vadd.f32 %v4208, %v4216
        %v4251 = vadd.f32 %v4250, %v4224
        %v4252 = vadd.f32 %v4251, %v4232
        %v4253 = vrot.slane %v4252, 4
        %v4254 = vadd.f32 %v4252, %v4253
        %v4255 = vrot.slane %v4254, 2
        %v4256 = vadd.f32 %v4254, %v4255
        %v4257 = vrot.slane %v4256, 1
        %v4258 = vadd.f32 %v4256, %v4257
        %v4259 = vadd.f32 %v4210, %v4218
        %v4260 = vadd.f32 %v4259, %v4226
        %v4261 = vadd.f32 %v4260, %v4234
        %v4262 = vrot.slane %v4261, 4
        %v4263 = vadd.f32 %v4261, %v4262
        %v4264 = vrot.slane %v4263, 2
        %v4265 = vadd.f32 %v4263, %v4264
        %v4266 = vrot.slane %v4265, 1
        %v4267 = vadd.f32 %v4265, %v4266
        %v4268 = vadd.f32 %v4212, %v4220
        %v4269 = vadd.f32 %v4268, %v4228
        %v4270 = vadd.f32 %v4269, %v4236
        %v4271 = vrot.slane %v4270, 4
        %v4272 = vadd.f32 %v4270, %v4271
        %v4273 = vrot.slane %v4272, 2
        %v4274 = vadd.f32 %v4272, %v4273
        %v4275 = vrot.slane %v4274, 1
        %v4276 = vadd.f32 %v4274, %v4275
        %v4277 = vadd.f32 %v4237, %v4249
        %v4278 = vadd.f32 %v4238, %v4258
        %v4279 = vadd.f32 %v4239, %v4267
        %v4280 = vadd.f32 %v4240, %v4276
        %v4281 = vmul.f32 %v4182, %v4040
        %v4282 = vmul.f32 %v4184, %v4041
        %v4283 = vmul.f32 %v4186, %v4042
        %v4284 = vmul.f32 %v4188, %v4043
        %4286 = vset.pattern.permute.xlu0 0
        %4287 = vperm.xlu0 %4286, %v4045
        %v4288 = vpop.permute.xlu0 %4287
        %4291 = vset.pattern.permute.xlu0 0
        %4292 = vperm.xlu0 %4291, %v4046
        %v4293 = vpop.permute.xlu0 %4292
        %4296 = vset.pattern.permute.xlu0 0
        %4297 = vperm.xlu0 %4296, %v4047
        %v4298 = vpop.permute.xlu0 %4297
        %4301 = vset.pattern.permute.xlu0 0
        %4302 = vperm.xlu0 %4301, %v4048
        %v4303 = vpop.permute.xlu0 %4302
        %v4305 = vmul.f32 %v4206, %v4288
        %v4306 = vmul.f32 %v4208, %v4288
        %v4307 = vmul.f32 %v4210, %v4288
        %v4308 = vmul.f32 %v4212, %v4288
        %v4309 = vmul.f32 %v4214, %v4293
        %v4310 = vmul.f32 %v4216, %v4293
        %v4311 = vmul.f32 %v4218, %v4293
        %v4312 = vmul.f32 %v4220, %v4293
        %v4313 = vmul.f32 %v4222, %v4298
        %v4314 = vmul.f32 %v4224, %v4298
        %v4315 = vmul.f32 %v4226, %v4298
        %v4316 = vmul.f32 %v4228, %v4298
        %v4317 = vmul.f32 %v4230, %v4303
        %v4318 = vmul.f32 %v4232, %v4303
        %v4319 = vmul.f32 %v4234, %v4303
        %v4320 = vmul.f32 %v4236, %v4303
        %v4321 = vadd.f32 %v4305, %v4309
        %v4322 = vadd.f32 %v4321, %v4313
        %v4323 = vadd.f32 %v4322, %v4317
        %v4324 = vrot.slane %v4323, 4
        %v4325 = vadd.f32 %v4323, %v4324
        %v4326 = vrot.slane %v4325, 2
        %v4327 = vadd.f32 %v4325, %v4326
        %v4328 = vrot.slane %v4327, 1
        %v4329 = vadd.f32 %v4327, %v4328
        %v4330 = vadd.f32 %v4306, %v4310
        %v4331 = vadd.f32 %v4330, %v4314
        %v4332 = vadd.f32 %v4331, %v4318
        %v4333 = vrot.slane %v4332, 4
        %v4334 = vadd.f32 %v4332, %v4333
        %v4335 = vrot.slane %v4334, 2
        %v4336 = vadd.f32 %v4334, %v4335
        %v4337 = vrot.slane %v4336, 1
        %v4338 = vadd.f32 %v4336, %v4337
        %v4339 = vadd.f32 %v4307, %v4311
        %v4340 = vadd.f32 %v4339, %v4315
        %v4341 = vadd.f32 %v4340, %v4319
        %v4342 = vrot.slane %v4341, 4
        %v4343 = vadd.f32 %v4341, %v4342
        %v4344 = vrot.slane %v4343, 2
        %v4345 = vadd.f32 %v4343, %v4344
        %v4346 = vrot.slane %v4345, 1
        %v4347 = vadd.f32 %v4345, %v4346
        %v4348 = vadd.f32 %v4308, %v4312
        %v4349 = vadd.f32 %v4348, %v4316
        %v4350 = vadd.f32 %v4349, %v4320
        %v4351 = vrot.slane %v4350, 4
        %v4352 = vadd.f32 %v4350, %v4351
        %v4353 = vrot.slane %v4352, 2
        %v4354 = vadd.f32 %v4352, %v4353
        %v4355 = vrot.slane %v4354, 1
        %v4356 = vadd.f32 %v4354, %v4355
        %v4357 = vadd.f32 %v4281, %v4329
        %v4358 = vadd.f32 %v4282, %v4338
        %v4359 = vadd.f32 %v4283, %v4347
        %v4360 = vadd.f32 %v4284, %v4356
        %s4361 = scalar_lea.vmem %s229, 416
        %v4362 = vld [vmem:[%s4361] sm:$0xff]
        %v4363 = vld [vmem:[%s4361 + $0x8] sm:$0xff]
        %v4364 = vld [vmem:[%s4361 + $0x10] sm:$0xff]
        %v4365 = vld [vmem:[%s4361 + $0x18] sm:$0xff]
        %v4366 = vmul.f32 %v240, %v4362
        %v4367 = vmul.f32 %v240, %v4363
        %v4368 = vmul.f32 %v240, %v4364
        %v4369 = vmul.f32 %v240, %v4365
        %v4370 = vadd.f32 %v4366, %v245
        %v4371 = vadd.f32 %v4367, %v245
        %v4372 = vadd.f32 %v4368, %v245
        %v4373 = vadd.f32 %v4369, %v245
        %v4374 = vmul.f32 %v250, %v4362
        %v4375 = vmul.f32 %v250, %v4363
        %v4376 = vmul.f32 %v250, %v4364
        %v4377 = vmul.f32 %v250, %v4365
        %v4378 = vadd.f32 %v4374, %v255
        %v4379 = vadd.f32 %v4375, %v255
        %v4380 = vadd.f32 %v4376, %v255
        %v4381 = vadd.f32 %v4377, %v255
        %4383 = vset.pattern.permute.xlu0 0
        %4384 = vperm.xlu0 %4383, %v4370
        %v4385 = vpop.permute.xlu0 %4384
        %4388 = vset.pattern.permute.xlu0 0
        %4389 = vperm.xlu0 %4388, %v4371
        %v4390 = vpop.permute.xlu0 %4389
        %4393 = vset.pattern.permute.xlu0 0
        %4394 = vperm.xlu0 %4393, %v4372
        %v4395 = vpop.permute.xlu0 %4394
        %4398 = vset.pattern.permute.xlu0 0
        %4399 = vperm.xlu0 %4398, %v4373
        %v4400 = vpop.permute.xlu0 %4399
        %v4402 = vmul.f32 %v4385, %v281
        %v4403 = vmul.f32 %v4385, %v282
        %v4404 = vmul.f32 %v4385, %v283
        %v4405 = vmul.f32 %v4385, %v284
        %v4406 = vmul.f32 %v4390, %v281
        %v4407 = vmul.f32 %v4390, %v282
        %v4408 = vmul.f32 %v4390, %v283
        %v4409 = vmul.f32 %v4390, %v284
        %v4410 = vmul.f32 %v4395, %v281
        %v4411 = vmul.f32 %v4395, %v282
        %v4412 = vmul.f32 %v4395, %v283
        %v4413 = vmul.f32 %v4395, %v284
        %v4414 = vmul.f32 %v4400, %v281
        %v4415 = vmul.f32 %v4400, %v282
        %v4416 = vmul.f32 %v4400, %v283
        %v4417 = vmul.f32 %v4400, %v284
        %4419 = vset.pattern.permute.xlu0 0
        %4420 = vperm.xlu0 %4419, %v4378
        %v4421 = vpop.permute.xlu0 %4420
        %4424 = vset.pattern.permute.xlu0 0
        %4425 = vperm.xlu0 %4424, %v4379
        %v4426 = vpop.permute.xlu0 %4425
        %4429 = vset.pattern.permute.xlu0 0
        %4430 = vperm.xlu0 %4429, %v4380
        %v4431 = vpop.permute.xlu0 %4430
        %4434 = vset.pattern.permute.xlu0 0
        %4435 = vperm.xlu0 %4434, %v4381
        %v4436 = vpop.permute.xlu0 %4435
        %v4438 = vadd.f32 %v4402, %v4421
        %v4439 = vadd.f32 %v4403, %v4421
        %v4440 = vadd.f32 %v4404, %v4421
        %v4441 = vadd.f32 %v4405, %v4421
        %v4442 = vadd.f32 %v4406, %v4426
        %v4443 = vadd.f32 %v4407, %v4426
        %v4444 = vadd.f32 %v4408, %v4426
        %v4445 = vadd.f32 %v4409, %v4426
        %v4446 = vadd.f32 %v4410, %v4431
        %v4447 = vadd.f32 %v4411, %v4431
        %v4448 = vadd.f32 %v4412, %v4431
        %v4449 = vadd.f32 %v4413, %v4431
        %v4450 = vadd.f32 %v4414, %v4436
        %v4451 = vadd.f32 %v4415, %v4436
        %v4452 = vadd.f32 %v4416, %v4436
        %v4453 = vadd.f32 %v4417, %v4436
        %v4454 = vmax.f32 %v4438, %v4442
        %v4455 = vmax.f32 %v4454, %v4446
        %v4456 = vmax.f32 %v4455, %v4450
        %v4457 = vrot.slane %v4456, 4
        %v4458 = vmax.f32 %v4456, %v4457
        %v4459 = vrot.slane %v4458, 2
        %v4460 = vmax.f32 %v4458, %v4459
        %v4461 = vrot.slane %v4460, 1
        %v4462 = vmax.f32 %v4460, %v4461
        %v4463 = vmax.f32 %v4439, %v4443
        %v4464 = vmax.f32 %v4463, %v4447
        %v4465 = vmax.f32 %v4464, %v4451
        %v4466 = vrot.slane %v4465, 4
        %v4467 = vmax.f32 %v4465, %v4466
        %v4468 = vrot.slane %v4467, 2
        %v4469 = vmax.f32 %v4467, %v4468
        %v4470 = vrot.slane %v4469, 1
        %v4471 = vmax.f32 %v4469, %v4470
        %v4472 = vmax.f32 %v4440, %v4444
        %v4473 = vmax.f32 %v4472, %v4448
        %v4474 = vmax.f32 %v4473, %v4452
        %v4475 = vrot.slane %v4474, 4
        %v4476 = vmax.f32 %v4474, %v4475
        %v4477 = vrot.slane %v4476, 2
        %v4478 = vmax.f32 %v4476, %v4477
        %v4479 = vrot.slane %v4478, 1
        %v4480 = vmax.f32 %v4478, %v4479
        %v4481 = vmax.f32 %v4441, %v4445
        %v4482 = vmax.f32 %v4481, %v4449
        %v4483 = vmax.f32 %v4482, %v4453
        %v4484 = vrot.slane %v4483, 4
        %v4485 = vmax.f32 %v4483, %v4484
        %v4486 = vrot.slane %v4485, 2
        %v4487 = vmax.f32 %v4485, %v4486
        %v4488 = vrot.slane %v4487, 1
        %v4489 = vmax.f32 %v4487, %v4488
        %v4490 = vmax.f32 %v4173, %v4462
        %v4491 = vmax.f32 %v4174, %v4471
        %v4492 = vmax.f32 %v4175, %v4480
        %v4493 = vmax.f32 %v4176, %v4489
        %v4494 = vsub.f32 %v4173, %v4490
        %v4495 = vsub.f32 %v4174, %v4491
        %v4496 = vsub.f32 %v4175, %v4492
        %v4497 = vsub.f32 %v4176, %v4493
        %v4498 = vmul.f32 %v4494, 1.442695
        %v4499 = vpow.pop %v4498
        %v4500 = vmul.f32 %v4495, 1.442695
        %v4501 = vpow.pop %v4500
        %v4502 = vmul.f32 %v4496, 1.442695
        %v4503 = vpow.pop %v4502
        %v4504 = vmul.f32 %v4497, 1.442695
        %v4505 = vpow.pop %v4504
        %v4506 = vsub.f32 %v4438, %v4490
        %v4507 = vsub.f32 %v4439, %v4491
        %v4508 = vsub.f32 %v4440, %v4492
        %v4509 = vsub.f32 %v4441, %v4493
        %v4510 = vsub.f32 %v4442, %v4490
        %v4511 = vsub.f32 %v4443, %v4491
        %v4512 = vsub.f32 %v4444, %v4492
        %v4513 = vsub.f32 %v4445, %v4493
        %v4514 = vsub.f32 %v4446, %v4490
        %v4515 = vsub.f32 %v4447, %v4491
        %v4516 = vsub.f32 %v4448, %v4492
        %v4517 = vsub.f32 %v4449, %v4493
        %v4518 = vsub.f32 %v4450, %v4490
        %v4519 = vsub.f32 %v4451, %v4491
        %v4520 = vsub.f32 %v4452, %v4492
        %v4521 = vsub.f32 %v4453, %v4493
        %v4522 = vmul.f32 %v4506, 1.442695
        %v4523 = vpow.pop %v4522
        %v4524 = vmul.f32 %v4507, 1.442695
        %v4525 = vpow.pop %v4524
        %v4526 = vmul.f32 %v4508, 1.442695
        %v4527 = vpow.pop %v4526
        %v4528 = vmul.f32 %v4509, 1.442695
        %v4529 = vpow.pop %v4528
        %v4530 = vmul.f32 %v4510, 1.442695
        %v4531 = vpow.pop %v4530
        %v4532 = vmul.f32 %v4511, 1.442695
        %v4533 = vpow.pop %v4532
        %v4534 = vmul.f32 %v4512, 1.442695
        %v4535 = vpow.pop %v4534
        %v4536 = vmul.f32 %v4513, 1.442695
        %v4537 = vpow.pop %v4536
        %v4538 = vmul.f32 %v4514, 1.442695
        %v4539 = vpow.pop %v4538
        %v4540 = vmul.f32 %v4515, 1.442695
        %v4541 = vpow.pop %v4540
        %v4542 = vmul.f32 %v4516, 1.442695
        %v4543 = vpow.pop %v4542
        %v4544 = vmul.f32 %v4517, 1.442695
        %v4545 = vpow.pop %v4544
        %v4546 = vmul.f32 %v4518, 1.442695
        %v4547 = vpow.pop %v4546
        %v4548 = vmul.f32 %v4519, 1.442695
        %v4549 = vpow.pop %v4548
        %v4550 = vmul.f32 %v4520, 1.442695
        %v4551 = vpow.pop %v4550
        %v4552 = vmul.f32 %v4521, 1.442695
        %v4553 = vpow.pop %v4552
        %v4554 = vmul.f32 %v4499, %v4277
        %v4555 = vmul.f32 %v4501, %v4278
        %v4556 = vmul.f32 %v4503, %v4279
        %v4557 = vmul.f32 %v4505, %v4280
        %v4558 = vadd.f32 %v4523, %v4531
        %v4559 = vadd.f32 %v4558, %v4539
        %v4560 = vadd.f32 %v4559, %v4547
        %v4561 = vrot.slane %v4560, 4
        %v4562 = vadd.f32 %v4560, %v4561
        %v4563 = vrot.slane %v4562, 2
        %v4564 = vadd.f32 %v4562, %v4563
        %v4565 = vrot.slane %v4564, 1
        %v4566 = vadd.f32 %v4564, %v4565
        %v4567 = vadd.f32 %v4525, %v4533
        %v4568 = vadd.f32 %v4567, %v4541
        %v4569 = vadd.f32 %v4568, %v4549
        %v4570 = vrot.slane %v4569, 4
        %v4571 = vadd.f32 %v4569, %v4570
        %v4572 = vrot.slane %v4571, 2
        %v4573 = vadd.f32 %v4571, %v4572
        %v4574 = vrot.slane %v4573, 1
        %v4575 = vadd.f32 %v4573, %v4574
        %v4576 = vadd.f32 %v4527, %v4535
        %v4577 = vadd.f32 %v4576, %v4543
        %v4578 = vadd.f32 %v4577, %v4551
        %v4579 = vrot.slane %v4578, 4
        %v4580 = vadd.f32 %v4578, %v4579
        %v4581 = vrot.slane %v4580, 2
        %v4582 = vadd.f32 %v4580, %v4581
        %v4583 = vrot.slane %v4582, 1
        %v4584 = vadd.f32 %v4582, %v4583
        %v4585 = vadd.f32 %v4529, %v4537
        %v4586 = vadd.f32 %v4585, %v4545
        %v4587 = vadd.f32 %v4586, %v4553
        %v4588 = vrot.slane %v4587, 4
        %v4589 = vadd.f32 %v4587, %v4588
        %v4590 = vrot.slane %v4589, 2
        %v4591 = vadd.f32 %v4589, %v4590
        %v4592 = vrot.slane %v4591, 1
        %v4593 = vadd.f32 %v4591, %v4592
        %v4594 = vadd.f32 %v4554, %v4566
        %v4595 = vadd.f32 %v4555, %v4575
        %v4596 = vadd.f32 %v4556, %v4584
        %v4597 = vadd.f32 %v4557, %v4593
        %v4598 = vmul.f32 %v4499, %v4357
        %v4599 = vmul.f32 %v4501, %v4358
        %v4600 = vmul.f32 %v4503, %v4359
        %v4601 = vmul.f32 %v4505, %v4360
        %4603 = vset.pattern.permute.xlu0 0
        %4604 = vperm.xlu0 %4603, %v4362
        %v4605 = vpop.permute.xlu0 %4604
        %4608 = vset.pattern.permute.xlu0 0
        %4609 = vperm.xlu0 %4608, %v4363
        %v4610 = vpop.permute.xlu0 %4609
        %4613 = vset.pattern.permute.xlu0 0
        %4614 = vperm.xlu0 %4613, %v4364
        %v4615 = vpop.permute.xlu0 %4614
        %4618 = vset.pattern.permute.xlu0 0
        %4619 = vperm.xlu0 %4618, %v4365
        %v4620 = vpop.permute.xlu0 %4619
        %v4622 = vmul.f32 %v4523, %v4605
        %v4623 = vmul.f32 %v4525, %v4605
        %v4624 = vmul.f32 %v4527, %v4605
        %v4625 = vmul.f32 %v4529, %v4605
        %v4626 = vmul.f32 %v4531, %v4610
        %v4627 = vmul.f32 %v4533, %v4610
        %v4628 = vmul.f32 %v4535, %v4610
        %v4629 = vmul.f32 %v4537, %v4610
        %v4630 = vmul.f32 %v4539, %v4615
        %v4631 = vmul.f32 %v4541, %v4615
        %v4632 = vmul.f32 %v4543, %v4615
        %v4633 = vmul.f32 %v4545, %v4615
        %v4634 = vmul.f32 %v4547, %v4620
        %v4635 = vmul.f32 %v4549, %v4620
        %v4636 = vmul.f32 %v4551, %v4620
        %v4637 = vmul.f32 %v4553, %v4620
        %v4638 = vadd.f32 %v4622, %v4626
        %v4639 = vadd.f32 %v4638, %v4630
        %v4640 = vadd.f32 %v4639, %v4634
        %v4641 = vrot.slane %v4640, 4
        %v4642 = vadd.f32 %v4640, %v4641
        %v4643 = vrot.slane %v4642, 2
        %v4644 = vadd.f32 %v4642, %v4643
        %v4645 = vrot.slane %v4644, 1
        %v4646 = vadd.f32 %v4644, %v4645
        %v4647 = vadd.f32 %v4623, %v4627
        %v4648 = vadd.f32 %v4647, %v4631
        %v4649 = vadd.f32 %v4648, %v4635
        %v4650 = vrot.slane %v4649, 4
        %v4651 = vadd.f32 %v4649, %v4650
        %v4652 = vrot.slane %v4651, 2
        %v4653 = vadd.f32 %v4651, %v4652
        %v4654 = vrot.slane %v4653, 1
        %v4655 = vadd.f32 %v4653, %v4654
        %v4656 = vadd.f32 %v4624, %v4628
        %v4657 = vadd.f32 %v4656, %v4632
        %v4658 = vadd.f32 %v4657, %v4636
        %v4659 = vrot.slane %v4658, 4
        %v4660 = vadd.f32 %v4658, %v4659
        %v4661 = vrot.slane %v4660, 2
        %v4662 = vadd.f32 %v4660, %v4661
        %v4663 = vrot.slane %v4662, 1
        %v4664 = vadd.f32 %v4662, %v4663
        %v4665 = vadd.f32 %v4625, %v4629
        %v4666 = vadd.f32 %v4665, %v4633
        %v4667 = vadd.f32 %v4666, %v4637
        %v4668 = vrot.slane %v4667, 4
        %v4669 = vadd.f32 %v4667, %v4668
        %v4670 = vrot.slane %v4669, 2
        %v4671 = vadd.f32 %v4669, %v4670
        %v4672 = vrot.slane %v4671, 1
        %v4673 = vadd.f32 %v4671, %v4672
        %v4674 = vadd.f32 %v4598, %v4646
        %v4675 = vadd.f32 %v4599, %v4655
        %v4676 = vadd.f32 %v4600, %v4664
        %v4677 = vadd.f32 %v4601, %v4673
        %s4678 = scalar_lea.vmem %s229, 448
        %v4679 = vld [vmem:[%s4678] sm:$0xff]
        %v4680 = vld [vmem:[%s4678 + $0x8] sm:$0xff]
        %v4681 = vld [vmem:[%s4678 + $0x10] sm:$0xff]
        %v4682 = vld [vmem:[%s4678 + $0x18] sm:$0xff]
        %v4683 = vmul.f32 %v240, %v4679
        %v4684 = vmul.f32 %v240, %v4680
        %v4685 = vmul.f32 %v240, %v4681
        %v4686 = vmul.f32 %v240, %v4682
        %v4687 = vadd.f32 %v4683, %v245
        %v4688 = vadd.f32 %v4684, %v245
        %v4689 = vadd.f32 %v4685, %v245
        %v4690 = vadd.f32 %v4686, %v245
        %v4691 = vmul.f32 %v250, %v4679
        %v4692 = vmul.f32 %v250, %v4680
        %v4693 = vmul.f32 %v250, %v4681
        %v4694 = vmul.f32 %v250, %v4682
        %v4695 = vadd.f32 %v4691, %v255
        %v4696 = vadd.f32 %v4692, %v255
        %v4697 = vadd.f32 %v4693, %v255
        %v4698 = vadd.f32 %v4694, %v255
        %4700 = vset.pattern.permute.xlu0 0
        %4701 = vperm.xlu0 %4700, %v4687
        %v4702 = vpop.permute.xlu0 %4701
        %4705 = vset.pattern.permute.xlu0 0
        %4706 = vperm.xlu0 %4705, %v4688
        %v4707 = vpop.permute.xlu0 %4706
        %4710 = vset.pattern.permute.xlu0 0
        %4711 = vperm.xlu0 %4710, %v4689
        %v4712 = vpop.permute.xlu0 %4711
        %4715 = vset.pattern.permute.xlu0 0
        %4716 = vperm.xlu0 %4715, %v4690
        %v4717 = vpop.permute.xlu0 %4716
        %v4719 = vmul.f32 %v4702, %v281
        %v4720 = vmul.f32 %v4702, %v282
        %v4721 = vmul.f32 %v4702, %v283
        %v4722 = vmul.f32 %v4702, %v284
        %v4723 = vmul.f32 %v4707, %v281
        %v4724 = vmul.f32 %v4707, %v282
        %v4725 = vmul.f32 %v4707, %v283
        %v4726 = vmul.f32 %v4707, %v284
        %v4727 = vmul.f32 %v4712, %v281
        %v4728 = vmul.f32 %v4712, %v282
        %v4729 = vmul.f32 %v4712, %v283
        %v4730 = vmul.f32 %v4712, %v284
        %v4731 = vmul.f32 %v4717, %v281
        %v4732 = vmul.f32 %v4717, %v282
        %v4733 = vmul.f32 %v4717, %v283
        %v4734 = vmul.f32 %v4717, %v284
        %4736 = vset.pattern.permute.xlu0 0
        %4737 = vperm.xlu0 %4736, %v4695
        %v4738 = vpop.permute.xlu0 %4737
        %4741 = vset.pattern.permute.xlu0 0
        %4742 = vperm.xlu0 %4741, %v4696
        %v4743 = vpop.permute.xlu0 %4742
        %4746 = vset.pattern.permute.xlu0 0
        %4747 = vperm.xlu0 %4746, %v4697
        %v4748 = vpop.permute.xlu0 %4747
        %4751 = vset.pattern.permute.xlu0 0
        %4752 = vperm.xlu0 %4751, %v4698
        %v4753 = vpop.permute.xlu0 %4752
        %v4755 = vadd.f32 %v4719, %v4738
        %v4756 = vadd.f32 %v4720, %v4738
        %v4757 = vadd.f32 %v4721, %v4738
        %v4758 = vadd.f32 %v4722, %v4738
        %v4759 = vadd.f32 %v4723, %v4743
        %v4760 = vadd.f32 %v4724, %v4743
        %v4761 = vadd.f32 %v4725, %v4743
        %v4762 = vadd.f32 %v4726, %v4743
        %v4763 = vadd.f32 %v4727, %v4748
        %v4764 = vadd.f32 %v4728, %v4748
        %v4765 = vadd.f32 %v4729, %v4748
        %v4766 = vadd.f32 %v4730, %v4748
        %v4767 = vadd.f32 %v4731, %v4753
        %v4768 = vadd.f32 %v4732, %v4753
        %v4769 = vadd.f32 %v4733, %v4753
        %v4770 = vadd.f32 %v4734, %v4753
        %v4771 = vmax.f32 %v4755, %v4759
        %v4772 = vmax.f32 %v4771, %v4763
        %v4773 = vmax.f32 %v4772, %v4767
        %v4774 = vrot.slane %v4773, 4
        %v4775 = vmax.f32 %v4773, %v4774
        %v4776 = vrot.slane %v4775, 2
        %v4777 = vmax.f32 %v4775, %v4776
        %v4778 = vrot.slane %v4777, 1
        %v4779 = vmax.f32 %v4777, %v4778
        %v4780 = vmax.f32 %v4756, %v4760
        %v4781 = vmax.f32 %v4780, %v4764
        %v4782 = vmax.f32 %v4781, %v4768
        %v4783 = vrot.slane %v4782, 4
        %v4784 = vmax.f32 %v4782, %v4783
        %v4785 = vrot.slane %v4784, 2
        %v4786 = vmax.f32 %v4784, %v4785
        %v4787 = vrot.slane %v4786, 1
        %v4788 = vmax.f32 %v4786, %v4787
        %v4789 = vmax.f32 %v4757, %v4761
        %v4790 = vmax.f32 %v4789, %v4765
        %v4791 = vmax.f32 %v4790, %v4769
        %v4792 = vrot.slane %v4791, 4
        %v4793 = vmax.f32 %v4791, %v4792
        %v4794 = vrot.slane %v4793, 2
        %v4795 = vmax.f32 %v4793, %v4794
        %v4796 = vrot.slane %v4795, 1
        %v4797 = vmax.f32 %v4795, %v4796
        %v4798 = vmax.f32 %v4758, %v4762
        %v4799 = vmax.f32 %v4798, %v4766
        %v4800 = vmax.f32 %v4799, %v4770
        %v4801 = vrot.slane %v4800, 4
        %v4802 = vmax.f32 %v4800, %v4801
        %v4803 = vrot.slane %v4802, 2
        %v4804 = vmax.f32 %v4802, %v4803
        %v4805 = vrot.slane %v4804, 1
        %v4806 = vmax.f32 %v4804, %v4805
        %v4807 = vmax.f32 %v4490, %v4779
        %v4808 = vmax.f32 %v4491, %v4788
        %v4809 = vmax.f32 %v4492, %v4797
        %v4810 = vmax.f32 %v4493, %v4806
        %v4811 = vsub.f32 %v4490, %v4807
        %v4812 = vsub.f32 %v4491, %v4808
        %v4813 = vsub.f32 %v4492, %v4809
        %v4814 = vsub.f32 %v4493, %v4810
        %v4815 = vmul.f32 %v4811, 1.442695
        %v4816 = vpow.pop %v4815
        %v4817 = vmul.f32 %v4812, 1.442695
        %v4818 = vpow.pop %v4817
        %v4819 = vmul.f32 %v4813, 1.442695
        %v4820 = vpow.pop %v4819
        %v4821 = vmul.f32 %v4814, 1.442695
        %v4822 = vpow.pop %v4821
        %v4823 = vsub.f32 %v4755, %v4807
        %v4824 = vsub.f32 %v4756, %v4808
        %v4825 = vsub.f32 %v4757, %v4809
        %v4826 = vsub.f32 %v4758, %v4810
        %v4827 = vsub.f32 %v4759, %v4807
        %v4828 = vsub.f32 %v4760, %v4808
        %v4829 = vsub.f32 %v4761, %v4809
        %v4830 = vsub.f32 %v4762, %v4810
        %v4831 = vsub.f32 %v4763, %v4807
        %v4832 = vsub.f32 %v4764, %v4808
        %v4833 = vsub.f32 %v4765, %v4809
        %v4834 = vsub.f32 %v4766, %v4810
        %v4835 = vsub.f32 %v4767, %v4807
        %v4836 = vsub.f32 %v4768, %v4808
        %v4837 = vsub.f32 %v4769, %v4809
        %v4838 = vsub.f32 %v4770, %v4810
        %v4839 = vmul.f32 %v4823, 1.442695
        %v4840 = vpow.pop %v4839
        %v4841 = vmul.f32 %v4824, 1.442695
        %v4842 = vpow.pop %v4841
        %v4843 = vmul.f32 %v4825, 1.442695
        %v4844 = vpow.pop %v4843
        %v4845 = vmul.f32 %v4826, 1.442695
        %v4846 = vpow.pop %v4845
        %v4847 = vmul.f32 %v4827, 1.442695
        %v4848 = vpow.pop %v4847
        %v4849 = vmul.f32 %v4828, 1.442695
        %v4850 = vpow.pop %v4849
        %v4851 = vmul.f32 %v4829, 1.442695
        %v4852 = vpow.pop %v4851
        %v4853 = vmul.f32 %v4830, 1.442695
        %v4854 = vpow.pop %v4853
        %v4855 = vmul.f32 %v4831, 1.442695
        %v4856 = vpow.pop %v4855
        %v4857 = vmul.f32 %v4832, 1.442695
        %v4858 = vpow.pop %v4857
        %v4859 = vmul.f32 %v4833, 1.442695
        %v4860 = vpow.pop %v4859
        %v4861 = vmul.f32 %v4834, 1.442695
        %v4862 = vpow.pop %v4861
        %v4863 = vmul.f32 %v4835, 1.442695
        %v4864 = vpow.pop %v4863
        %v4865 = vmul.f32 %v4836, 1.442695
        %v4866 = vpow.pop %v4865
        %v4867 = vmul.f32 %v4837, 1.442695
        %v4868 = vpow.pop %v4867
        %v4869 = vmul.f32 %v4838, 1.442695
        %v4870 = vpow.pop %v4869
        %v4871 = vmul.f32 %v4816, %v4594
        %v4872 = vmul.f32 %v4818, %v4595
        %v4873 = vmul.f32 %v4820, %v4596
        %v4874 = vmul.f32 %v4822, %v4597
        %v4875 = vadd.f32 %v4840, %v4848
        %v4876 = vadd.f32 %v4875, %v4856
        %v4877 = vadd.f32 %v4876, %v4864
        %v4878 = vrot.slane %v4877, 4
        %v4879 = vadd.f32 %v4877, %v4878
        %v4880 = vrot.slane %v4879, 2
        %v4881 = vadd.f32 %v4879, %v4880
        %v4882 = vrot.slane %v4881, 1
        %v4883 = vadd.f32 %v4881, %v4882
        %v4884 = vadd.f32 %v4842, %v4850
        %v4885 = vadd.f32 %v4884, %v4858
        %v4886 = vadd.f32 %v4885, %v4866
        %v4887 = vrot.slane %v4886, 4
        %v4888 = vadd.f32 %v4886, %v4887
        %v4889 = vrot.slane %v4888, 2
        %v4890 = vadd.f32 %v4888, %v4889
        %v4891 = vrot.slane %v4890, 1
        %v4892 = vadd.f32 %v4890, %v4891
        %v4893 = vadd.f32 %v4844, %v4852
        %v4894 = vadd.f32 %v4893, %v4860
        %v4895 = vadd.f32 %v4894, %v4868
        %v4896 = vrot.slane %v4895, 4
        %v4897 = vadd.f32 %v4895, %v4896
        %v4898 = vrot.slane %v4897, 2
        %v4899 = vadd.f32 %v4897, %v4898
        %v4900 = vrot.slane %v4899, 1
        %v4901 = vadd.f32 %v4899, %v4900
        %v4902 = vadd.f32 %v4846, %v4854
        %v4903 = vadd.f32 %v4902, %v4862
        %v4904 = vadd.f32 %v4903, %v4870
        %v4905 = vrot.slane %v4904, 4
        %v4906 = vadd.f32 %v4904, %v4905
        %v4907 = vrot.slane %v4906, 2
        %v4908 = vadd.f32 %v4906, %v4907
        %v4909 = vrot.slane %v4908, 1
        %v4910 = vadd.f32 %v4908, %v4909
        %v4911 = vadd.f32 %v4871, %v4883
        %v4912 = vadd.f32 %v4872, %v4892
        %v4913 = vadd.f32 %v4873, %v4901
        %v4914 = vadd.f32 %v4874, %v4910
        %v4915 = vmul.f32 %v4816, %v4674
        %v4916 = vmul.f32 %v4818, %v4675
        %v4917 = vmul.f32 %v4820, %v4676
        %v4918 = vmul.f32 %v4822, %v4677
        %4920 = vset.pattern.permute.xlu0 0
        %4921 = vperm.xlu0 %4920, %v4679
        %v4922 = vpop.permute.xlu0 %4921
        %4925 = vset.pattern.permute.xlu0 0
        %4926 = vperm.xlu0 %4925, %v4680
        %v4927 = vpop.permute.xlu0 %4926
        %4930 = vset.pattern.permute.xlu0 0
        %4931 = vperm.xlu0 %4930, %v4681
        %v4932 = vpop.permute.xlu0 %4931
        %4935 = vset.pattern.permute.xlu0 0
        %4936 = vperm.xlu0 %4935, %v4682
        %v4937 = vpop.permute.xlu0 %4936
        %v4939 = vmul.f32 %v4840, %v4922
        %v4940 = vmul.f32 %v4842, %v4922
        %v4941 = vmul.f32 %v4844, %v4922
        %v4942 = vmul.f32 %v4846, %v4922
        %v4943 = vmul.f32 %v4848, %v4927
        %v4944 = vmul.f32 %v4850, %v4927
        %v4945 = vmul.f32 %v4852, %v4927
        %v4946 = vmul.f32 %v4854, %v4927
        %v4947 = vmul.f32 %v4856, %v4932
        %v4948 = vmul.f32 %v4858, %v4932
        %v4949 = vmul.f32 %v4860, %v4932
        %v4950 = vmul.f32 %v4862, %v4932
        %v4951 = vmul.f32 %v4864, %v4937
        %v4952 = vmul.f32 %v4866, %v4937
        %v4953 = vmul.f32 %v4868, %v4937
        %v4954 = vmul.f32 %v4870, %v4937
        %v4955 = vadd.f32 %v4939, %v4943
        %v4956 = vadd.f32 %v4955, %v4947
        %v4957 = vadd.f32 %v4956, %v4951
        %v4958 = vrot.slane %v4957, 4
        %v4959 = vadd.f32 %v4957, %v4958
        %v4960 = vrot.slane %v4959, 2
        %v4961 = vadd.f32 %v4959, %v4960
        %v4962 = vrot.slane %v4961, 1
        %v4963 = vadd.f32 %v4961, %v4962
        %v4964 = vadd.f32 %v4940, %v4944
        %v4965 = vadd.f32 %v4964, %v4948
        %v4966 = vadd.f32 %v4965, %v4952
        %v4967 = vrot.slane %v4966, 4
        %v4968 = vadd.f32 %v4966, %v4967
        %v4969 = vrot.slane %v4968, 2
        %v4970 = vadd.f32 %v4968, %v4969
        %v4971 = vrot.slane %v4970, 1
        %v4972 = vadd.f32 %v4970, %v4971
        %v4973 = vadd.f32 %v4941, %v4945
        %v4974 = vadd.f32 %v4973, %v4949
        %v4975 = vadd.f32 %v4974, %v4953
        %v4976 = vrot.slane %v4975, 4
        %v4977 = vadd.f32 %v4975, %v4976
        %v4978 = vrot.slane %v4977, 2
        %v4979 = vadd.f32 %v4977, %v4978
        %v4980 = vrot.slane %v4979, 1
        %v4981 = vadd.f32 %v4979, %v4980
        %v4982 = vadd.f32 %v4942, %v4946
        %v4983 = vadd.f32 %v4982, %v4950
        %v4984 = vadd.f32 %v4983, %v4954
        %v4985 = vrot.slane %v4984, 4
        %v4986 = vadd.f32 %v4984, %v4985
        %v4987 = vrot.slane %v4986, 2
        %v4988 = vadd.f32 %v4986, %v4987
        %v4989 = vrot.slane %v4988, 1
        %v4990 = vadd.f32 %v4988, %v4989
        %v4991 = vadd.f32 %v4915, %v4963
        %v4992 = vadd.f32 %v4916, %v4972
        %v4993 = vadd.f32 %v4917, %v4981
        %v4994 = vadd.f32 %v4918, %v4990
        %s4995 = scalar_lea.vmem %s229, 480
        %v4996 = vld [vmem:[%s4995] sm:$0xff]
        %v4997 = vld [vmem:[%s4995 + $0x8] sm:$0xff]
        %v4998 = vld [vmem:[%s4995 + $0x10] sm:$0xff]
        %v4999 = vld [vmem:[%s4995 + $0x18] sm:$0xff]
        %v5000 = vmul.f32 %v240, %v4996
        %v5001 = vmul.f32 %v240, %v4997
        %v5002 = vmul.f32 %v240, %v4998
        %v5003 = vmul.f32 %v240, %v4999
        %v5004 = vadd.f32 %v5000, %v245
        %v5005 = vadd.f32 %v5001, %v245
        %v5006 = vadd.f32 %v5002, %v245
        %v5007 = vadd.f32 %v5003, %v245
        %v5008 = vmul.f32 %v250, %v4996
        %v5009 = vmul.f32 %v250, %v4997
        %v5010 = vmul.f32 %v250, %v4998
        %v5011 = vmul.f32 %v250, %v4999
        %v5012 = vadd.f32 %v5008, %v255
        %v5013 = vadd.f32 %v5009, %v255
        %v5014 = vadd.f32 %v5010, %v255
        %v5015 = vadd.f32 %v5011, %v255
        %5017 = vset.pattern.permute.xlu0 0
        %5018 = vperm.xlu0 %5017, %v5004
        %v5019 = vpop.permute.xlu0 %5018
        %5022 = vset.pattern.permute.xlu0 0
        %5023 = vperm.xlu0 %5022, %v5005
        %v5024 = vpop.permute.xlu0 %5023
        %5027 = vset.pattern.permute.xlu0 0
        %5028 = vperm.xlu0 %5027, %v5006
        %v5029 = vpop.permute.xlu0 %5028
        %5032 = vset.pattern.permute.xlu0 0
        %5033 = vperm.xlu0 %5032, %v5007
        %v5034 = vpop.permute.xlu0 %5033
        %v5036 = vmul.f32 %v5019, %v281
        %v5037 = vmul.f32 %v5019, %v282
        %v5038 = vmul.f32 %v5019, %v283
        %v5039 = vmul.f32 %v5019, %v284
        %v5040 = vmul.f32 %v5024, %v281
        %v5041 = vmul.f32 %v5024, %v282
        %v5042 = vmul.f32 %v5024, %v283
        %v5043 = vmul.f32 %v5024, %v284
        %v5044 = vmul.f32 %v5029, %v281
        %v5045 = vmul.f32 %v5029, %v282
        %v5046 = vmul.f32 %v5029, %v283
        %v5047 = vmul.f32 %v5029, %v284
        %v5048 = vmul.f32 %v5034, %v281
        %v5049 = vmul.f32 %v5034, %v282
        %v5050 = vmul.f32 %v5034, %v283
        %v5051 = vmul.f32 %v5034, %v284
        %5053 = vset.pattern.permute.xlu0 0
        %5054 = vperm.xlu0 %5053, %v5012
        %v5055 = vpop.permute.xlu0 %5054
        %5058 = vset.pattern.permute.xlu0 0
        %5059 = vperm.xlu0 %5058, %v5013
        %v5060 = vpop.permute.xlu0 %5059
        %5063 = vset.pattern.permute.xlu0 0
        %5064 = vperm.xlu0 %5063, %v5014
        %v5065 = vpop.permute.xlu0 %5064
        %5068 = vset.pattern.permute.xlu0 0
        %5069 = vperm.xlu0 %5068, %v5015
        %v5070 = vpop.permute.xlu0 %5069
        %v5072 = vadd.f32 %v5036, %v5055
        %v5073 = vadd.f32 %v5037, %v5055
        %v5074 = vadd.f32 %v5038, %v5055
        %v5075 = vadd.f32 %v5039, %v5055
        %v5076 = vadd.f32 %v5040, %v5060
        %v5077 = vadd.f32 %v5041, %v5060
        %v5078 = vadd.f32 %v5042, %v5060
        %v5079 = vadd.f32 %v5043, %v5060
        %v5080 = vadd.f32 %v5044, %v5065
        %v5081 = vadd.f32 %v5045, %v5065
        %v5082 = vadd.f32 %v5046, %v5065
        %v5083 = vadd.f32 %v5047, %v5065
        %v5084 = vadd.f32 %v5048, %v5070
        %v5085 = vadd.f32 %v5049, %v5070
        %v5086 = vadd.f32 %v5050, %v5070
        %v5087 = vadd.f32 %v5051, %v5070
        %v5088 = vmax.f32 %v5072, %v5076
        %v5089 = vmax.f32 %v5088, %v5080
        %v5090 = vmax.f32 %v5089, %v5084
        %v5091 = vrot.slane %v5090, 4
        %v5092 = vmax.f32 %v5090, %v5091
        %v5093 = vrot.slane %v5092, 2
        %v5094 = vmax.f32 %v5092, %v5093
        %v5095 = vrot.slane %v5094, 1
        %v5096 = vmax.f32 %v5094, %v5095
        %v5097 = vmax.f32 %v5073, %v5077
        %v5098 = vmax.f32 %v5097, %v5081
        %v5099 = vmax.f32 %v5098, %v5085
        %v5100 = vrot.slane %v5099, 4
        %v5101 = vmax.f32 %v5099, %v5100
        %v5102 = vrot.slane %v5101, 2
        %v5103 = vmax.f32 %v5101, %v5102
        %v5104 = vrot.slane %v5103, 1
        %v5105 = vmax.f32 %v5103, %v5104
        %v5106 = vmax.f32 %v5074, %v5078
        %v5107 = vmax.f32 %v5106, %v5082
        %v5108 = vmax.f32 %v5107, %v5086
        %v5109 = vrot.slane %v5108, 4
        %v5110 = vmax.f32 %v5108, %v5109
        %v5111 = vrot.slane %v5110, 2
        %v5112 = vmax.f32 %v5110, %v5111
        %v5113 = vrot.slane %v5112, 1
        %v5114 = vmax.f32 %v5112, %v5113
        %v5115 = vmax.f32 %v5075, %v5079
        %v5116 = vmax.f32 %v5115, %v5083
        %v5117 = vmax.f32 %v5116, %v5087
        %v5118 = vrot.slane %v5117, 4
        %v5119 = vmax.f32 %v5117, %v5118
        %v5120 = vrot.slane %v5119, 2
        %v5121 = vmax.f32 %v5119, %v5120
        %v5122 = vrot.slane %v5121, 1
        %v5123 = vmax.f32 %v5121, %v5122
        %v5124 = vmax.f32 %v4807, %v5096
        %v5125 = vmax.f32 %v4808, %v5105
        %v5126 = vmax.f32 %v4809, %v5114
        %v5127 = vmax.f32 %v4810, %v5123
        %v5128 = vsub.f32 %v4807, %v5124
        %v5129 = vsub.f32 %v4808, %v5125
        %v5130 = vsub.f32 %v4809, %v5126
        %v5131 = vsub.f32 %v4810, %v5127
        %v5132 = vmul.f32 %v5128, 1.442695
        %v5133 = vpow.pop %v5132
        %v5134 = vmul.f32 %v5129, 1.442695
        %v5135 = vpow.pop %v5134
        %v5136 = vmul.f32 %v5130, 1.442695
        %v5137 = vpow.pop %v5136
        %v5138 = vmul.f32 %v5131, 1.442695
        %v5139 = vpow.pop %v5138
        %v5140 = vsub.f32 %v5072, %v5124
        %v5141 = vsub.f32 %v5073, %v5125
        %v5142 = vsub.f32 %v5074, %v5126
        %v5143 = vsub.f32 %v5075, %v5127
        %v5144 = vsub.f32 %v5076, %v5124
        %v5145 = vsub.f32 %v5077, %v5125
        %v5146 = vsub.f32 %v5078, %v5126
        %v5147 = vsub.f32 %v5079, %v5127
        %v5148 = vsub.f32 %v5080, %v5124
        %v5149 = vsub.f32 %v5081, %v5125
        %v5150 = vsub.f32 %v5082, %v5126
        %v5151 = vsub.f32 %v5083, %v5127
        %v5152 = vsub.f32 %v5084, %v5124
        %v5153 = vsub.f32 %v5085, %v5125
        %v5154 = vsub.f32 %v5086, %v5126
        %v5155 = vsub.f32 %v5087, %v5127
        %v5156 = vmul.f32 %v5140, 1.442695
        %v5157 = vpow.pop %v5156
        %v5158 = vmul.f32 %v5141, 1.442695
        %v5159 = vpow.pop %v5158
        %v5160 = vmul.f32 %v5142, 1.442695
        %v5161 = vpow.pop %v5160
        %v5162 = vmul.f32 %v5143, 1.442695
        %v5163 = vpow.pop %v5162
        %v5164 = vmul.f32 %v5144, 1.442695
        %v5165 = vpow.pop %v5164
        %v5166 = vmul.f32 %v5145, 1.442695
        %v5167 = vpow.pop %v5166
        %v5168 = vmul.f32 %v5146, 1.442695
        %v5169 = vpow.pop %v5168
        %v5170 = vmul.f32 %v5147, 1.442695
        %v5171 = vpow.pop %v5170
        %v5172 = vmul.f32 %v5148, 1.442695
        %v5173 = vpow.pop %v5172
        %v5174 = vmul.f32 %v5149, 1.442695
        %v5175 = vpow.pop %v5174
        %v5176 = vmul.f32 %v5150, 1.442695
        %v5177 = vpow.pop %v5176
        %v5178 = vmul.f32 %v5151, 1.442695
        %v5179 = vpow.pop %v5178
        %v5180 = vmul.f32 %v5152, 1.442695
        %v5181 = vpow.pop %v5180
        %v5182 = vmul.f32 %v5153, 1.442695
        %v5183 = vpow.pop %v5182
        %v5184 = vmul.f32 %v5154, 1.442695
        %v5185 = vpow.pop %v5184
        %v5186 = vmul.f32 %v5155, 1.442695
        %v5187 = vpow.pop %v5186
        %v5188 = vmul.f32 %v5133, %v4911
        %v5189 = vmul.f32 %v5135, %v4912
        %v5190 = vmul.f32 %v5137, %v4913
        %v5191 = vmul.f32 %v5139, %v4914
        %v5192 = vadd.f32 %v5157, %v5165
        %v5193 = vadd.f32 %v5192, %v5173
        %v5194 = vadd.f32 %v5193, %v5181
        %v5195 = vrot.slane %v5194, 4
        %v5196 = vadd.f32 %v5194, %v5195
        %v5197 = vrot.slane %v5196, 2
        %v5198 = vadd.f32 %v5196, %v5197
        %v5199 = vrot.slane %v5198, 1
        %v5200 = vadd.f32 %v5198, %v5199
        %v5201 = vadd.f32 %v5159, %v5167
        %v5202 = vadd.f32 %v5201, %v5175
        %v5203 = vadd.f32 %v5202, %v5183
        %v5204 = vrot.slane %v5203, 4
        %v5205 = vadd.f32 %v5203, %v5204
        %v5206 = vrot.slane %v5205, 2
        %v5207 = vadd.f32 %v5205, %v5206
        %v5208 = vrot.slane %v5207, 1
        %v5209 = vadd.f32 %v5207, %v5208
        %v5210 = vadd.f32 %v5161, %v5169
        %v5211 = vadd.f32 %v5210, %v5177
        %v5212 = vadd.f32 %v5211, %v5185
        %v5213 = vrot.slane %v5212, 4
        %v5214 = vadd.f32 %v5212, %v5213
        %v5215 = vrot.slane %v5214, 2
        %v5216 = vadd.f32 %v5214, %v5215
        %v5217 = vrot.slane %v5216, 1
        %v5218 = vadd.f32 %v5216, %v5217
        %v5219 = vadd.f32 %v5163, %v5171
        %v5220 = vadd.f32 %v5219, %v5179
        %v5221 = vadd.f32 %v5220, %v5187
        %v5222 = vrot.slane %v5221, 4
        %v5223 = vadd.f32 %v5221, %v5222
        %v5224 = vrot.slane %v5223, 2
        %v5225 = vadd.f32 %v5223, %v5224
        %v5226 = vrot.slane %v5225, 1
        %v5227 = vadd.f32 %v5225, %v5226
        %v5228 = vadd.f32 %v5188, %v5200
        %v5229 = vadd.f32 %v5189, %v5209
        %v5230 = vadd.f32 %v5190, %v5218
        %v5231 = vadd.f32 %v5191, %v5227
        %v5232 = vmul.f32 %v5133, %v4991
        %v5233 = vmul.f32 %v5135, %v4992
        %v5234 = vmul.f32 %v5137, %v4993
        %v5235 = vmul.f32 %v5139, %v4994
        %5237 = vset.pattern.permute.xlu0 0
        %5238 = vperm.xlu0 %5237, %v4996
        %v5239 = vpop.permute.xlu0 %5238
        %5242 = vset.pattern.permute.xlu0 0
        %5243 = vperm.xlu0 %5242, %v4997
        %v5244 = vpop.permute.xlu0 %5243
        %5247 = vset.pattern.permute.xlu0 0
        %5248 = vperm.xlu0 %5247, %v4998
        %v5249 = vpop.permute.xlu0 %5248
        %5252 = vset.pattern.permute.xlu0 0
        %5253 = vperm.xlu0 %5252, %v4999
        %v5254 = vpop.permute.xlu0 %5253
        %v5256 = vmul.f32 %v5157, %v5239
        %v5257 = vmul.f32 %v5159, %v5239
        %v5258 = vmul.f32 %v5161, %v5239
        %v5259 = vmul.f32 %v5163, %v5239
        %v5260 = vmul.f32 %v5165, %v5244
        %v5261 = vmul.f32 %v5167, %v5244
        %v5262 = vmul.f32 %v5169, %v5244
        %v5263 = vmul.f32 %v5171, %v5244
        %v5264 = vmul.f32 %v5173, %v5249
        %v5265 = vmul.f32 %v5175, %v5249
        %v5266 = vmul.f32 %v5177, %v5249
        %v5267 = vmul.f32 %v5179, %v5249
        %v5268 = vmul.f32 %v5181, %v5254
        %v5269 = vmul.f32 %v5183, %v5254
        %v5270 = vmul.f32 %v5185, %v5254
        %v5271 = vmul.f32 %v5187, %v5254
        %v5272 = vadd.f32 %v5256, %v5260
        %v5273 = vadd.f32 %v5272, %v5264
        %v5274 = vadd.f32 %v5273, %v5268
        %v5275 = vrot.slane %v5274, 4
        %v5276 = vadd.f32 %v5274, %v5275
        %v5277 = vrot.slane %v5276, 2
        %v5278 = vadd.f32 %v5276, %v5277
        %v5279 = vrot.slane %v5278, 1
        %v5280 = vadd.f32 %v5278, %v5279
        %v5281 = vadd.f32 %v5257, %v5261
        %v5282 = vadd.f32 %v5281, %v5265
        %v5283 = vadd.f32 %v5282, %v5269
        %v5284 = vrot.slane %v5283, 4
        %v5285 = vadd.f32 %v5283, %v5284
        %v5286 = vrot.slane %v5285, 2
        %v5287 = vadd.f32 %v5285, %v5286
        %v5288 = vrot.slane %v5287, 1
        %v5289 = vadd.f32 %v5287, %v5288
        %v5290 = vadd.f32 %v5258, %v5262
        %v5291 = vadd.f32 %v5290, %v5266
        %v5292 = vadd.f32 %v5291, %v5270
        %v5293 = vrot.slane %v5292, 4
        %v5294 = vadd.f32 %v5292, %v5293
        %v5295 = vrot.slane %v5294, 2
        %v5296 = vadd.f32 %v5294, %v5295
        %v5297 = vrot.slane %v5296, 1
        %v5298 = vadd.f32 %v5296, %v5297
        %v5299 = vadd.f32 %v5259, %v5263
        %v5300 = vadd.f32 %v5299, %v5267
        %v5301 = vadd.f32 %v5300, %v5271
        %v5302 = vrot.slane %v5301, 4
        %v5303 = vadd.f32 %v5301, %v5302
        %v5304 = vrot.slane %v5303, 2
        %v5305 = vadd.f32 %v5303, %v5304
        %v5306 = vrot.slane %v5305, 1
        %v5307 = vadd.f32 %v5305, %v5306
        %v5308 = vadd.f32 %v5232, %v5280
        %v5309 = vadd.f32 %v5233, %v5289
        %v5310 = vadd.f32 %v5234, %v5298
        %v5311 = vadd.f32 %v5235, %v5307
        %s5312 = sld [smem:[#allocation2 + $0x4]]
        %s5313 = sld [smem:[#allocation2 + $0x5]]
        %v5314 = vrcp.pop %v5228
        %v5315 = vmul.f32 %v5228, %v5314
        %v5316 = vsub.f32 1.0, %v5315
        %v5317 = vmul.f32 %v5314, %v5316
        %v5318 = vadd.f32 %v5314, %v5317
        %vm5319 = vweird.f32 %v5228
        %vm5320 = vweird.f32 %v5314
        %vm5321 = vmor %vm5319, %vm5320
        %v5322 = vsel %vm5321, %v5314, %v5318
        %v5323 = vand.u32 2147483647, %v5228
        %vm5324 = vcmp.eq.f32.partialorder %v5323, 8.507059e+37
        %v5325 = vand.u32 %v5228, 2147483648
        %v5326 = vor.u32 1.1754944e-38, %v5325
        %v5327 = vsel %vm5324, %v5326, %v5322
        %v5328 = vmul.f32 %v5308, %v5327
        %v5329 = vrcp.pop %v5229
        %v5330 = vmul.f32 %v5229, %v5329
        %v5331 = vsub.f32 1.0, %v5330
        %v5332 = vmul.f32 %v5329, %v5331
        %v5333 = vadd.f32 %v5329, %v5332
        %vm5334 = vweird.f32 %v5229
        %vm5335 = vweird.f32 %v5329
        %vm5336 = vmor %vm5334, %vm5335
        %v5337 = vsel %vm5336, %v5329, %v5333
        %v5338 = vand.u32 2147483647, %v5229
        %vm5339 = vcmp.eq.f32.partialorder %v5338, 8.507059e+37
        %v5340 = vand.u32 %v5229, 2147483648
        %v5341 = vor.u32 1.1754944e-38, %v5340
        %v5342 = vsel %vm5339, %v5341, %v5337
        %v5343 = vmul.f32 %v5309, %v5342
        %v5344 = vrcp.pop %v5230
        %v5345 = vmul.f32 %v5230, %v5344
        %v5346 = vsub.f32 1.0, %v5345
        %v5347 = vmul.f32 %v5344, %v5346
        %v5348 = vadd.f32 %v5344, %v5347
        %vm5349 = vweird.f32 %v5230
        %vm5350 = vweird.f32 %v5344
        %vm5351 = vmor %vm5349, %vm5350
        %v5352 = vsel %vm5351, %v5344, %v5348
        %v5353 = vand.u32 2147483647, %v5230
        %vm5354 = vcmp.eq.f32.partialorder %v5353, 8.507059e+37
        %v5355 = vand.u32 %v5230, 2147483648
        %v5356 = vor.u32 1.1754944e-38, %v5355
        %v5357 = vsel %vm5354, %v5356, %v5352
        %v5358 = vmul.f32 %v5310, %v5357
        %v5359 = vrcp.pop %v5231
        %v5360 = vmul.f32 %v5231, %v5359
        %v5361 = vsub.f32 1.0, %v5360
        %v5362 = vmul.f32 %v5359, %v5361
        %v5363 = vadd.f32 %v5359, %v5362
        %vm5364 = vweird.f32 %v5231
        %vm5365 = vweird.f32 %v5359
        %vm5366 = vmor %vm5364, %vm5365
        %v5367 = vsel %vm5366, %v5359, %v5363
        %v5368 = vand.u32 2147483647, %v5231
        %vm5369 = vcmp.eq.f32.partialorder %v5368, 8.507059e+37
        %v5370 = vand.u32 %v5231, 2147483648
        %v5371 = vor.u32 1.1754944e-38, %v5370
        %v5372 = vsel %vm5369, %v5371, %v5367
        %v5373 = vmul.f32 %v5311, %v5372
        %v5374 = vstv %s5312
        %v5375 = vmul.f32 %v5374, %v5328
        %v5376 = vmul.f32 %v5374, %v5343
        %v5377 = vmul.f32 %v5374, %v5358
        %v5378 = vmul.f32 %v5374, %v5373
        %v5379 = vstv %s5313
        %v5380 = vadd.f32 %v5375, %v5379
        %v5381 = vadd.f32 %v5376, %v5379
        %v5382 = vadd.f32 %v5377, %v5379
        %v5383 = vadd.f32 %v5378, %v5379
        %v5388 = vrot.slane %v5381, 7
        %v5389 = vrot.slane %v5382, 6
        %v5390 = vrot.slane %v5383, 5
        %vm5391 = vcmask 1040384
        %v5392 = vsel %vm5391, %v5380, %v5388
        %vm5393 = vcmask 1042434
        %v5394 = vsel %vm5393, %v5389, %v5390
        %vm5395 = vcmask 1041408
        %v5396 = vsel %vm5395, %v5392, %v5394
        %v5398 = vlaneseq
        %vm5399 = vcmp.ge.s32.totalorder %v5398, 0
        %vm5400 = vcmp.lt.s32.totalorder %v5398, 512
        %vm5401 = vmand %vm5399, %vm5400
        %5402 = vst.msk [vmem:[%s215] sm:$0xf] %vm5401, %v5396
        %s5403 = sand.u32 %s115, 1
        %s5404 = scalar_lea.sflag [#allocation3], %s5403
        %s5405 = sand.u32 %s115, 1
        %s5406 = smul.addr %s5405, 4
        %s5407 = scalar_lea.vmem [#allocation5], %s5406
        // Predicated region
        $region37: #{tpu_custom_call.1} parent=31 // pred_check
          %p5408 = pneg %p125
        $region38: #{tpu_custom_call.1} parent=31 // pred_check_branch
          %5410 = sbr.rel (%p5408) target = $region40
        $region39: #{tpu_custom_call.1} parent=31 // pred_region
          %s5411 = smul.u32 4, %s23
          %5413 = vsyncadd %s5404, 0
          %s5414 = smul.addr %s22, 4
          %s5415 = sadd.s32 %s5411, %s5414
          %s5416 = scalar_lea.hbm %s3, %s5415
          %s5418 = sshll.u32 %s5407, 4
          %s5419 = int_to_ptr.vmem [resolvable:$true] %s5418
          %s5420 = sshll.u32 %s5416, 4
          %s5421 = int_to_ptr.hbm [resolvable:$true] %s5420
          %5423 = dma.vmem_to_hbm [thread:$0]  %s5419, 64, %s5421, %s5404
        $region40: #{tpu_custom_call.1} parent=31 // pred_fallthru
          _
      $region32: #{tpu_custom_call.1} parent=5 // pred_fallthru
        _
      %p5424 = scmp.le.s32.totalorder 2, %s13
      // Predicated region
      $region41: #{tpu_custom_call.1} parent=5 // pred_check
        %p5425 = pneg %p5424
      $region42: #{tpu_custom_call.1} parent=5 // pred_check_branch
        %5427 = sbr.rel (%p5425) target = $region44
      $region43: #{tpu_custom_call.1} parent=5 // pred_region
        %s5428 = ssub.s32 %s13, 2
        // Predicated region
        $region45: #{tpu_custom_call.1} parent=43 // pred_check
          %p5429 = pneg %p131
        $region46: #{tpu_custom_call.1} parent=43 // pred_check_branch
          %5431 = sbr.rel (%p5429) target = $region48
        $region47: #{tpu_custom_call.1} parent=43 // pred_region
          %s5432 = sand.u32 %s116, 1
          %s5433 = scalar_lea.sflag [#allocation3], %s5432
          %s5434 = sand.u32 %s116, 1
          %s5435 = smul.addr %s5434, 4
          %s5436 = scalar_lea.vmem [#allocation5], %s5435
          %5438 = dma.done %s5433, 64
        $region48: #{tpu_custom_call.1} parent=43 // pred_fallthru
          _
      $region44: #{tpu_custom_call.1} parent=5 // pred_fallthru
        _
    $region6: #{tpu_custom_call.1} parent=1 // loop_footer
      %s17 = sadd.s32 1, %s13
    $region7: #{tpu_custom_call.1} parent=1 // loop_footer_branch
      %12 = sbr.rel target = $region3
    $region8: #{tpu_custom_call.1} parent=1 // loop_exit
      _
    %5439 = vsyncpa [#allocation3], 1
    %s5440 = scalar_lea.sflag [#allocation3], 1
    %5441 = vsyncpa %s5440, 1
    %5442 = vsyncpa [#allocation4], 1
    %s5443 = scalar_lea.sflag [#allocation4], 1
    %5444 = vsyncpa %s5443, 1

</llo_original>
